<compile_context>
chip_gen: v7x
topology: tpu7x:2x2x1
jax: 0.10.0
libtpu: 0.0.40
codegen_flags: <defaults>
</compile_context>

<pallas_src>
import math

import numpy as np

import jax
import jax.numpy as jnp
from jax.experimental import pallas as pl
from jax.experimental.pallas import tpu as pltpu


# ----------------------------------------------------------------------------
# Generation-aware VMEM limit (leave headroom for double-buffered I/O blocks).
# ----------------------------------------------------------------------------
def _vmem_limit_bytes():
    cap = 0
    try:
        cap = int(getattr(pltpu.get_tpu_info(), "vmem_capacity_bytes", 0))
    except Exception:
        cap = 0
    if cap <= 0:
        cap = 128 * 1024 * 1024          # v5e / v6e physical VMEM
    # 3/4 of physical capacity, capped at 96 MiB (=> 48 MiB on v7x's 64 MiB).
    return int(min(cap * 3 // 4, 96 * 1024 * 1024))


# ----------------------------------------------------------------------------
# Fused kernel factory
# ----------------------------------------------------------------------------
def _make_resblock_kernel(H, W, Cin, Cout, G, eps, has_shortcut):
    N = H * W

    def _silu(v):
        return v * (1.0 / (1.0 + jnp.exp(-v)))

    def _group_norm_silu(v, gamma, beta, C):
        """GroupNorm(G, C) + affine + SiLU on a (C, N) f32 tensor."""
        Cg = C // G
        inv_n = 1.0 / float(N * Cg)
        # Group-membership matrices built from iota comparisons (no int div).
        gr = jax.lax.broadcasted_iota(jnp.int32, (G, C), 0)
        ch = jax.lax.broadcasted_iota(jnp.int32, (G, C), 1)
        Mt = jnp.logical_and(ch >= gr * Cg,
                             ch < (gr + 1) * Cg).astype(jnp.float32)   # (G, C)
        ch2 = jax.lax.broadcasted_iota(jnp.int32, (C, G), 0)
        gr2 = jax.lax.broadcasted_iota(jnp.int32, (C, G), 1)
        M = jnp.logical_and(ch2 >= gr2 * Cg,
                            ch2 < (gr2 + 1) * Cg).astype(jnp.float32)  # (C, G)

        csum = jnp.sum(v, axis=1, keepdims=True)                       # (C, 1)
        csq = jnp.sum(v * v, axis=1, keepdims=True)                    # (C, 1)
        gsum = jnp.dot(Mt, csum, preferred_element_type=jnp.float32)   # (G, 1)
        gsq = jnp.dot(Mt, csq, preferred_element_type=jnp.float32)     # (G, 1)
        gmean = gsum * inv_n
        gvar = jnp.maximum(gsq * inv_n - gmean * gmean, 0.0)
        grstd = jax.lax.rsqrt(gvar + eps)
        mean_c = jnp.dot(M, gmean, preferred_element_type=jnp.float32)  # (C, 1)
        rstd_c = jnp.dot(M, grstd, preferred_element_type=jnp.float32)  # (C, 1)
        a = rstd_c * gamma                    # per-channel scale (C, 1)
        d = beta - mean_c * a                 # per-channel shift (C, 1)
        return _silu(v * a + d)

    def _fill_im2col(v, col_ref, C, mask_ref):
        """Write 9 shifted+masked copies of v (C, N) into col_ref (9*C, N)."""
        for kh in range(3):
            for kw in range(3):
                t = kh * 3 + kw
                delta = (kh - 1) * W + (kw - 1)        # flat pixel shift
                if delta == 0:
                    s = v
                else:
                    # shifted[c, n] = v[c, n + delta]; wrapped rows are zeroed
                    # by the precomputed boundary mask below.
                    s = pltpu.roll(v, shift=(-delta) % N, axis=1)
                if t != 4:                              # center tap needs no mask
                    s = s * mask_ref[t:t + 1, :]
                col_ref[t * C:(t + 1) * C, :] = s.astype(col_ref.dtype)

    def kernel(x_ref, tb_ref, g1_ref, b1_ref, w1_ref,
               g2_ref, b2_ref, w2_ref, cb2_ref, mask_ref, *rest):
        if has_shortcut:
            wsc_ref, bsc_ref, o_ref, col1_ref, col2_ref = rest
        else:
            o_ref, col1_ref, col2_ref = rest
            wsc_ref = bsc_ref = None

        x2 = x_ref[0].astype(jnp.float32)               # (Cin, N)

        # ---- conv1 block: GroupNorm -> SiLU -> 3x3 conv (one K=9*Cin matmul)
        h0 = _group_norm_silu(x2, g1_ref[...], b1_ref[...], Cin)
        _fill_im2col(h0, col1_ref, Cin, mask_ref)
        h1 = jnp.dot(w1_ref[...], col1_ref[...],
                     preferred_element_type=jnp.float32) + tb_ref[0]   # +bias +temb

        # ---- conv2 block: GroupNorm -> SiLU -> (Dropout=id) -> 3x3 conv ----
        h2 = _group_norm_silu(h1, g2_ref[...], b2_ref[...], Cout)
        _fill_im2col(h2, col2_ref, Cout, mask_ref)
        h3 = jnp.dot(w2_ref[...], col2_ref[...],
                     preferred_element_type=jnp.float32) + cb2_ref[...]

        # ---- residual shortcut ---------------------------------------------
        if has_shortcut:
            sc = jnp.dot(wsc_ref[...], x2.astype(wsc_ref.dtype),
                         preferred_element_type=jnp.float32) + bsc_ref[...]
        else:
            sc = x2
        o_ref[0] = (h3 + sc).astype(o_ref.dtype)

    return kernel


# ----------------------------------------------------------------------------
# Module wrapper
# ----------------------------------------------------------------------------
class ResBlock1Pallas:
    """JAX/Pallas port of ResBlock1(in_channels, out_channels, time_channels, dropout)."""

    def __init__(self, in_channels, out_channels, time_channels, dropout, *,
                 key, num_groups=32, eps=1e-5, mxu_dtype=jnp.float32):
        assert in_channels % num_groups == 0 and out_channels % num_groups == 0
        self.in_channels = in_channels
        self.out_channels = out_channels
        self.time_channels = time_channels
        self.dropout = dropout          # eval-mode only (identity)
        self.G = num_groups
        self.eps = eps
        self.mxu_dtype = mxu_dtype      # set to jnp.bfloat16 for ~2x MXU/DMA on conv path
        self.has_shortcut = in_channels != out_channels

        keys = jax.random.split(key, 9)

        def conv_init(k, cout, cin, ksz):
            fan_in = cin * ksz * ksz
            bound = 1.0 / math.sqrt(fan_in)
            kw_, kb_ = jax.random.split(k)
            w = jax.random.uniform(kw_, (cout, cin, ksz, ksz), jnp.float32,
                                   -bound, bound)
            b = jax.random.uniform(kb_, (cout,), jnp.float32, -bound, bound)
            return w, b

        self.gn1_gamma = jax.random.uniform(keys[0], (in_channels,), jnp.float32, 0.5, 1.5)
        self.gn1_beta = jax.random.uniform(keys[1], (in_channels,), jnp.float32, -0.5, 0.5)
        self.conv1_w, self.conv1_b = conv_init(keys[2], out_channels, in_channels, 3)

        bt = 1.0 / math.sqrt(time_channels)
        self.time_w = jax.random.uniform(keys[3], (out_channels, time_channels),
                                         jnp.float32, -bt, bt)
        self.time_b = jax.random.uniform(keys[4], (out_channels,), jnp.float32, -bt, bt)

        self.gn2_gamma = jax.random.uniform(keys[5], (out_channels,), jnp.float32, 0.5, 1.5)
        self.gn2_beta = jax.random.uniform(keys[6], (out_channels,), jnp.float32, -0.5, 0.5)
        self.conv2_w, self.conv2_b = conv_init(keys[7], out_channels, out_channels, 3)

        if self.has_shortcut:
            self.sc_w, self.sc_b = conv_init(keys[8], out_channels, in_channels, 1)
        else:
            self.sc_w = self.sc_b = None

    def __call__(self, x_nchw, t):
        B, C, H, W = x_nchw.shape
        assert C == self.in_channels
        Cin, Cout, G = self.in_channels, self.out_channels, self.G
        N = H * W
        md = self.mxu_dtype

        # NCHW is already channel-on-sublane / pixel-on-lane: flatten HW (free).
        x_flat = x_nchw.reshape(B, Cin, N)

        # Time embedding precomputed in plain XLA; conv1 bias folded in.
        temb = jax.nn.silu(t) @ self.time_w.T + self.time_b + self.conv1_b   # (B, Cout)
        tb = temb.astype(jnp.float32).reshape(B, Cout, 1)

        # Conv weights as (Cout, 9*C): column order (kh, kw, cin) matches im2col rows.
        w1 = jnp.transpose(self.conv1_w, (0, 2, 3, 1)).reshape(Cout, 9 * Cin).astype(md)
        w2 = jnp.transpose(self.conv2_w, (0, 2, 3, 1)).reshape(Cout, 9 * Cout).astype(md)

        g1 = self.gn1_gamma.reshape(Cin, 1)
        b1 = self.gn1_beta.reshape(Cin, 1)
        g2 = self.gn2_gamma.reshape(Cout, 1)
        b2 = self.gn2_beta.reshape(Cout, 1)
        cb2 = self.conv2_b.reshape(Cout, 1)

        # 3x3 tap validity masks over the flat pixel axis (host-side constants).
        hh = np.arange(H).reshape(H, 1)
        ww = np.arange(W).reshape(1, W)
        masks_np = np.zeros((9, H, W), np.float32)
        for kh in range(3):
            for kw in range(3):
                dh, dw = kh - 1, kw - 1
                masks_np[kh * 3 + kw] = ((hh + dh >= 0) & (hh + dh < H) &
                                         (ww + dw >= 0) & (ww + dw < W))
        masks = jnp.asarray(masks_np.reshape(9, N))

        def const_spec(arr):
            nd = arr.ndim
            return pl.BlockSpec(arr.shape, lambda b, _n=nd: (0,) * _n)

        in_specs = [
            pl.BlockSpec((1, Cin, N), lambda b: (b, 0, 0)),    # x
            pl.BlockSpec((1, Cout, 1), lambda b: (b, 0, 0)),   # conv1 bias + temb
            const_spec(g1), const_spec(b1), const_spec(w1),    # gn1 / conv1 weight
            const_spec(g2), const_spec(b2), const_spec(w2),    # gn2 / conv2 weight
            const_spec(cb2),                                    # conv2 bias
            const_spec(masks),                                  # tap masks
        ]
        inputs = [x_flat, tb, g1, b1, w1, g2, b2, w2, cb2, masks]
        if self.has_shortcut:
            wsc = self.sc_w.reshape(Cout, Cin).astype(md)
            bsc = self.sc_b.reshape(Cout, 1)
            in_specs += [const_spec(wsc), const_spec(bsc)]
            inputs += [wsc, bsc]

        kernel = _make_resblock_kernel(H, W, Cin, Cout, G, self.eps,
                                       self.has_shortcut)

        out_flat = pl.pallas_call(
            kernel,
            out_shape=jax.ShapeDtypeStruct((B, Cout, N), x_nchw.dtype),
            grid_spec=pltpu.PrefetchScalarGridSpec(
                num_scalar_prefetch=0,
                grid=(B,),
                in_specs=in_specs,
                out_specs=pl.BlockSpec((1, Cout, N), lambda b: (b, 0, 0)),
                scratch_shapes=[
                    pltpu.VMEM((9 * Cin, N), md),    # im2col for conv1
                    pltpu.VMEM((9 * Cout, N), md),   # im2col for conv2
                ],
            ),
            compiler_params=pltpu.CompilerParams(
                dimension_semantics=("parallel",),
                vmem_limit_bytes=_vmem_limit_bytes(),
            ),
        )(*inputs)

        return out_flat.reshape(B, Cout, H, W)      # already NCHW, free reshape


# ----------------------------------------------------------------------------
# Plain-JAX reference (for the correctness check)
# ----------------------------------------------------------------------------
def _ref_group_norm(x, gamma, beta, G, eps):
    B, C, H, W = x.shape
    xg = x.reshape(B, G, C // G, H, W)
    mean = xg.mean(axis=(2, 3, 4), keepdims=True)
    var = ((xg - mean) ** 2).mean(axis=(2, 3, 4), keepdims=True)
    xn = ((xg - mean) * jax.lax.rsqrt(var + eps)).reshape(B, C, H, W)
    return xn * gamma[None, :, None, None] + beta[None, :, None, None]


def _ref_forward(mod, x, t):
    def conv(h, w, b, pad):
        out = jax.lax.conv_general_dilated(
            h, w, window_strides=(1, 1), padding=((pad, pad), (pad, pad)),
            dimension_numbers=("NCHW", "OIHW", "NCHW"))
        return out + b[None, :, None, None]

    h = _ref_group_norm(x, mod.gn1_gamma, mod.gn1_beta, mod.G, mod.eps)
    h = jax.nn.silu(h)
    h = conv(h, mod.conv1_w, mod.conv1_b, 1)
    temb = jax.nn.silu(t) @ mod.time_w.T + mod.time_b
    h = h + temb[:, :, None, None]
    h2 = _ref_group_norm(h, mod.gn2_gamma, mod.gn2_beta, mod.G, mod.eps)
    h2 = jax.nn.silu(h2)
    h2 = conv(h2, mod.conv2_w, mod.conv2_b, 1)
    sc = conv(x, mod.sc_w, mod.sc_b, 0) if mod.has_shortcut else x
    return h2 + sc


# ----------------------------------------------------------------------------
# Main: run at small shapes, check against plain-JAX reference
# ----------------------------------------------------------------------------
if __name__ == "__main__":
    B, Cin, Cout, H, W, Tc = 2, 32, 64, 16, 16, 16
    key = jax.random.PRNGKey(0)
    kx, kt, kp = jax.random.split(key, 3)
    x = jax.random.normal(kx, (B, Cin, H, W), jnp.float32)
    t = jax.random.normal(kt, (B, Tc), jnp.float32)

    # ---- Cin != Cout: 1x1-conv shortcut path ----
    mod = ResBlock1Pallas(Cin, Cout, Tc, dropout=0.1, key=kp)
    y = jax.block_until_ready(mod(x, t))
    assert y.shape == (B, Cout, H, W)
    y_ref = _ref_forward(mod, x, t)
    err = float(jnp.max(jnp.abs(y - y_ref)))
    assert jnp.allclose(y, y_ref, rtol=5e-3, atol=5e-3), f"conv-shortcut mismatch {err}"

    # ---- Cin == Cout: identity shortcut path ----
    mod2 = ResBlock1Pallas(Cin, Cin, Tc, dropout=0.0, key=kp)
    y2 = jax.block_until_ready(mod2(x, t))
    y2_ref = _ref_forward(mod2, x, t)
    err2 = float(jnp.max(jnp.abs(y2 - y2_ref)))
    assert jnp.allclose(y2, y2_ref, rtol=5e-3, atol=5e-3), f"identity-shortcut mismatch {err2}"

    print("KERNEL_OK")
</pallas_src>

<mosaic_0001>
module attributes {stable_mosaic.version = 11 : i64} {
  func.func @kernel(%arg0: i32, %arg1: memref<1x32x256xf32, #tpu.memory_space<vmem>>, %arg2: memref<1x64x1xf32, #tpu.memory_space<vmem>>, %arg3: memref<32x1xf32, #tpu.memory_space<vmem>>, %arg4: memref<32x1xf32, #tpu.memory_space<vmem>>, %arg5: memref<64x288xf32, #tpu.memory_space<vmem>>, %arg6: memref<64x1xf32, #tpu.memory_space<vmem>>, %arg7: memref<64x1xf32, #tpu.memory_space<vmem>>, %arg8: memref<64x576xf32, #tpu.memory_space<vmem>>, %arg9: memref<64x1xf32, #tpu.memory_space<vmem>>, %arg10: memref<9x256xf32, #tpu.memory_space<vmem>>, %arg11: memref<64x32xf32, #tpu.memory_space<vmem>>, %arg12: memref<64x1xf32, #tpu.memory_space<vmem>>, %arg13: memref<1x64x256xf32, #tpu.memory_space<vmem>>, %arg14: memref<288x256xf32, #tpu.memory_space<vmem>>, %arg15: memref<576x256xf32, #tpu.memory_space<vmem>>) attributes {dimension_semantics = [#tpu.dimension_semantics<parallel>], iteration_bounds = array<i64: 2>, scalar_prefetch = 0 : i64, scratch_operands = 2 : i64, tpu.core_type = #tpu.core_type<tc>, window_params = [{transform_indices = @transform_0, window_bounds = array<i64: 1, 32, 256>}, {transform_indices = @transform_1, window_bounds = array<i64: 1, 64, 1>}, {pipeline_mode = #tpu.pipeline_mode<synchronous>, transform_indices = @transform_2, window_bounds = array<i64: 32, 1>}, {pipeline_mode = #tpu.pipeline_mode<synchronous>, transform_indices = @transform_3, window_bounds = array<i64: 32, 1>}, {pipeline_mode = #tpu.pipeline_mode<synchronous>, transform_indices = @transform_4, window_bounds = array<i64: 64, 288>}, {pipeline_mode = #tpu.pipeline_mode<synchronous>, transform_indices = @transform_5, window_bounds = array<i64: 64, 1>}, {pipeline_mode = #tpu.pipeline_mode<synchronous>, transform_indices = @transform_6, window_bounds = array<i64: 64, 1>}, {pipeline_mode = #tpu.pipeline_mode<synchronous>, transform_indices = @transform_7, window_bounds = array<i64: 64, 576>}, {pipeline_mode = #tpu.pipeline_mode<synchronous>, transform_indices = @transform_8, window_bounds = array<i64: 64, 1>}, {pipeline_mode = #tpu.pipeline_mode<synchronous>, transform_indices = @transform_9, window_bounds = array<i64: 9, 256>}, {pipeline_mode = #tpu.pipeline_mode<synchronous>, transform_indices = @transform_10, window_bounds = array<i64: 64, 32>}, {pipeline_mode = #tpu.pipeline_mode<synchronous>, transform_indices = @transform_11, window_bounds = array<i64: 64, 1>}, {transform_indices = @transform_12, window_bounds = array<i64: 1, 64, 256>}]} {
    %c0 = arith.constant 0 : index
    %c0_0 = arith.constant 0 : index
    %c0_1 = arith.constant 0 : index
    %0 = vector.load %arg1[%c0, %c0_0, %c0_1] : memref<1x32x256xf32, #tpu.memory_space<vmem>>, vector<1x32x256xf32>
    %1 = vector.shape_cast %0 : vector<1x32x256xf32> to vector<32x256xf32>
    %c0_2 = arith.constant 0 : index
    %c0_3 = arith.constant 0 : index
    %2 = vector.load %arg3[%c0_2, %c0_3] : memref<32x1xf32, #tpu.memory_space<vmem>>, vector<32x1xf32>
    %c0_4 = arith.constant 0 : index
    %c0_5 = arith.constant 0 : index
    %3 = vector.load %arg4[%c0_4, %c0_5] : memref<32x1xf32, #tpu.memory_space<vmem>>, vector<32x1xf32>
    %4 = tpu.iota {dimensions = array<i32: 0>} : vector<32x32xi32>
    %5 = tpu.iota {dimensions = array<i32: 1>} : vector<32x32xi32>
    %c1_i32 = arith.constant 1 : i32
    %6 = vector.broadcast %c1_i32 : i32 to vector<32x32xi32>
    %7 = arith.muli %4, %6 : vector<32x32xi32>
    %8 = arith.cmpi sge, %5, %7 : vector<32x32xi32>
    %c1_i32_6 = arith.constant 1 : i32
    %9 = vector.broadcast %c1_i32_6 : i32 to vector<32x32xi32>
    %10 = arith.addi %4, %9 : vector<32x32xi32>
    %c1_i32_7 = arith.constant 1 : i32
    %11 = vector.broadcast %c1_i32_7 : i32 to vector<32x32xi32>
    %12 = arith.muli %10, %11 : vector<32x32xi32>
    %13 = arith.cmpi slt, %5, %12 : vector<32x32xi32>
    %14 = arith.andi %8, %13 : vector<32x32xi1>
    %15 = arith.extui %14 : vector<32x32xi1> to vector<32x32xi32>
    %16 = arith.sitofp %15 : vector<32x32xi32> to vector<32x32xf32>
    %17 = tpu.iota {dimensions = array<i32: 0>} : vector<32x32xi32>
    %18 = tpu.iota {dimensions = array<i32: 1>} : vector<32x32xi32>
    %c1_i32_8 = arith.constant 1 : i32
    %19 = vector.broadcast %c1_i32_8 : i32 to vector<32x32xi32>
    %20 = arith.muli %18, %19 : vector<32x32xi32>
    %21 = arith.cmpi sge, %17, %20 : vector<32x32xi32>
    %c1_i32_9 = arith.constant 1 : i32
    %22 = vector.broadcast %c1_i32_9 : i32 to vector<32x32xi32>
    %23 = arith.addi %18, %22 : vector<32x32xi32>
    %c1_i32_10 = arith.constant 1 : i32
    %24 = vector.broadcast %c1_i32_10 : i32 to vector<32x32xi32>
    %25 = arith.muli %23, %24 : vector<32x32xi32>
    %26 = arith.cmpi slt, %17, %25 : vector<32x32xi32>
    %27 = arith.andi %21, %26 : vector<32x32xi1>
    %28 = arith.extui %27 : vector<32x32xi1> to vector<32x32xi32>
    %29 = arith.sitofp %28 : vector<32x32xi32> to vector<32x32xf32>
    %cst = arith.constant dense<0.000000e+00> : vector<32xf32>
    %30 = vector.multi_reduction <add>, %1, %cst [1] : vector<32x256xf32> to vector<32xf32>
    %31 = vector.shape_cast %30 : vector<32xf32> to vector<32x1xf32>
    %32 = arith.mulf %1, %1 : vector<32x256xf32>
    %cst_11 = arith.constant dense<0.000000e+00> : vector<32xf32>
    %33 = vector.multi_reduction <add>, %32, %cst_11 [1] : vector<32x256xf32> to vector<32xf32>
    %34 = vector.shape_cast %33 : vector<32xf32> to vector<32x1xf32>
    %cst_12 = arith.constant dense<0.000000e+00> : vector<32x1xf32>
    %35 = tpu.matmul %16, %31, %cst_12 {dimension_numbers = #tpu.dot_dimension_numbers<[1], [0], [0], [1], [0, 0, 1, 1], [], []>} : vector<32x32xf32>, vector<32x1xf32>, vector<32x1xf32> -> vector<32x1xf32>
    %cst_13 = arith.constant dense<0.000000e+00> : vector<32x1xf32>
    %36 = tpu.matmul %16, %34, %cst_13 {dimension_numbers = #tpu.dot_dimension_numbers<[1], [0], [0], [1], [0, 0, 1, 1], [], []>} : vector<32x32xf32>, vector<32x1xf32>, vector<32x1xf32> -> vector<32x1xf32>
    %cst_14 = arith.constant 3.906250e-03 : f32
    %37 = vector.broadcast %cst_14 : f32 to vector<32x1xf32>
    %38 = arith.mulf %35, %37 : vector<32x1xf32>
    %cst_15 = arith.constant 3.906250e-03 : f32
    %39 = vector.broadcast %cst_15 : f32 to vector<32x1xf32>
    %40 = arith.mulf %36, %39 : vector<32x1xf32>
    %41 = arith.mulf %38, %38 : vector<32x1xf32>
    %42 = arith.subf %40, %41 : vector<32x1xf32>
    %cst_16 = arith.constant 0.000000e+00 : f32
    %43 = vector.broadcast %cst_16 : f32 to vector<32x1xf32>
    %44 = arith.maximumf %42, %43 : vector<32x1xf32>
    %cst_17 = arith.constant 9.99999974E-6 : f32
    %45 = vector.broadcast %cst_17 : f32 to vector<32x1xf32>
    %46 = arith.addf %44, %45 : vector<32x1xf32>
    %47 = math.rsqrt %46 : vector<32x1xf32>
    %cst_18 = arith.constant dense<0.000000e+00> : vector<32x1xf32>
    %48 = tpu.matmul %29, %38, %cst_18 {dimension_numbers = #tpu.dot_dimension_numbers<[1], [0], [0], [1], [0, 0, 1, 1], [], []>} : vector<32x32xf32>, vector<32x1xf32>, vector<32x1xf32> -> vector<32x1xf32>
    %cst_19 = arith.constant dense<0.000000e+00> : vector<32x1xf32>
    %49 = tpu.matmul %29, %47, %cst_19 {dimension_numbers = #tpu.dot_dimension_numbers<[1], [0], [0], [1], [0, 0, 1, 1], [], []>} : vector<32x32xf32>, vector<32x1xf32>, vector<32x1xf32> -> vector<32x1xf32>
    %50 = arith.mulf %49, %2 : vector<32x1xf32>
    %51 = arith.mulf %48, %50 : vector<32x1xf32>
    %52 = arith.subf %3, %51 : vector<32x1xf32>
    %53 = vector.broadcast %50 : vector<32x1xf32> to vector<32x256xf32>
    %54 = arith.mulf %1, %53 : vector<32x256xf32>
    %55 = vector.broadcast %52 : vector<32x1xf32> to vector<32x256xf32>
    %56 = arith.addf %54, %55 : vector<32x256xf32>
    %cst_20 = arith.constant 0.000000e+00 : f32
    %57 = vector.broadcast %cst_20 : f32 to vector<32x256xf32>
    %58 = arith.subf %57, %56 : vector<32x256xf32>
    %59 = math.exp %58 : vector<32x256xf32>
    %cst_21 = arith.constant 1.000000e+00 : f32
    %60 = vector.broadcast %cst_21 : f32 to vector<32x256xf32>
    %61 = arith.addf %60, %59 : vector<32x256xf32>
    %cst_22 = arith.constant 1.000000e+00 : f32
    %62 = vector.broadcast %cst_22 : f32 to vector<32x256xf32>
    %63 = arith.divf %62, %61 : vector<32x256xf32>
    %64 = arith.mulf %56, %63 : vector<32x256xf32>
    %c17_i32 = arith.constant 17 : i32
    %65 = tpu.dynamic_rotate %64 by %c17_i32 dim 1 : vector<32x256xf32>, i32 -> vector<32x256xf32>
    %c0_23 = arith.constant 0 : index
    %c0_24 = arith.constant 0 : index
    %66 = vector.load %arg10[%c0_23, %c0_24] : memref<9x256xf32, #tpu.memory_space<vmem>>, vector<1x256xf32>
    %67 = vector.broadcast %66 : vector<1x256xf32> to vector<32x256xf32>
    %68 = arith.mulf %65, %67 : vector<32x256xf32>
    %c0_25 = arith.constant 0 : index
    %c0_26 = arith.constant 0 : index
    %69 = vector.load %arg14[%c0_25, %c0_26] : memref<288x256xf32, #tpu.memory_space<vmem>>, vector<32x256xf32>
    tpu.vector_store %arg14[%c0_25, %c0_26], %68 {strides = array<i32>} : memref<288x256xf32, #tpu.memory_space<vmem>>, vector<32x256xf32>,
    %c16_i32 = arith.constant 16 : i32
    %70 = tpu.dynamic_rotate %64 by %c16_i32 dim 1 : vector<32x256xf32>, i32 -> vector<32x256xf32>
    %c1 = arith.constant 1 : index
    %c0_27 = arith.constant 0 : index
    %71 = vector.load %arg10[%c1, %c0_27] : memref<9x256xf32, #tpu.memory_space<vmem>>, vector<1x256xf32>
    %72 = vector.broadcast %71 : vector<1x256xf32> to vector<32x256xf32>
    %73 = arith.mulf %70, %72 : vector<32x256xf32>
    %c32 = arith.constant 32 : index
    %c0_28 = arith.constant 0 : index
    %74 = vector.load %arg14[%c32, %c0_28] : memref<288x256xf32, #tpu.memory_space<vmem>>, vector<32x256xf32>
    tpu.vector_store %arg14[%c32, %c0_28], %73 {strides = array<i32>} : memref<288x256xf32, #tpu.memory_space<vmem>>, vector<32x256xf32>,
    %c15_i32 = arith.constant 15 : i32
    %75 = tpu.dynamic_rotate %64 by %c15_i32 dim 1 : vector<32x256xf32>, i32 -> vector<32x256xf32>
    %c2 = arith.constant 2 : index
    %c0_29 = arith.constant 0 : index
    %76 = vector.load %arg10[%c2, %c0_29] : memref<9x256xf32, #tpu.memory_space<vmem>>, vector<1x256xf32>
    %77 = vector.broadcast %76 : vector<1x256xf32> to vector<32x256xf32>
    %78 = arith.mulf %75, %77 : vector<32x256xf32>
    %c64 = arith.constant 64 : index
    %c0_30 = arith.constant 0 : index
    %79 = vector.load %arg14[%c64, %c0_30] : memref<288x256xf32, #tpu.memory_space<vmem>>, vector<32x256xf32>
    tpu.vector_store %arg14[%c64, %c0_30], %78 {strides = array<i32>} : memref<288x256xf32, #tpu.memory_space<vmem>>, vector<32x256xf32>,
    %c1_i32_31 = arith.constant 1 : i32
    %80 = tpu.dynamic_rotate %64 by %c1_i32_31 dim 1 : vector<32x256xf32>, i32 -> vector<32x256xf32>
    %c3 = arith.constant 3 : index
    %c0_32 = arith.constant 0 : index
    %81 = vector.load %arg10[%c3, %c0_32] : memref<9x256xf32, #tpu.memory_space<vmem>>, vector<1x256xf32>
    %82 = vector.broadcast %81 : vector<1x256xf32> to vector<32x256xf32>
    %83 = arith.mulf %80, %82 : vector<32x256xf32>
    %c96 = arith.constant 96 : index
    %c0_33 = arith.constant 0 : index
    %84 = vector.load %arg14[%c96, %c0_33] : memref<288x256xf32, #tpu.memory_space<vmem>>, vector<32x256xf32>
    tpu.vector_store %arg14[%c96, %c0_33], %83 {strides = array<i32>} : memref<288x256xf32, #tpu.memory_space<vmem>>, vector<32x256xf32>,
    %c128 = arith.constant 128 : index
    %c0_34 = arith.constant 0 : index
    %85 = vector.load %arg14[%c128, %c0_34] : memref<288x256xf32, #tpu.memory_space<vmem>>, vector<32x256xf32>
    tpu.vector_store %arg14[%c128, %c0_34], %64 {strides = array<i32>} : memref<288x256xf32, #tpu.memory_space<vmem>>, vector<32x256xf32>,
    %c255_i32 = arith.constant 255 : i32
    %86 = tpu.dynamic_rotate %64 by %c255_i32 dim 1 : vector<32x256xf32>, i32 -> vector<32x256xf32>
    %c5 = arith.constant 5 : index
    %c0_35 = arith.constant 0 : index
    %87 = vector.load %arg10[%c5, %c0_35] : memref<9x256xf32, #tpu.memory_space<vmem>>, vector<1x256xf32>
    %88 = vector.broadcast %87 : vector<1x256xf32> to vector<32x256xf32>
    %89 = arith.mulf %86, %88 : vector<32x256xf32>
    %c160 = arith.constant 160 : index
    %c0_36 = arith.constant 0 : index
    %90 = vector.load %arg14[%c160, %c0_36] : memref<288x256xf32, #tpu.memory_space<vmem>>, vector<32x256xf32>
    tpu.vector_store %arg14[%c160, %c0_36], %89 {strides = array<i32>} : memref<288x256xf32, #tpu.memory_space<vmem>>, vector<32x256xf32>,
    %c241_i32 = arith.constant 241 : i32
    %91 = tpu.dynamic_rotate %64 by %c241_i32 dim 1 : vector<32x256xf32>, i32 -> vector<32x256xf32>
    %c6 = arith.constant 6 : index
    %c0_37 = arith.constant 0 : index
    %92 = vector.load %arg10[%c6, %c0_37] : memref<9x256xf32, #tpu.memory_space<vmem>>, vector<1x256xf32>
    %93 = vector.broadcast %92 : vector<1x256xf32> to vector<32x256xf32>
    %94 = arith.mulf %91, %93 : vector<32x256xf32>
    %c192 = arith.constant 192 : index
    %c0_38 = arith.constant 0 : index
    %95 = vector.load %arg14[%c192, %c0_38] : memref<288x256xf32, #tpu.memory_space<vmem>>, vector<32x256xf32>
    tpu.vector_store %arg14[%c192, %c0_38], %94 {strides = array<i32>} : memref<288x256xf32, #tpu.memory_space<vmem>>, vector<32x256xf32>,
    %c240_i32 = arith.constant 240 : i32
    %96 = tpu.dynamic_rotate %64 by %c240_i32 dim 1 : vector<32x256xf32>, i32 -> vector<32x256xf32>
    %c7 = arith.constant 7 : index
    %c0_39 = arith.constant 0 : index
    %97 = vector.load %arg10[%c7, %c0_39] : memref<9x256xf32, #tpu.memory_space<vmem>>, vector<1x256xf32>
    %98 = vector.broadcast %97 : vector<1x256xf32> to vector<32x256xf32>
    %99 = arith.mulf %96, %98 : vector<32x256xf32>
    %c224 = arith.constant 224 : index
    %c0_40 = arith.constant 0 : index
    %100 = vector.load %arg14[%c224, %c0_40] : memref<288x256xf32, #tpu.memory_space<vmem>>, vector<32x256xf32>
    tpu.vector_store %arg14[%c224, %c0_40], %99 {strides = array<i32>} : memref<288x256xf32, #tpu.memory_space<vmem>>, vector<32x256xf32>,
    %c239_i32 = arith.constant 239 : i32
    %101 = tpu.dynamic_rotate %64 by %c239_i32 dim 1 : vector<32x256xf32>, i32 -> vector<32x256xf32>
    %c8 = arith.constant 8 : index
    %c0_41 = arith.constant 0 : index
    %102 = vector.load %arg10[%c8, %c0_41] : memref<9x256xf32, #tpu.memory_space<vmem>>, vector<1x256xf32>
    %103 = vector.broadcast %102 : vector<1x256xf32> to vector<32x256xf32>
    %104 = arith.mulf %101, %103 : vector<32x256xf32>
    %c256 = arith.constant 256 : index
    %c0_42 = arith.constant 0 : index
    %105 = vector.load %arg14[%c256, %c0_42] : memref<288x256xf32, #tpu.memory_space<vmem>>, vector<32x256xf32>
    tpu.vector_store %arg14[%c256, %c0_42], %104 {strides = array<i32>} : memref<288x256xf32, #tpu.memory_space<vmem>>, vector<32x256xf32>,
    %c0_43 = arith.constant 0 : index
    %c0_44 = arith.constant 0 : index
    %106 = vector.load %arg5[%c0_43, %c0_44] : memref<64x288xf32, #tpu.memory_space<vmem>>, vector<64x288xf32>
    %c0_45 = arith.constant 0 : index
    %c0_46 = arith.constant 0 : index
    %107 = vector.load %arg14[%c0_45, %c0_46] : memref<288x256xf32, #tpu.memory_space<vmem>>, vector<288x256xf32>
    %cst_47 = arith.constant dense<0.000000e+00> : vector<64x256xf32>
    %108 = tpu.matmul %106, %107, %cst_47 {dimension_numbers = #tpu.dot_dimension_numbers<[1], [0], [0], [1], [0, 0, 1, 1], [], []>} : vector<64x288xf32>, vector<288x256xf32>, vector<64x256xf32> -> vector<64x256xf32>
    %c0_48 = arith.constant 0 : index
    %c0_49 = arith.constant 0 : index
    %c0_50 = arith.constant 0 : index
    %109 = vector.load %arg2[%c0_48, %c0_49, %c0_50] : memref<1x64x1xf32, #tpu.memory_space<vmem>>, vector<1x64x1xf32>
    %110 = vector.shape_cast %109 : vector<1x64x1xf32> to vector<64x1xf32>
    %111 = vector.broadcast %110 : vector<64x1xf32> to vector<64x256xf32>
    %112 = arith.addf %108, %111 : vector<64x256xf32>
    %c0_51 = arith.constant 0 : index
    %c0_52 = arith.constant 0 : index
    %113 = vector.load %arg6[%c0_51, %c0_52] : memref<64x1xf32, #tpu.memory_space<vmem>>, vector<64x1xf32>
    %c0_53 = arith.constant 0 : index
    %c0_54 = arith.constant 0 : index
    %114 = vector.load %arg7[%c0_53, %c0_54] : memref<64x1xf32, #tpu.memory_space<vmem>>, vector<64x1xf32>
    %115 = tpu.iota {dimensions = array<i32: 0>} : vector<32x64xi32>
    %116 = tpu.iota {dimensions = array<i32: 1>} : vector<32x64xi32>
    %c2_i32 = arith.constant 2 : i32
    %117 = vector.broadcast %c2_i32 : i32 to vector<32x64xi32>
    %118 = arith.muli %115, %117 : vector<32x64xi32>
    %119 = arith.cmpi sge, %116, %118 : vector<32x64xi32>
    %c1_i32_55 = arith.constant 1 : i32
    %120 = vector.broadcast %c1_i32_55 : i32 to vector<32x64xi32>
    %121 = arith.addi %115, %120 : vector<32x64xi32>
    %c2_i32_56 = arith.constant 2 : i32
    %122 = vector.broadcast %c2_i32_56 : i32 to vector<32x64xi32>
    %123 = arith.muli %121, %122 : vector<32x64xi32>
    %124 = arith.cmpi slt, %116, %123 : vector<32x64xi32>
    %125 = arith.andi %119, %124 : vector<32x64xi1>
    %126 = arith.extui %125 : vector<32x64xi1> to vector<32x64xi32>
    %127 = arith.sitofp %126 : vector<32x64xi32> to vector<32x64xf32>
    %128 = tpu.iota {dimensions = array<i32: 0>} : vector<64x32xi32>
    %129 = tpu.iota {dimensions = array<i32: 1>} : vector<64x32xi32>
    %c2_i32_57 = arith.constant 2 : i32
    %130 = vector.broadcast %c2_i32_57 : i32 to vector<64x32xi32>
    %131 = arith.muli %129, %130 : vector<64x32xi32>
    %132 = arith.cmpi sge, %128, %131 : vector<64x32xi32>
    %c1_i32_58 = arith.constant 1 : i32
    %133 = vector.broadcast %c1_i32_58 : i32 to vector<64x32xi32>
    %134 = arith.addi %129, %133 : vector<64x32xi32>
    %c2_i32_59 = arith.constant 2 : i32
    %135 = vector.broadcast %c2_i32_59 : i32 to vector<64x32xi32>
    %136 = arith.muli %134, %135 : vector<64x32xi32>
    %137 = arith.cmpi slt, %128, %136 : vector<64x32xi32>
    %138 = arith.andi %132, %137 : vector<64x32xi1>
    %139 = arith.extui %138 : vector<64x32xi1> to vector<64x32xi32>
    %140 = arith.sitofp %139 : vector<64x32xi32> to vector<64x32xf32>
    %cst_60 = arith.constant dense<0.000000e+00> : vector<64xf32>
    %141 = vector.multi_reduction <add>, %112, %cst_60 [1] : vector<64x256xf32> to vector<64xf32>
    %142 = vector.shape_cast %141 : vector<64xf32> to vector<64x1xf32>
    %143 = arith.mulf %112, %112 : vector<64x256xf32>
    %cst_61 = arith.constant dense<0.000000e+00> : vector<64xf32>
    %144 = vector.multi_reduction <add>, %143, %cst_61 [1] : vector<64x256xf32> to vector<64xf32>
    %145 = vector.shape_cast %144 : vector<64xf32> to vector<64x1xf32>
    %cst_62 = arith.constant dense<0.000000e+00> : vector<32x1xf32>
    %146 = tpu.matmul %127, %142, %cst_62 {dimension_numbers = #tpu.dot_dimension_numbers<[1], [0], [0], [1], [0, 0, 1, 1], [], []>} : vector<32x64xf32>, vector<64x1xf32>, vector<32x1xf32> -> vector<32x1xf32>
    %cst_63 = arith.constant dense<0.000000e+00> : vector<32x1xf32>
    %147 = tpu.matmul %127, %145, %cst_63 {dimension_numbers = #tpu.dot_dimension_numbers<[1], [0], [0], [1], [0, 0, 1, 1], [], []>} : vector<32x64xf32>, vector<64x1xf32>, vector<32x1xf32> -> vector<32x1xf32>
    %cst_64 = arith.constant 0.001953125 : f32
    %148 = vector.broadcast %cst_64 : f32 to vector<32x1xf32>
    %149 = arith.mulf %146, %148 : vector<32x1xf32>
    %cst_65 = arith.constant 0.001953125 : f32
    %150 = vector.broadcast %cst_65 : f32 to vector<32x1xf32>
    %151 = arith.mulf %147, %150 : vector<32x1xf32>
    %152 = arith.mulf %149, %149 : vector<32x1xf32>
    %153 = arith.subf %151, %152 : vector<32x1xf32>
    %cst_66 = arith.constant 0.000000e+00 : f32
    %154 = vector.broadcast %cst_66 : f32 to vector<32x1xf32>
    %155 = arith.maximumf %153, %154 : vector<32x1xf32>
    %cst_67 = arith.constant 9.99999974E-6 : f32
    %156 = vector.broadcast %cst_67 : f32 to vector<32x1xf32>
    %157 = arith.addf %155, %156 : vector<32x1xf32>
    %158 = math.rsqrt %157 : vector<32x1xf32>
    %cst_68 = arith.constant dense<0.000000e+00> : vector<64x1xf32>
    %159 = tpu.matmul %140, %149, %cst_68 {dimension_numbers = #tpu.dot_dimension_numbers<[1], [0], [0], [1], [0, 0, 1, 1], [], []>} : vector<64x32xf32>, vector<32x1xf32>, vector<64x1xf32> -> vector<64x1xf32>
    %cst_69 = arith.constant dense<0.000000e+00> : vector<64x1xf32>
    %160 = tpu.matmul %140, %158, %cst_69 {dimension_numbers = #tpu.dot_dimension_numbers<[1], [0], [0], [1], [0, 0, 1, 1], [], []>} : vector<64x32xf32>, vector<32x1xf32>, vector<64x1xf32> -> vector<64x1xf32>
    %161 = arith.mulf %160, %113 : vector<64x1xf32>
    %162 = arith.mulf %159, %161 : vector<64x1xf32>
    %163 = arith.subf %114, %162 : vector<64x1xf32>
    %164 = vector.broadcast %161 : vector<64x1xf32> to vector<64x256xf32>
    %165 = arith.mulf %112, %164 : vector<64x256xf32>
    %166 = vector.broadcast %163 : vector<64x1xf32> to vector<64x256xf32>
    %167 = arith.addf %165, %166 : vector<64x256xf32>
    %cst_70 = arith.constant 0.000000e+00 : f32
    %168 = vector.broadcast %cst_70 : f32 to vector<64x256xf32>
    %169 = arith.subf %168, %167 : vector<64x256xf32>
    %170 = math.exp %169 : vector<64x256xf32>
    %cst_71 = arith.constant 1.000000e+00 : f32
    %171 = vector.broadcast %cst_71 : f32 to vector<64x256xf32>
    %172 = arith.addf %171, %170 : vector<64x256xf32>
    %cst_72 = arith.constant 1.000000e+00 : f32
    %173 = vector.broadcast %cst_72 : f32 to vector<64x256xf32>
    %174 = arith.divf %173, %172 : vector<64x256xf32>
    %175 = arith.mulf %167, %174 : vector<64x256xf32>
    %c17_i32_73 = arith.constant 17 : i32
    %176 = tpu.dynamic_rotate %175 by %c17_i32_73 dim 1 : vector<64x256xf32>, i32 -> vector<64x256xf32>
    %c0_74 = arith.constant 0 : index
    %c0_75 = arith.constant 0 : index
    %177 = vector.load %arg10[%c0_74, %c0_75] : memref<9x256xf32, #tpu.memory_space<vmem>>, vector<1x256xf32>
    %178 = vector.broadcast %177 : vector<1x256xf32> to vector<64x256xf32>
    %179 = arith.mulf %176, %178 : vector<64x256xf32>
    %c0_76 = arith.constant 0 : index
    %c0_77 = arith.constant 0 : index
    %180 = vector.load %arg15[%c0_76, %c0_77] : memref<576x256xf32, #tpu.memory_space<vmem>>, vector<64x256xf32>
    tpu.vector_store %arg15[%c0_76, %c0_77], %179 {strides = array<i32>} : memref<576x256xf32, #tpu.memory_space<vmem>>, vector<64x256xf32>,
    %c16_i32_78 = arith.constant 16 : i32
    %181 = tpu.dynamic_rotate %175 by %c16_i32_78 dim 1 : vector<64x256xf32>, i32 -> vector<64x256xf32>
    %c1_79 = arith.constant 1 : index
    %c0_80 = arith.constant 0 : index
    %182 = vector.load %arg10[%c1_79, %c0_80] : memref<9x256xf32, #tpu.memory_space<vmem>>, vector<1x256xf32>
    %183 = vector.broadcast %182 : vector<1x256xf32> to vector<64x256xf32>
    %184 = arith.mulf %181, %183 : vector<64x256xf32>
    %c64_81 = arith.constant 64 : index
    %c0_82 = arith.constant 0 : index
    %185 = vector.load %arg15[%c64_81, %c0_82] : memref<576x256xf32, #tpu.memory_space<vmem>>, vector<64x256xf32>
    tpu.vector_store %arg15[%c64_81, %c0_82], %184 {strides = array<i32>} : memref<576x256xf32, #tpu.memory_space<vmem>>, vector<64x256xf32>,
    %c15_i32_83 = arith.constant 15 : i32
    %186 = tpu.dynamic_rotate %175 by %c15_i32_83 dim 1 : vector<64x256xf32>, i32 -> vector<64x256xf32>
    %c2_84 = arith.constant 2 : index
    %c0_85 = arith.constant 0 : index
    %187 = vector.load %arg10[%c2_84, %c0_85] : memref<9x256xf32, #tpu.memory_space<vmem>>, vector<1x256xf32>
    %188 = vector.broadcast %187 : vector<1x256xf32> to vector<64x256xf32>
    %189 = arith.mulf %186, %188 : vector<64x256xf32>
    %c128_86 = arith.constant 128 : index
    %c0_87 = arith.constant 0 : index
    %190 = vector.load %arg15[%c128_86, %c0_87] : memref<576x256xf32, #tpu.memory_space<vmem>>, vector<64x256xf32>
    tpu.vector_store %arg15[%c128_86, %c0_87], %189 {strides = array<i32>} : memref<576x256xf32, #tpu.memory_space<vmem>>, vector<64x256xf32>,
    %c1_i32_88 = arith.constant 1 : i32
    %191 = tpu.dynamic_rotate %175 by %c1_i32_88 dim 1 : vector<64x256xf32>, i32 -> vector<64x256xf32>
    %c3_89 = arith.constant 3 : index
    %c0_90 = arith.constant 0 : index
    %192 = vector.load %arg10[%c3_89, %c0_90] : memref<9x256xf32, #tpu.memory_space<vmem>>, vector<1x256xf32>
    %193 = vector.broadcast %192 : vector<1x256xf32> to vector<64x256xf32>
    %194 = arith.mulf %191, %193 : vector<64x256xf32>
    %c192_91 = arith.constant 192 : index
    %c0_92 = arith.constant 0 : index
    %195 = vector.load %arg15[%c192_91, %c0_92] : memref<576x256xf32, #tpu.memory_space<vmem>>, vector<64x256xf32>
    tpu.vector_store %arg15[%c192_91, %c0_92], %194 {strides = array<i32>} : memref<576x256xf32, #tpu.memory_space<vmem>>, vector<64x256xf32>,
    %c256_93 = arith.constant 256 : index
    %c0_94 = arith.constant 0 : index
    %196 = vector.load %arg15[%c256_93, %c0_94] : memref<576x256xf32, #tpu.memory_space<vmem>>, vector<64x256xf32>
    tpu.vector_store %arg15[%c256_93, %c0_94], %175 {strides = array<i32>} : memref<576x256xf32, #tpu.memory_space<vmem>>, vector<64x256xf32>,
    %c255_i32_95 = arith.constant 255 : i32
    %197 = tpu.dynamic_rotate %175 by %c255_i32_95 dim 1 : vector<64x256xf32>, i32 -> vector<64x256xf32>
    %c5_96 = arith.constant 5 : index
    %c0_97 = arith.constant 0 : index
    %198 = vector.load %arg10[%c5_96, %c0_97] : memref<9x256xf32, #tpu.memory_space<vmem>>, vector<1x256xf32>
    %199 = vector.broadcast %198 : vector<1x256xf32> to vector<64x256xf32>
    %200 = arith.mulf %197, %199 : vector<64x256xf32>
    %c320 = arith.constant 320 : index
    %c0_98 = arith.constant 0 : index
    %201 = vector.load %arg15[%c320, %c0_98] : memref<576x256xf32, #tpu.memory_space<vmem>>, vector<64x256xf32>
    tpu.vector_store %arg15[%c320, %c0_98], %200 {strides = array<i32>} : memref<576x256xf32, #tpu.memory_space<vmem>>, vector<64x256xf32>,
    %c241_i32_99 = arith.constant 241 : i32
    %202 = tpu.dynamic_rotate %175 by %c241_i32_99 dim 1 : vector<64x256xf32>, i32 -> vector<64x256xf32>
    %c6_100 = arith.constant 6 : index
    %c0_101 = arith.constant 0 : index
    %203 = vector.load %arg10[%c6_100, %c0_101] : memref<9x256xf32, #tpu.memory_space<vmem>>, vector<1x256xf32>
    %204 = vector.broadcast %203 : vector<1x256xf32> to vector<64x256xf32>
    %205 = arith.mulf %202, %204 : vector<64x256xf32>
    %c384 = arith.constant 384 : index
    %c0_102 = arith.constant 0 : index
    %206 = vector.load %arg15[%c384, %c0_102] : memref<576x256xf32, #tpu.memory_space<vmem>>, vector<64x256xf32>
    tpu.vector_store %arg15[%c384, %c0_102], %205 {strides = array<i32>} : memref<576x256xf32, #tpu.memory_space<vmem>>, vector<64x256xf32>,
    %c240_i32_103 = arith.constant 240 : i32
    %207 = tpu.dynamic_rotate %175 by %c240_i32_103 dim 1 : vector<64x256xf32>, i32 -> vector<64x256xf32>
    %c7_104 = arith.constant 7 : index
    %c0_105 = arith.constant 0 : index
    %208 = vector.load %arg10[%c7_104, %c0_105] : memref<9x256xf32, #tpu.memory_space<vmem>>, vector<1x256xf32>
    %209 = vector.broadcast %208 : vector<1x256xf32> to vector<64x256xf32>
    %210 = arith.mulf %207, %209 : vector<64x256xf32>
    %c448 = arith.constant 448 : index
    %c0_106 = arith.constant 0 : index
    %211 = vector.load %arg15[%c448, %c0_106] : memref<576x256xf32, #tpu.memory_space<vmem>>, vector<64x256xf32>
    tpu.vector_store %arg15[%c448, %c0_106], %210 {strides = array<i32>} : memref<576x256xf32, #tpu.memory_space<vmem>>, vector<64x256xf32>,
    %c239_i32_107 = arith.constant 239 : i32
    %212 = tpu.dynamic_rotate %175 by %c239_i32_107 dim 1 : vector<64x256xf32>, i32 -> vector<64x256xf32>
    %c8_108 = arith.constant 8 : index
    %c0_109 = arith.constant 0 : index
    %213 = vector.load %arg10[%c8_108, %c0_109] : memref<9x256xf32, #tpu.memory_space<vmem>>, vector<1x256xf32>
    %214 = vector.broadcast %213 : vector<1x256xf32> to vector<64x256xf32>
    %215 = arith.mulf %212, %214 : vector<64x256xf32>
    %c512 = arith.constant 512 : index
    %c0_110 = arith.constant 0 : index
    %216 = vector.load %arg15[%c512, %c0_110] : memref<576x256xf32, #tpu.memory_space<vmem>>, vector<64x256xf32>
    tpu.vector_store %arg15[%c512, %c0_110], %215 {strides = array<i32>} : memref<576x256xf32, #tpu.memory_space<vmem>>, vector<64x256xf32>,
    %c0_111 = arith.constant 0 : index
    %c0_112 = arith.constant 0 : index
    %217 = vector.load %arg8[%c0_111, %c0_112] : memref<64x576xf32, #tpu.memory_space<vmem>>, vector<64x576xf32>
    %c0_113 = arith.constant 0 : index
    %c0_114 = arith.constant 0 : index
    %218 = vector.load %arg15[%c0_113, %c0_114] : memref<576x256xf32, #tpu.memory_space<vmem>>, vector<576x256xf32>
    %cst_115 = arith.constant dense<0.000000e+00> : vector<64x256xf32>
    %219 = tpu.matmul %217, %218, %cst_115 {dimension_numbers = #tpu.dot_dimension_numbers<[1], [0], [0], [1], [0, 0, 1, 1], [], []>} : vector<64x576xf32>, vector<576x256xf32>, vector<64x256xf32> -> vector<64x256xf32>
    %c0_116 = arith.constant 0 : index
    %c0_117 = arith.constant 0 : index
    %220 = vector.load %arg9[%c0_116, %c0_117] : memref<64x1xf32, #tpu.memory_space<vmem>>, vector<64x1xf32>
    %221 = vector.broadcast %220 : vector<64x1xf32> to vector<64x256xf32>
    %222 = arith.addf %219, %221 : vector<64x256xf32>
    %c0_118 = arith.constant 0 : index
    %c0_119 = arith.constant 0 : index
    %223 = vector.load %arg11[%c0_118, %c0_119] : memref<64x32xf32, #tpu.memory_space<vmem>>, vector<64x32xf32>
    %cst_120 = arith.constant dense<0.000000e+00> : vector<64x256xf32>
    %224 = tpu.matmul %223, %1, %cst_120 {dimension_numbers = #tpu.dot_dimension_numbers<[1], [0], [0], [1], [0, 0, 1, 1], [], []>} : vector<64x32xf32>, vector<32x256xf32>, vector<64x256xf32> -> vector<64x256xf32>
    %c0_121 = arith.constant 0 : index
    %c0_122 = arith.constant 0 : index
    %225 = vector.load %arg12[%c0_121, %c0_122] : memref<64x1xf32, #tpu.memory_space<vmem>>, vector<64x1xf32>
    %226 = vector.broadcast %225 : vector<64x1xf32> to vector<64x256xf32>
    %227 = arith.addf %224, %226 : vector<64x256xf32>
    %228 = arith.addf %222, %227 : vector<64x256xf32>
    %c0_123 = arith.constant 0 : index
    %c0_124 = arith.constant 0 : index
    %c0_125 = arith.constant 0 : index
    %229 = vector.load %arg13[%c0_123, %c0_124, %c0_125] : memref<1x64x256xf32, #tpu.memory_space<vmem>>, vector<1x64x256xf32>
    %230 = vector.shape_cast %229 : vector<1x64x256xf32> to vector<64x256xf32>
    %231 = vector.shape_cast %228 : vector<64x256xf32> to vector<1x64x256xf32>
    tpu.vector_store %arg13[%c0_123, %c0_124, %c0_125], %231 {strides = array<i32>} : memref<1x64x256xf32, #tpu.memory_space<vmem>>, vector<1x64x256xf32>,
    return
  }
  func.func @transform_0(%arg0: i32) -> (i32, i32, i32) {
    %c0_i32 = arith.constant 0 : i32
    %c0_i32_0 = arith.constant 0 : i32
    %c0_i32_1 = arith.constant 0 : i32
    return %arg0, %c0_i32, %c0_i32_0 : i32, i32, i32
  }
  func.func @transform_1(%arg0: i32) -> (i32, i32, i32) {
    %c0_i32 = arith.constant 0 : i32
    %c0_i32_0 = arith.constant 0 : i32
    %c0_i32_1 = arith.constant 0 : i32
    return %arg0, %c0_i32, %c0_i32_0 : i32, i32, i32
  }
  func.func @transform_2(%arg0: i32) -> (i32, i32) {
    %c0_i32 = arith.constant 0 : i32
    %c0_i32_0 = arith.constant 0 : i32
    %c0_i32_1 = arith.constant 0 : i32
    return %c0_i32, %c0_i32_0 : i32, i32
  }
  func.func @transform_3(%arg0: i32) -> (i32, i32) {
    %c0_i32 = arith.constant 0 : i32
    %c0_i32_0 = arith.constant 0 : i32
    %c0_i32_1 = arith.constant 0 : i32
    return %c0_i32, %c0_i32_0 : i32, i32
  }
  func.func @transform_4(%arg0: i32) -> (i32, i32) {
    %c0_i32 = arith.constant 0 : i32
    %c0_i32_0 = arith.constant 0 : i32
    %c0_i32_1 = arith.constant 0 : i32
    return %c0_i32, %c0_i32_0 : i32, i32
  }
  func.func @transform_5(%arg0: i32) -> (i32, i32) {
    %c0_i32 = arith.constant 0 : i32
    %c0_i32_0 = arith.constant 0 : i32
    %c0_i32_1 = arith.constant 0 : i32
    return %c0_i32, %c0_i32_0 : i32, i32
  }
  func.func @transform_6(%arg0: i32) -> (i32, i32) {
    %c0_i32 = arith.constant 0 : i32
    %c0_i32_0 = arith.constant 0 : i32
    %c0_i32_1 = arith.constant 0 : i32
    return %c0_i32, %c0_i32_0 : i32, i32
  }
  func.func @transform_7(%arg0: i32) -> (i32, i32) {
    %c0_i32 = arith.constant 0 : i32
    %c0_i32_0 = arith.constant 0 : i32
    %c0_i32_1 = arith.constant 0 : i32
    return %c0_i32, %c0_i32_0 : i32, i32
  }
  func.func @transform_8(%arg0: i32) -> (i32, i32) {
    %c0_i32 = arith.constant 0 : i32
    %c0_i32_0 = arith.constant 0 : i32
    %c0_i32_1 = arith.constant 0 : i32
    return %c0_i32, %c0_i32_0 : i32, i32
  }
  func.func @transform_9(%arg0: i32) -> (i32, i32) {
    %c0_i32 = arith.constant 0 : i32
    %c0_i32_0 = arith.constant 0 : i32
    %c0_i32_1 = arith.constant 0 : i32
    return %c0_i32, %c0_i32_0 : i32, i32
  }
  func.func @transform_10(%arg0: i32) -> (i32, i32) {
    %c0_i32 = arith.constant 0 : i32
    %c0_i32_0 = arith.constant 0 : i32
    %c0_i32_1 = arith.constant 0 : i32
    return %c0_i32, %c0_i32_0 : i32, i32
  }
  func.func @transform_11(%arg0: i32) -> (i32, i32) {
    %c0_i32 = arith.constant 0 : i32
    %c0_i32_0 = arith.constant 0 : i32
    %c0_i32_1 = arith.constant 0 : i32
    return %c0_i32, %c0_i32_0 : i32, i32
  }
  func.func @transform_12(%arg0: i32) -> (i32, i32, i32) {
    %c0_i32 = arith.constant 0 : i32
    %c0_i32_0 = arith.constant 0 : i32
    %c0_i32_1 = arith.constant 0 : i32
    return %arg0, %c0_i32, %c0_i32_0 : i32, i32, i32
  }
}

</mosaic_0001>

<llo_original>
// kernel: tpu_custom_call.1
$region0: #{tpu_custom_call.1}
  #allocation0 [shape = 'u32[]', space=smem, size = 0x4, offset = 0x4, fixed_abs, tag = 'smem constant byte address 0x4 - core index']
  #allocation1 [shape = 'u32[144,128]{1,0:T(1,128)}', space=vmem, size = 0x12000, scoped, tag = 'internal scratch']
  #allocation2 [shape = 'f32[288,256]{1,0:T(8,128)}', space=vmem, size = 0x48000, scoped, tag = 'scratch operand']
  #allocation3 [shape = 'f32[576,256]{1,0:T(8,128)}', space=vmem, size = 0x90000, scoped, tag = 'scratch operand']
  %s0 = inlined_call_operand.hbm [shape: f32[2,32,256], index: 0, kind: input, shape index: {}]
  %s1 = inlined_call_operand.hbm [shape: f32[2,64,1], index: 1, kind: input, shape index: {}]
  %s2 = inlined_call_operand.hbm [shape: f32[32,1], index: 2, kind: input, shape index: {}]
  %s3 = inlined_call_operand.hbm [shape: f32[32,1], index: 3, kind: input, shape index: {}]
  %s4 = inlined_call_operand.hbm [shape: f32[64,288], index: 4, kind: input, shape index: {}]
  %s5 = inlined_call_operand.hbm [shape: f32[64,1], index: 5, kind: input, shape index: {}]
  %s6 = inlined_call_operand.hbm [shape: f32[64,1], index: 6, kind: input, shape index: {}]
  %s7 = inlined_call_operand.hbm [shape: f32[64,576], index: 7, kind: input, shape index: {}]
  %s8 = inlined_call_operand.hbm [shape: f32[64,1], index: 8, kind: input, shape index: {}]
  %s9 = inlined_call_operand.hbm [shape: f32[9,256], index: 9, kind: input, shape index: {}]
  %s10 = inlined_call_operand.hbm [shape: f32[64,32], index: 10, kind: input, shape index: {}]
  %s11 = inlined_call_operand.hbm [shape: f32[64,1], index: 11, kind: input, shape index: {}]
  %s12 = inlined_call_operand.hbm [shape: f32[2,64,256], index: 12, kind: output, shape index: {}]
  %s13 = sld [smem:[#allocation0]]
  $region129: #{tpu_custom_call.1} parent=0
    _
  %s15 = ssub.s32 1, %s13
  %s16 = scalar_select 0, %s15, %s13
  $region1: #{tpu_custom_call.1} parent=0
    #allocation4 [shape = 'u8[65536]{0}', space=vmem, size = 0x10000, scoped, tag = 'input window, operand 0']
    #allocation5 [shape = 's32[2]{0}', space=sflag, size = 0x8, scoped, tag = 'scoped memory for tpu_custom_call.1']
    #allocation6 [shape = 's32[2]{0}', space=sflag, size = 0x8, scoped, tag = 'scoped memory for tpu_custom_call.1']
    #allocation7 [shape = 'u8[65536]{0}', space=vmem, size = 0x10000, scoped, tag = 'input window, operand 1']
    #allocation8 [shape = 's32[2]{0}', space=sflag, size = 0x8, scoped, tag = 'scoped memory for tpu_custom_call.1']
    #allocation9 [shape = 'u8[16384]{0}', space=vmem, size = 0x4000, scoped, tag = 'input window, operand 2, single buffered']
    #allocation10 [shape = 'u8[16384]{0}', space=vmem, size = 0x4000, scoped, tag = 'input window, operand 3, single buffered']
    #allocation11 [shape = 's32[1]{0}', space=sflag, size = 0x4, scoped, tag = 'scoped memory for tpu_custom_call.1']
    #allocation12 [shape = 'u8[98304]{0}', space=vmem, size = 0x18000, scoped, tag = 'input window, operand 4, single buffered']
    #allocation13 [shape = 'u8[32768]{0}', space=vmem, size = 0x8000, scoped, tag = 'input window, operand 5, single buffered']
    #allocation14 [shape = 's32[1]{0}', space=sflag, size = 0x4, scoped, tag = 'scoped memory for tpu_custom_call.1']
    #allocation15 [shape = 'u8[32768]{0}', space=vmem, size = 0x8000, scoped, tag = 'input window, operand 6, single buffered']
    #allocation16 [shape = 'u8[163840]{0}', space=vmem, size = 0x28000, scoped, tag = 'input window, operand 7, single buffered']
    #allocation17 [shape = 's32[1]{0}', space=sflag, size = 0x4, scoped, tag = 'scoped memory for tpu_custom_call.1']
    #allocation18 [shape = 'u8[32768]{0}', space=vmem, size = 0x8000, scoped, tag = 'input window, operand 8, single buffered']
    #allocation19 [shape = 'u8[16384]{0}', space=vmem, size = 0x4000, scoped, tag = 'input window, operand 9, single buffered']
    #allocation20 [shape = 's32[1]{0}', space=sflag, size = 0x4, scoped, tag = 'scoped memory for tpu_custom_call.1']
    #allocation21 [shape = 'u8[32768]{0}', space=vmem, size = 0x8000, scoped, tag = 'input window, operand 10, single buffered']
    #allocation22 [shape = 'u8[32768]{0}', space=vmem, size = 0x8000, scoped, tag = 'input window, operand 11, single buffered']
    #allocation23 [shape = 's32[1]{0}', space=sflag, size = 0x4, scoped, tag = 'scoped memory for tpu_custom_call.1']
    #allocation24 [shape = 'u8[131072]{0}', space=vmem, size = 0x20000, scoped, tag = 'output window, operand 0']
    %17 = vsyncpa [#allocation5], 0
    %s18 = scalar_lea.sflag [#allocation5], 1
    %19 = vsyncpa %s18, 0
    %20 = vsyncpa [#allocation8], 0
    %s21 = scalar_lea.sflag [#allocation8], 1
    %22 = vsyncpa %s21, 0
    %23 = vsyncpa [#allocation11], 0
    %24 = vsyncpa [#allocation14], 0
    %25 = vsyncpa [#allocation17], 0
    %26 = vsyncpa [#allocation20], 0
    %27 = vsyncpa [#allocation23], 0
    %28 = vsyncpa [#allocation6], 0
    %s29 = scalar_lea.sflag [#allocation6], 1
    %30 = vsyncpa %s29, 0
    loop: start=0, step=1, limit=4
    $region2: #{tpu_custom_call.1} parent=1 // loop_pre_header
      _
    $region3: #{tpu_custom_call.1} parent=1 // loop_header
      %s32 = sphi 0, %s36
      %p33 = scmp.ge.s32.totalorder %s32, 4
      %s42 = sphi 0, %s44
      %s45 = sphi 0, %s42
      %s46 = sphi 0, %s45
      %s62 = sphi 0, %s46
      %s68 = sphi 0, %s70
      %s71 = sphi 0, %s68
      %s72 = sphi 0, %s71
      %s88 = sphi 0, %s72
      %s92 = sphi 0, %s92
      %s94 = sphi 0, %s92
      %s95 = sphi 0, %s94
      %s109 = sphi 0, %s95
      %s113 = sphi 0, %s113
      %s115 = sphi 0, %s113
      %s116 = sphi 0, %s115
      %s130 = sphi 0, %s116
      %s134 = sphi 0, %s134
      %s136 = sphi 0, %s134
      %s137 = sphi 0, %s136
      %s151 = sphi 0, %s137
      %s155 = sphi 0, %s155
      %s157 = sphi 0, %s155
      %s158 = sphi 0, %s157
      %s172 = sphi 0, %s158
      %s176 = sphi 0, %s176
      %s178 = sphi 0, %s176
      %s179 = sphi 0, %s178
      %s193 = sphi 0, %s179
      %s197 = sphi 0, %s197
      %s199 = sphi 0, %s197
      %s200 = sphi 0, %s199
      %s214 = sphi 0, %s200
      %s218 = sphi 0, %s218
      %s220 = sphi 0, %s218
      %s221 = sphi 0, %s220
      %s235 = sphi 0, %s221
      %s239 = sphi 0, %s239
      %s241 = sphi 0, %s239
      %s242 = sphi 0, %s241
      %s256 = sphi 0, %s242
      %s260 = sphi 0, %s260
      %s262 = sphi 0, %s260
      %s263 = sphi 0, %s262
      %s277 = sphi 0, %s263
      %s281 = sphi 0, %s281
      %s283 = sphi 0, %s281
      %s284 = sphi 0, %s283
      %s298 = sphi 0, %s284
      %s304 = sphi 0, %s306
      %s307 = sphi 0, %s304
      %s308 = sphi 0, %s307
      %s324 = sphi 0, %s308
    $region4: #{tpu_custom_call.1} parent=1 // loop_header_branch
      %35 = sbr.rel (%p33) target = $region8
    $region5: #{tpu_custom_call.1} parent=1 // loop_body
      %s37 = ssub.s32 %s32, 1
      %s38 = ssub.s32 %s32, 2
      %s39 = sadd.s32 %s32, 1
      %s40 = ssub.s32 %s32, %s39
      %p41 = scmp.eq.s32.totalorder %s40, 0
      %s43 = sadd.s32 %s42, 1
      %s44 = scalar_select %p41, %s42, %s43
      %p47 = pneg %p41
      %p48 = scmp.eq.s32.totalorder %s32, 1
      %p49 = por %p47, %p48
      %p50 = scmp.ne.s32.totalorder %s42, %s45
      %p51 = scmp.eq.s32.totalorder %s32, 0
      %p52 = por %p50, %p51
      %p53 = scmp.ne.s32.totalorder %s42, %s45
      %p54 = scmp.eq.s32.totalorder %s37, 1
      %p55 = por %p53, %p54
      %p56 = scmp.ne.s32.totalorder %s45, %s46
      %p57 = scmp.eq.s32.totalorder %s37, 0
      %p58 = por %p56, %p57
      %p59 = scmp.ne.s32.totalorder %s45, %s46
      %p60 = scmp.eq.s32.totalorder %s38, 1
      %p61 = por %p59, %p60
      %p63 = scmp.ne.s32.totalorder %s46, %s62
      %p64 = scmp.eq.s32.totalorder %s38, 0
      %p65 = por %p63, %p64
      %s66 = ssub.s32 %s32, %s39
      %p67 = scmp.eq.s32.totalorder %s66, 0
      %s69 = sadd.s32 %s68, 1
      %s70 = scalar_select %p67, %s68, %s69
      %p73 = pneg %p67
      %p74 = scmp.eq.s32.totalorder %s32, 1
      %p75 = por %p73, %p74
      %p76 = scmp.ne.s32.totalorder %s68, %s71
      %p77 = scmp.eq.s32.totalorder %s32, 0
      %p78 = por %p76, %p77
      %p79 = scmp.ne.s32.totalorder %s68, %s71
      %p80 = scmp.eq.s32.totalorder %s37, 1
      %p81 = por %p79, %p80
      %p82 = scmp.ne.s32.totalorder %s71, %s72
      %p83 = scmp.eq.s32.totalorder %s37, 0
      %p84 = por %p82, %p83
      %p85 = scmp.ne.s32.totalorder %s71, %s72
      %p86 = scmp.eq.s32.totalorder %s38, 1
      %p87 = por %p85, %p86
      %p89 = scmp.ne.s32.totalorder %s72, %s88
      %p90 = scmp.eq.s32.totalorder %s38, 0
      %p91 = por %p89, %p90
      %s93 = sadd.s32 %s92, 1
      %p96 = scmp.eq.s32.totalorder %s32, 1
      %p97 = scmp.ne.s32.totalorder %s92, %s94
      %p98 = scmp.eq.s32.totalorder %s32, 0
      %p99 = por %p97, %p98
      %p100 = scmp.ne.s32.totalorder %s92, %s94
      %p101 = scmp.eq.s32.totalorder %s37, 1
      %p102 = por %p100, %p101
      %p103 = scmp.ne.s32.totalorder %s94, %s95
      %p104 = scmp.eq.s32.totalorder %s37, 0
      %p105 = por %p103, %p104
      %p106 = scmp.ne.s32.totalorder %s94, %s95
      %p107 = scmp.eq.s32.totalorder %s38, 1
      %p108 = por %p106, %p107
      %p110 = scmp.ne.s32.totalorder %s95, %s109
      %p111 = scmp.eq.s32.totalorder %s38, 0
      %p112 = por %p110, %p111
      %s114 = sadd.s32 %s113, 1
      %p117 = scmp.eq.s32.totalorder %s32, 1
      %p118 = scmp.ne.s32.totalorder %s113, %s115
      %p119 = scmp.eq.s32.totalorder %s32, 0
      %p120 = por %p118, %p119
      %p121 = scmp.ne.s32.totalorder %s113, %s115
      %p122 = scmp.eq.s32.totalorder %s37, 1
      %p123 = por %p121, %p122
      %p124 = scmp.ne.s32.totalorder %s115, %s116
      %p125 = scmp.eq.s32.totalorder %s37, 0
      %p126 = por %p124, %p125
      %p127 = scmp.ne.s32.totalorder %s115, %s116
      %p128 = scmp.eq.s32.totalorder %s38, 1
      %p129 = por %p127, %p128
      %p131 = scmp.ne.s32.totalorder %s116, %s130
      %p132 = scmp.eq.s32.totalorder %s38, 0
      %p133 = por %p131, %p132
      %s135 = sadd.s32 %s134, 1
      %p138 = scmp.eq.s32.totalorder %s32, 1
      %p139 = scmp.ne.s32.totalorder %s134, %s136
      %p140 = scmp.eq.s32.totalorder %s32, 0
      %p141 = por %p139, %p140
      %p142 = scmp.ne.s32.totalorder %s134, %s136
      %p143 = scmp.eq.s32.totalorder %s37, 1
      %p144 = por %p142, %p143
      %p145 = scmp.ne.s32.totalorder %s136, %s137
      %p146 = scmp.eq.s32.totalorder %s37, 0
      %p147 = por %p145, %p146
      %p148 = scmp.ne.s32.totalorder %s136, %s137
      %p149 = scmp.eq.s32.totalorder %s38, 1
      %p150 = por %p148, %p149
      %p152 = scmp.ne.s32.totalorder %s137, %s151
      %p153 = scmp.eq.s32.totalorder %s38, 0
      %p154 = por %p152, %p153
      %s156 = sadd.s32 %s155, 1
      %p159 = scmp.eq.s32.totalorder %s32, 1
      %p160 = scmp.ne.s32.totalorder %s155, %s157
      %p161 = scmp.eq.s32.totalorder %s32, 0
      %p162 = por %p160, %p161
      %p163 = scmp.ne.s32.totalorder %s155, %s157
      %p164 = scmp.eq.s32.totalorder %s37, 1
      %p165 = por %p163, %p164
      %p166 = scmp.ne.s32.totalorder %s157, %s158
      %p167 = scmp.eq.s32.totalorder %s37, 0
      %p168 = por %p166, %p167
      %p169 = scmp.ne.s32.totalorder %s157, %s158
      %p170 = scmp.eq.s32.totalorder %s38, 1
      %p171 = por %p169, %p170
      %p173 = scmp.ne.s32.totalorder %s158, %s172
      %p174 = scmp.eq.s32.totalorder %s38, 0
      %p175 = por %p173, %p174
      %s177 = sadd.s32 %s176, 1
      %p180 = scmp.eq.s32.totalorder %s32, 1
      %p181 = scmp.ne.s32.totalorder %s176, %s178
      %p182 = scmp.eq.s32.totalorder %s32, 0
      %p183 = por %p181, %p182
      %p184 = scmp.ne.s32.totalorder %s176, %s178
      %p185 = scmp.eq.s32.totalorder %s37, 1
      %p186 = por %p184, %p185
      %p187 = scmp.ne.s32.totalorder %s178, %s179
      %p188 = scmp.eq.s32.totalorder %s37, 0
      %p189 = por %p187, %p188
      %p190 = scmp.ne.s32.totalorder %s178, %s179
      %p191 = scmp.eq.s32.totalorder %s38, 1
      %p192 = por %p190, %p191
      %p194 = scmp.ne.s32.totalorder %s179, %s193
      %p195 = scmp.eq.s32.totalorder %s38, 0
      %p196 = por %p194, %p195
      %s198 = sadd.s32 %s197, 1
      %p201 = scmp.eq.s32.totalorder %s32, 1
      %p202 = scmp.ne.s32.totalorder %s197, %s199
      %p203 = scmp.eq.s32.totalorder %s32, 0
      %p204 = por %p202, %p203
      %p205 = scmp.ne.s32.totalorder %s197, %s199
      %p206 = scmp.eq.s32.totalorder %s37, 1
      %p207 = por %p205, %p206
      %p208 = scmp.ne.s32.totalorder %s199, %s200
      %p209 = scmp.eq.s32.totalorder %s37, 0
      %p210 = por %p208, %p209
      %p211 = scmp.ne.s32.totalorder %s199, %s200
      %p212 = scmp.eq.s32.totalorder %s38, 1
      %p213 = por %p211, %p212
      %p215 = scmp.ne.s32.totalorder %s200, %s214
      %p216 = scmp.eq.s32.totalorder %s38, 0
      %p217 = por %p215, %p216
      %s219 = sadd.s32 %s218, 1
      %p222 = scmp.eq.s32.totalorder %s32, 1
      %p223 = scmp.ne.s32.totalorder %s218, %s220
      %p224 = scmp.eq.s32.totalorder %s32, 0
      %p225 = por %p223, %p224
      %p226 = scmp.ne.s32.totalorder %s218, %s220
      %p227 = scmp.eq.s32.totalorder %s37, 1
      %p228 = por %p226, %p227
      %p229 = scmp.ne.s32.totalorder %s220, %s221
      %p230 = scmp.eq.s32.totalorder %s37, 0
      %p231 = por %p229, %p230
      %p232 = scmp.ne.s32.totalorder %s220, %s221
      %p233 = scmp.eq.s32.totalorder %s38, 1
      %p234 = por %p232, %p233
      %p236 = scmp.ne.s32.totalorder %s221, %s235
      %p237 = scmp.eq.s32.totalorder %s38, 0
      %p238 = por %p236, %p237
      %s240 = sadd.s32 %s239, 1
      %p243 = scmp.eq.s32.totalorder %s32, 1
      %p244 = scmp.ne.s32.totalorder %s239, %s241
      %p245 = scmp.eq.s32.totalorder %s32, 0
      %p246 = por %p244, %p245
      %p247 = scmp.ne.s32.totalorder %s239, %s241
      %p248 = scmp.eq.s32.totalorder %s37, 1
      %p249 = por %p247, %p248
      %p250 = scmp.ne.s32.totalorder %s241, %s242
      %p251 = scmp.eq.s32.totalorder %s37, 0
      %p252 = por %p250, %p251
      %p253 = scmp.ne.s32.totalorder %s241, %s242
      %p254 = scmp.eq.s32.totalorder %s38, 1
      %p255 = por %p253, %p254
      %p257 = scmp.ne.s32.totalorder %s242, %s256
      %p258 = scmp.eq.s32.totalorder %s38, 0
      %p259 = por %p257, %p258
      %s261 = sadd.s32 %s260, 1
      %p264 = scmp.eq.s32.totalorder %s32, 1
      %p265 = scmp.ne.s32.totalorder %s260, %s262
      %p266 = scmp.eq.s32.totalorder %s32, 0
      %p267 = por %p265, %p266
      %p268 = scmp.ne.s32.totalorder %s260, %s262
      %p269 = scmp.eq.s32.totalorder %s37, 1
      %p270 = por %p268, %p269
      %p271 = scmp.ne.s32.totalorder %s262, %s263
      %p272 = scmp.eq.s32.totalorder %s37, 0
      %p273 = por %p271, %p272
      %p274 = scmp.ne.s32.totalorder %s262, %s263
      %p275 = scmp.eq.s32.totalorder %s38, 1
      %p276 = por %p274, %p275
      %p278 = scmp.ne.s32.totalorder %s263, %s277
      %p279 = scmp.eq.s32.totalorder %s38, 0
      %p280 = por %p278, %p279
      %s282 = sadd.s32 %s281, 1
      %p285 = scmp.eq.s32.totalorder %s32, 1
      %p286 = scmp.ne.s32.totalorder %s281, %s283
      %p287 = scmp.eq.s32.totalorder %s32, 0
      %p288 = por %p286, %p287
      %p289 = scmp.ne.s32.totalorder %s281, %s283
      %p290 = scmp.eq.s32.totalorder %s37, 1
      %p291 = por %p289, %p290
      %p292 = scmp.ne.s32.totalorder %s283, %s284
      %p293 = scmp.eq.s32.totalorder %s37, 0
      %p294 = por %p292, %p293
      %p295 = scmp.ne.s32.totalorder %s283, %s284
      %p296 = scmp.eq.s32.totalorder %s38, 1
      %p297 = por %p295, %p296
      %p299 = scmp.ne.s32.totalorder %s284, %s298
      %p300 = scmp.eq.s32.totalorder %s38, 0
      %p301 = por %p299, %p300
      %s302 = ssub.s32 %s32, %s39
      %p303 = scmp.eq.s32.totalorder %s302, 0
      %s305 = sadd.s32 %s304, 1
      %s306 = scalar_select %p303, %s304, %s305
      %p309 = pneg %p303
      %p310 = scmp.eq.s32.totalorder %s32, 1
      %p311 = por %p309, %p310
      %p312 = scmp.ne.s32.totalorder %s304, %s307
      %p313 = scmp.eq.s32.totalorder %s32, 0
      %p314 = por %p312, %p313
      %p315 = scmp.ne.s32.totalorder %s304, %s307
      %p316 = scmp.eq.s32.totalorder %s37, 1
      %p317 = por %p315, %p316
      %p318 = scmp.ne.s32.totalorder %s307, %s308
      %p319 = scmp.eq.s32.totalorder %s37, 0
      %p320 = por %p318, %p319
      %p321 = scmp.ne.s32.totalorder %s307, %s308
      %p322 = scmp.eq.s32.totalorder %s38, 1
      %p323 = por %p321, %p322
      %p325 = scmp.ne.s32.totalorder %s308, %s324
      %p326 = scmp.eq.s32.totalorder %s38, 0
      %p327 = por %p325, %p326
      %p328 = scmp.le.s32.totalorder 1, %s32
      %p329 = scmp.lt.s32.totalorder %s32, 3
      %p330 = pnand %p328, %p329
      %p331 = pneg %p330
      // Predicated region
      $region9: #{tpu_custom_call.1} parent=5 // pred_check
        _
      $region10: #{tpu_custom_call.1} parent=5 // pred_check_branch
        %333 = sbr.rel (%p330) target = $region12
      $region11: #{tpu_custom_call.1} parent=5 // pred_region
        %s334 = ssub.s32 %s32, 1
        // Predicated region
        $region13: #{tpu_custom_call.1} parent=11 // pred_check
          %p335 = pneg %p105
        $region14: #{tpu_custom_call.1} parent=11 // pred_check_branch
          %337 = sbr.rel (%p335) target = $region16
        $region15: #{tpu_custom_call.1} parent=11 // pred_region
          %s339 = ssub.s32 512, 512
          %340 = vsyncadd [#allocation8], %s339
          %s341 = sshll.u32 [#allocation9], 4
          %s342 = int_to_ptr.vmem [resolvable:$true] %s341
          %347 = dma.hbm_to_vmem [thread:$0]  %s2, 512, %s342, [#allocation8], 128, 128, 8
        $region16: #{tpu_custom_call.1} parent=11 // pred_fallthru
          _
        // Predicated region
        $region17: #{tpu_custom_call.1} parent=11 // pred_check
          %p348 = pneg %p126
        $region18: #{tpu_custom_call.1} parent=11 // pred_check_branch
          %350 = sbr.rel (%p348) target = $region20
        $region19: #{tpu_custom_call.1} parent=11 // pred_region
          %s352 = ssub.s32 512, 512
          %353 = vsyncadd [#allocation11], %s352
          %s354 = sshll.u32 [#allocation10], 4
          %s355 = int_to_ptr.vmem [resolvable:$true] %s354
          %360 = dma.hbm_to_vmem [thread:$0]  %s3, 512, %s355, [#allocation11], 128, 128, 8
        $region20: #{tpu_custom_call.1} parent=11 // pred_fallthru
          _
        // Predicated region
        $region21: #{tpu_custom_call.1} parent=11 // pred_check
          %p361 = pneg %p147
        $region22: #{tpu_custom_call.1} parent=11 // pred_check_branch
          %363 = sbr.rel (%p361) target = $region24
        $region23: #{tpu_custom_call.1} parent=11 // pred_region
          %s365 = ssub.s32 3072, 3072
          %366 = vsyncadd [#allocation11], %s365
          %s367 = sshll.u32 [#allocation12], 4
          %s368 = int_to_ptr.vmem [resolvable:$true] %s367
          %373 = dma.hbm_to_vmem [thread:$0]  %s4, 3072, %s368, [#allocation11], 384, 384, 24
        $region24: #{tpu_custom_call.1} parent=11 // pred_fallthru
          _
        // Predicated region
        $region25: #{tpu_custom_call.1} parent=11 // pred_check
          %p374 = pneg %p168
        $region26: #{tpu_custom_call.1} parent=11 // pred_check_branch
          %376 = sbr.rel (%p374) target = $region28
        $region27: #{tpu_custom_call.1} parent=11 // pred_region
          %s378 = ssub.s32 1024, 1024
          %379 = vsyncadd [#allocation14], %s378
          %s380 = sshll.u32 [#allocation13], 4
          %s381 = int_to_ptr.vmem [resolvable:$true] %s380
          %386 = dma.hbm_to_vmem [thread:$0]  %s5, 1024, %s381, [#allocation14], 128, 128, 8
        $region28: #{tpu_custom_call.1} parent=11 // pred_fallthru
          _
        // Predicated region
        $region29: #{tpu_custom_call.1} parent=11 // pred_check
          %p387 = pneg %p189
        $region30: #{tpu_custom_call.1} parent=11 // pred_check_branch
          %389 = sbr.rel (%p387) target = $region32
        $region31: #{tpu_custom_call.1} parent=11 // pred_region
          %s391 = ssub.s32 1024, 1024
          %392 = vsyncadd [#allocation14], %s391
          %s393 = sshll.u32 [#allocation15], 4
          %s394 = int_to_ptr.vmem [resolvable:$true] %s393
          %399 = dma.hbm_to_vmem [thread:$0]  %s6, 1024, %s394, [#allocation14], 128, 128, 8
        $region32: #{tpu_custom_call.1} parent=11 // pred_fallthru
          _
        // Predicated region
        $region33: #{tpu_custom_call.1} parent=11 // pred_check
          %p400 = pneg %p210
        $region34: #{tpu_custom_call.1} parent=11 // pred_check_branch
          %402 = sbr.rel (%p400) target = $region36
        $region35: #{tpu_custom_call.1} parent=11 // pred_region
          %s404 = ssub.s32 5120, 5120
          %405 = vsyncadd [#allocation17], %s404
          %s406 = sshll.u32 [#allocation16], 4
          %s407 = int_to_ptr.vmem [resolvable:$true] %s406
          %412 = dma.hbm_to_vmem [thread:$0]  %s7, 5120, %s407, [#allocation17], 640, 640, 40
        $region36: #{tpu_custom_call.1} parent=11 // pred_fallthru
          _
        // Predicated region
        $region37: #{tpu_custom_call.1} parent=11 // pred_check
          %p413 = pneg %p231
        $region38: #{tpu_custom_call.1} parent=11 // pred_check_branch
          %415 = sbr.rel (%p413) target = $region40
        $region39: #{tpu_custom_call.1} parent=11 // pred_region
          %s417 = ssub.s32 1024, 1024
          %418 = vsyncadd [#allocation17], %s417
          %s419 = sshll.u32 [#allocation18], 4
          %s420 = int_to_ptr.vmem [resolvable:$true] %s419
          %425 = dma.hbm_to_vmem [thread:$0]  %s8, 1024, %s420, [#allocation17], 128, 128, 8
        $region40: #{tpu_custom_call.1} parent=11 // pred_fallthru
          _
        // Predicated region
        $region41: #{tpu_custom_call.1} parent=11 // pred_check
          %p426 = pneg %p252
        $region42: #{tpu_custom_call.1} parent=11 // pred_check_branch
          %428 = sbr.rel (%p426) target = $region44
        $region43: #{tpu_custom_call.1} parent=11 // pred_region
          %s430 = ssub.s32 512, 512
          %431 = vsyncadd [#allocation20], %s430
          %s432 = sshll.u32 [#allocation19], 4
          %s433 = int_to_ptr.vmem [resolvable:$true] %s432
          %438 = dma.hbm_to_vmem [thread:$0]  %s9, 512, %s433, [#allocation20], 256, 256, 16
        $region44: #{tpu_custom_call.1} parent=11 // pred_fallthru
          _
        // Predicated region
        $region45: #{tpu_custom_call.1} parent=11 // pred_check
          %p439 = pneg %p273
        $region46: #{tpu_custom_call.1} parent=11 // pred_check_branch
          %441 = sbr.rel (%p439) target = $region48
        $region47: #{tpu_custom_call.1} parent=11 // pred_region
          %s443 = ssub.s32 1024, 1024
          %444 = vsyncadd [#allocation20], %s443
          %s445 = sshll.u32 [#allocation21], 4
          %s446 = int_to_ptr.vmem [resolvable:$true] %s445
          %451 = dma.hbm_to_vmem [thread:$0]  %s10, 1024, %s446, [#allocation20], 128, 128, 8
        $region48: #{tpu_custom_call.1} parent=11 // pred_fallthru
          _
        // Predicated region
        $region49: #{tpu_custom_call.1} parent=11 // pred_check
          %p452 = pneg %p294
        $region50: #{tpu_custom_call.1} parent=11 // pred_check_branch
          %454 = sbr.rel (%p452) target = $region52
        $region51: #{tpu_custom_call.1} parent=11 // pred_region
          %s456 = ssub.s32 1024, 1024
          %457 = vsyncadd [#allocation23], %s456
          %s458 = sshll.u32 [#allocation22], 4
          %s459 = int_to_ptr.vmem [resolvable:$true] %s458
          %464 = dma.hbm_to_vmem [thread:$0]  %s11, 1024, %s459, [#allocation23], 128, 128, 8
        $region52: #{tpu_custom_call.1} parent=11 // pred_fallthru
          _
      $region12: #{tpu_custom_call.1} parent=5 // pred_fallthru
        _
      %p465 = scmp.lt.s32.totalorder %s32, 2
      // Predicated region
      $region53: #{tpu_custom_call.1} parent=5 // pred_check
        %p466 = pneg %p465
      $region54: #{tpu_custom_call.1} parent=5 // pred_check_branch
        %468 = sbr.rel (%p466) target = $region56
      $region55: #{tpu_custom_call.1} parent=5 // pred_region
        // Predicated region
        $region57: #{tpu_custom_call.1} parent=55 // pred_check
          %p469 = pneg %p52
        $region58: #{tpu_custom_call.1} parent=55 // pred_check_branch
          %471 = sbr.rel (%p469) target = $region60
        $region59: #{tpu_custom_call.1} parent=55 // pred_region
          %s472 = sand.u32 %s42, 1
          %s473 = scalar_lea.sflag [#allocation5], %s472
          %s474 = sand.u32 %s42, 1
          %s475 = smul.addr %s474, 64
          %s476 = scalar_lea.vmem [#allocation4], %s475
          %s478 = ssub.s32 1024, 1024
          %479 = vsyncadd %s473, %s478
          %s480 = smul.addr %s32, 8
          %s481 = smul.addr %s480, 128
          %s482 = scalar_lea.hbm %s0, %s481
          %s483 = sshll.u32 %s476, 4
          %s484 = int_to_ptr.vmem [resolvable:$true] %s483
          %489 = dma.hbm_to_vmem [thread:$0]  %s482, 1024, %s484, %s473, 256, 256, 16
        $region60: #{tpu_custom_call.1} parent=55 // pred_fallthru
          _
        // Predicated region
        $region61: #{tpu_custom_call.1} parent=55 // pred_check
          %p490 = pneg %p78
        $region62: #{tpu_custom_call.1} parent=55 // pred_check_branch
          %492 = sbr.rel (%p490) target = $region64
        $region63: #{tpu_custom_call.1} parent=55 // pred_region
          %s493 = sand.u32 %s32, 1
          %s494 = scalar_lea.sflag [#allocation8], %s493
          %s495 = sand.u32 %s68, 1
          %s496 = smul.addr %s495, 64
          %s497 = scalar_lea.vmem [#allocation7], %s496
          %s499 = ssub.s32 1024, 1024
          %500 = vsyncadd %s494, %s499
          %s501 = smul.addr %s32, 8
          %s502 = smul.addr %s501, 128
          %s503 = scalar_lea.hbm %s1, %s502
          %s504 = sshll.u32 %s497, 4
          %s505 = int_to_ptr.vmem [resolvable:$true] %s504
          %510 = dma.hbm_to_vmem [thread:$0]  %s503, 1024, %s505, %s494, 128, 128, 8
        $region64: #{tpu_custom_call.1} parent=55 // pred_fallthru
          _
      $region56: #{tpu_custom_call.1} parent=5 // pred_fallthru
        _
      %p511 = scmp.le.s32.totalorder 1, %s32
      %p512 = scmp.lt.s32.totalorder %s32, 3
      %p513 = pnand %p511, %p512
      %p514 = pneg %p513
      // Predicated region
      $region65: #{tpu_custom_call.1} parent=5 // pred_check
        _
      $region66: #{tpu_custom_call.1} parent=5 // pred_check_branch
        %516 = sbr.rel (%p513) target = $region68
      $region67: #{tpu_custom_call.1} parent=5 // pred_region
        %s517 = ssub.s32 %s32, 1
        %s518 = sand.u32 %s45, 1
        %s519 = scalar_lea.sflag [#allocation5], %s518
        %s520 = sand.u32 %s45, 1
        %s521 = smul.addr %s520, 64
        %s522 = scalar_lea.vmem [#allocation4], %s521
        // Predicated region
        $region69: #{tpu_custom_call.1} parent=67 // pred_check
          %p523 = pneg %p58
        $region70: #{tpu_custom_call.1} parent=67 // pred_check_branch
          %525 = sbr.rel (%p523) target = $region72
        $region71: #{tpu_custom_call.1} parent=67 // pred_region
          %526 = dma.done %s519, 1024
        $region72: #{tpu_custom_call.1} parent=67 // pred_fallthru
          _
        %s527 = sand.u32 %s37, 1
        %s528 = scalar_lea.sflag [#allocation8], %s527
        %s529 = sand.u32 %s71, 1
        %s530 = smul.addr %s529, 64
        %s531 = scalar_lea.vmem [#allocation7], %s530
        // Predicated region
        $region73: #{tpu_custom_call.1} parent=67 // pred_check
          %p532 = pneg %p84
        $region74: #{tpu_custom_call.1} parent=67 // pred_check_branch
          %534 = sbr.rel (%p532) target = $region76
        $region75: #{tpu_custom_call.1} parent=67 // pred_region
          %535 = dma.done %s528, 1024
        $region76: #{tpu_custom_call.1} parent=67 // pred_fallthru
          _
        // Predicated region
        $region77: #{tpu_custom_call.1} parent=67 // pred_check
          %p536 = pneg %p105
        $region78: #{tpu_custom_call.1} parent=67 // pred_check_branch
          %538 = sbr.rel (%p536) target = $region80
        $region79: #{tpu_custom_call.1} parent=67 // pred_region
          %539 = dma.done [#allocation8], 512
        $region80: #{tpu_custom_call.1} parent=67 // pred_fallthru
          _
        // Predicated region
        $region81: #{tpu_custom_call.1} parent=67 // pred_check
          %p540 = pneg %p126
        $region82: #{tpu_custom_call.1} parent=67 // pred_check_branch
          %542 = sbr.rel (%p540) target = $region84
        $region83: #{tpu_custom_call.1} parent=67 // pred_region
          %543 = dma.done [#allocation11], 512
        $region84: #{tpu_custom_call.1} parent=67 // pred_fallthru
          _
        // Predicated region
        $region85: #{tpu_custom_call.1} parent=67 // pred_check
          %p544 = pneg %p147
        $region86: #{tpu_custom_call.1} parent=67 // pred_check_branch
          %546 = sbr.rel (%p544) target = $region88
        $region87: #{tpu_custom_call.1} parent=67 // pred_region
          %547 = dma.done [#allocation11], 3072
        $region88: #{tpu_custom_call.1} parent=67 // pred_fallthru
          _
        // Predicated region
        $region89: #{tpu_custom_call.1} parent=67 // pred_check
          %p548 = pneg %p168
        $region90: #{tpu_custom_call.1} parent=67 // pred_check_branch
          %550 = sbr.rel (%p548) target = $region92
        $region91: #{tpu_custom_call.1} parent=67 // pred_region
          %551 = dma.done [#allocation14], 1024
        $region92: #{tpu_custom_call.1} parent=67 // pred_fallthru
          _
        // Predicated region
        $region93: #{tpu_custom_call.1} parent=67 // pred_check
          %p552 = pneg %p189
        $region94: #{tpu_custom_call.1} parent=67 // pred_check_branch
          %554 = sbr.rel (%p552) target = $region96
        $region95: #{tpu_custom_call.1} parent=67 // pred_region
          %555 = dma.done [#allocation14], 1024
        $region96: #{tpu_custom_call.1} parent=67 // pred_fallthru
          _
        // Predicated region
        $region97: #{tpu_custom_call.1} parent=67 // pred_check
          %p556 = pneg %p210
        $region98: #{tpu_custom_call.1} parent=67 // pred_check_branch
          %558 = sbr.rel (%p556) target = $region100
        $region99: #{tpu_custom_call.1} parent=67 // pred_region
          %559 = dma.done [#allocation17], 5120
        $region100: #{tpu_custom_call.1} parent=67 // pred_fallthru
          _
        // Predicated region
        $region101: #{tpu_custom_call.1} parent=67 // pred_check
          %p560 = pneg %p231
        $region102: #{tpu_custom_call.1} parent=67 // pred_check_branch
          %562 = sbr.rel (%p560) target = $region104
        $region103: #{tpu_custom_call.1} parent=67 // pred_region
          %563 = dma.done [#allocation17], 1024
        $region104: #{tpu_custom_call.1} parent=67 // pred_fallthru
          _
        // Predicated region
        $region105: #{tpu_custom_call.1} parent=67 // pred_check
          %p564 = pneg %p252
        $region106: #{tpu_custom_call.1} parent=67 // pred_check_branch
          %566 = sbr.rel (%p564) target = $region108
        $region107: #{tpu_custom_call.1} parent=67 // pred_region
          %567 = dma.done [#allocation20], 512
        $region108: #{tpu_custom_call.1} parent=67 // pred_fallthru
          _
        // Predicated region
        $region109: #{tpu_custom_call.1} parent=67 // pred_check
          %p568 = pneg %p273
        $region110: #{tpu_custom_call.1} parent=67 // pred_check_branch
          %570 = sbr.rel (%p568) target = $region112
        $region111: #{tpu_custom_call.1} parent=67 // pred_region
          %571 = dma.done [#allocation20], 1024
        $region112: #{tpu_custom_call.1} parent=67 // pred_fallthru
          _
        // Predicated region
        $region113: #{tpu_custom_call.1} parent=67 // pred_check
          %p572 = pneg %p294
        $region114: #{tpu_custom_call.1} parent=67 // pred_check_branch
          %574 = sbr.rel (%p572) target = $region116
        $region115: #{tpu_custom_call.1} parent=67 // pred_region
          %575 = dma.done [#allocation23], 1024
        $region116: #{tpu_custom_call.1} parent=67 // pred_fallthru
          _
        %s576 = sand.u32 %s45, 1
        %s577 = scalar_lea.sflag [#allocation5], %s576
        %s578 = sand.u32 %s45, 1
        %s579 = smul.addr %s578, 64
        %s580 = scalar_lea.vmem [#allocation4], %s579
        %p581 = pneg %p58
        %p582 = pneg %p55
        %s583 = sand.u32 %s37, 1
        %s584 = scalar_lea.sflag [#allocation8], %s583
        %s585 = sand.u32 %s71, 1
        %s586 = smul.addr %s585, 64
        %s587 = scalar_lea.vmem [#allocation7], %s586
        %p588 = pneg %p84
        %p589 = pneg %p81
        %p590 = pneg %p105
        %p591 = pneg %p102
        %p592 = pneg %p126
        %p593 = pneg %p123
        %p594 = pneg %p147
        %p595 = pneg %p144
        %p596 = pneg %p168
        %p597 = pneg %p165
        %p598 = pneg %p189
        %p599 = pneg %p186
        %p600 = pneg %p210
        %p601 = pneg %p207
        %p602 = pneg %p231
        %p603 = pneg %p228
        %p604 = pneg %p252
        %p605 = pneg %p249
        %p606 = pneg %p273
        %p607 = pneg %p270
        %p608 = pneg %p294
        %p609 = pneg %p291
        %p610 = pneg %p320
        %p611 = pneg %p317
        %s612 = sand.u32 %s307, 1
        %s613 = scalar_lea.sflag [#allocation6], %s612
        %s614 = sand.u32 %s307, 1
        %s615 = smul.addr %s614, 128
        %s616 = scalar_lea.vmem [#allocation24], %s615
        %v617 = vld [vmem:[%s522] sm:$0xff]
        %v618 = vld [vmem:[%s522 + $0x8] sm:$0xff]
        %v619 = vld [vmem:[%s522 + $0x10] sm:$0xff]
        %v620 = vld [vmem:[%s522 + $0x18] sm:$0xff]
        %v621 = vld [vmem:[%s522 + $0x20] sm:$0xff]
        %v622 = vld [vmem:[%s522 + $0x28] sm:$0xff]
        %v623 = vld [vmem:[%s522 + $0x30] sm:$0xff]
        %v624 = vld [vmem:[%s522 + $0x38] sm:$0xff]
        %v625 = vld [vmem:[#allocation9] sm:$0xff]
        %v626 = vld [vmem:[#allocation9 + $0x8] sm:$0xff]
        %v627 = vld [vmem:[#allocation9 + $0x10] sm:$0xff]
        %v628 = vld [vmem:[#allocation9 + $0x18] sm:$0xff]
        %v629 = vld [vmem:[#allocation10] sm:$0xff]
        %v630 = vld [vmem:[#allocation10 + $0x8] sm:$0xff]
        %v631 = vld [vmem:[#allocation10 + $0x10] sm:$0xff]
        %v632 = vld [vmem:[#allocation10 + $0x18] sm:$0xff]
        %v633 = vlaneseq
        %v634 = vshrl.u32 %v633, 7
        %v635 = vadd.s32 %v634, 8
        %v636 = vadd.s32 %v634, 16
        %v637 = vadd.s32 %v634, 24
        %v638 = vlaneseq
        %v639 = vand.u32 %v638, 127
        %vm640 = vcmp.ge.s32.totalorder %v639, %v634
        %vm641 = vcmp.ge.s32.totalorder %v639, %v635
        %vm642 = vcmp.ge.s32.totalorder %v639, %v636
        %vm643 = vcmp.ge.s32.totalorder %v639, %v637
        %v644 = vadd.s32 %v634, 1
        %v645 = vadd.s32 %v635, 1
        %v646 = vadd.s32 %v636, 1
        %v647 = vadd.s32 %v637, 1
        %vm648 = vcmp.lt.s32.totalorder %v639, %v644
        %vm649 = vcmp.lt.s32.totalorder %v639, %v645
        %vm650 = vcmp.lt.s32.totalorder %v639, %v646
        %vm651 = vcmp.lt.s32.totalorder %v639, %v647
        %vm652 = vmand %vm640, %vm648
        %vm653 = vmand %vm641, %vm649
        %vm654 = vmand %vm642, %vm650
        %vm655 = vmand %vm643, %vm651
        %v656 = vsel %vm652, 1, 0
        %v657 = vsel %vm653, 1, 0
        %v658 = vsel %vm654, 1, 0
        %v659 = vsel %vm655, 1, 0
        %v660 = vcvt.s32.f32 %v656
        %v661 = vcvt.s32.f32 %v657
        %v662 = vcvt.s32.f32 %v658
        %v663 = vcvt.s32.f32 %v659
        %vm664 = vcmp.ge.s32.totalorder %v634, %v639
        %vm665 = vcmp.ge.s32.totalorder %v635, %v639
        %vm666 = vcmp.ge.s32.totalorder %v636, %v639
        %vm667 = vcmp.ge.s32.totalorder %v637, %v639
        %v668 = vadd.s32 %v639, 1
        %vm669 = vcmp.lt.s32.totalorder %v634, %v668
        %vm670 = vcmp.lt.s32.totalorder %v635, %v668
        %vm671 = vcmp.lt.s32.totalorder %v636, %v668
        %vm672 = vcmp.lt.s32.totalorder %v637, %v668
        %vm673 = vmand %vm664, %vm669
        %vm674 = vmand %vm665, %vm670
        %vm675 = vmand %vm666, %vm671
        %vm676 = vmand %vm667, %vm672
        %v677 = vsel %vm673, 1, 0
        %v678 = vsel %vm674, 1, 0
        %v679 = vsel %vm675, 1, 0
        %v680 = vsel %vm676, 1, 0
        %v681 = vcvt.s32.f32 %v677
        %v682 = vcvt.s32.f32 %v678
        %v683 = vcvt.s32.f32 %v679
        %v684 = vcvt.s32.f32 %v680
        %v685 = vadd.f32 %v617, %v618
        %686 = vadd.xlane.f32.xlu0 %v685
        %v687 = vpop.xlane.xlu0 %686
        %v688 = vadd.f32 %v619, %v620
        %689 = vadd.xlane.f32.xlu0 %v688
        %v690 = vpop.xlane.xlu0 %689
        %v691 = vadd.f32 %v621, %v622
        %692 = vadd.xlane.f32.xlu0 %v691
        %v693 = vpop.xlane.xlu0 %692
        %v694 = vadd.f32 %v623, %v624
        %695 = vadd.xlane.f32.xlu0 %v694
        %v696 = vpop.xlane.xlu0 %695
        %v697 = vmul.f32 %v617, %v617
        %v698 = vmul.f32 %v618, %v618
        %v699 = vmul.f32 %v619, %v619
        %v700 = vmul.f32 %v620, %v620
        %v701 = vmul.f32 %v621, %v621
        %v702 = vmul.f32 %v622, %v622
        %v703 = vmul.f32 %v623, %v623
        %v704 = vmul.f32 %v624, %v624
        %v705 = vadd.f32 %v697, %v698
        %706 = vadd.xlane.f32.xlu0 %v705
        %v707 = vpop.xlane.xlu0 %706
        %v708 = vadd.f32 %v699, %v700
        %709 = vadd.xlane.f32.xlu0 %v708
        %v710 = vpop.xlane.xlu0 %709
        %v711 = vadd.f32 %v701, %v702
        %712 = vadd.xlane.f32.xlu0 %v711
        %v713 = vpop.xlane.xlu0 %712
        %v714 = vadd.f32 %v703, %v704
        %715 = vadd.xlane.f32.xlu0 %v714
        %v716 = vpop.xlane.xlu0 %715
        %vm717 = vcmask 261120
        %v719 = vsel %vm717, %v660, 0
        %v722 = vsel %vm717, %v661, 0
        %v725 = vsel %vm717, %v662, 0
        %v728 = vsel %vm717, %v663, 0
        %730 = vmatprep.subr.mxu0 0.0
        %731 = vmatpush1.msra.mxu0 %v687
        %732 = vmatprep.subr.mxu0 0.0
        %733 = vmatpush1.msra.mxu0 %v690
        %734 = vmatprep.subr.mxu0 0.0
        %735 = vmatpush1.msra.mxu0 %v693
        %736 = vmatprep.subr.mxu0 0.0
        %737 = vmatpush1.msra.mxu0 %v696
        %738 = vmatprep.subr.mxu0 0.0
        %739 = vmatpush1.msra.mxu0 0.0
        %740 = vmatprep.subr.mxu0 0.0
        %741 = vmatpush1.msra.mxu0 0.0
        %742 = vmatprep.subr.mxu0 0.0
        %743 = vmatpush1.msra.mxu0 0.0
        %744 = vmatprep.subr.mxu0 0.0
        %745 = vmatpush1.msra.mxu0 0.0
        %746 = vmatprep.subr.mxu0 0.0
        %747 = vmatpush1.msra.mxu0 0.0
        %748 = vmatprep.subr.mxu0 0.0
        %749 = vmatpush1.msra.mxu0 0.0
        %750 = vmatprep.subr.mxu0 0.0
        %751 = vmatpush1.msra.mxu0 0.0
        %752 = vmatprep.subr.mxu0 0.0
        %753 = vmatpush1.msra.mxu0 0.0
        %754 = vmatprep.subr.mxu0 0.0
        %755 = vmatpush1.msra.mxu0 0.0
        %756 = vmatprep.subr.mxu0 0.0
        %757 = vmatpush1.msra.mxu0 0.0
        %758 = vmatprep.subr.mxu0 0.0
        %759 = vmatpush1.msra.mxu0 0.0
        %760 = vmatprep.subr.mxu0 0.0
        %761 = vmatpush1.msra.mxu0 0.0
        %762 = vmatprep.subr.mxu0 0.0
        %763 = vmatpush1.msra.mxu0 0.0
        %764 = vmatprep.subr.mxu0 0.0
        %765 = vmatpush1.msra.mxu0 0.0
        %766 = vmatprep.subr.mxu0 0.0
        %767 = vmatpush1.msra.mxu0 0.0
        %768 = vmatprep.subr.mxu0 0.0
        %769 = vmatpush1.msra.mxu0 0.0
        %770 = vmatprep.subr.mxu0 0.0
        %771 = vmatpush1.msra.mxu0 0.0
        %772 = vmatprep.subr.mxu0 0.0
        %773 = vmatpush1.msra.mxu0 0.0
        %774 = vmatprep.subr.mxu0 0.0
        %775 = vmatpush1.msra.mxu0 0.0
        %776 = vmatprep.subr.mxu0 0.0
        %777 = vmatpush1.msra.mxu0 0.0
        %778 = vmatprep.subr.mxu0 0.0
        %779 = vmatpush1.msra.mxu0 0.0
        %780 = vmatprep.subr.mxu0 0.0
        %781 = vmatpush1.msra.mxu0 0.0
        %782 = vmatprep.subr.mxu0 0.0
        %783 = vmatpush1.msra.mxu0 0.0
        %784 = vmatprep.subr.mxu0 0.0
        %785 = vmatpush1.msra.mxu0 0.0
        %786 = vmatprep.subr.mxu0 0.0
        %787 = vmatpush1.msra.mxu0 0.0
        %788 = vmatprep.subr.mxu0 0.0
        %789 = vmatpush1.msra.mxu0 0.0
        %790 = vmatprep.subr.mxu0 0.0
        %791 = vmatpush1.msra.mxu0 0.0
        %792 = vmatprep.subr.mxu0 0.0
        %793 = vmatpush1.msra.mxu0 0.0
        %794 = vmatprep.mubr.f32.mxu0 0.0
        %795 = vmatmul.mubr.f32.gmra.mrb[0].mxu0 %v719
        %v796 = vpop.f32.mrb[0].mxu0
        %v797 = vadd.f32 0.0, %v796
        %v798 = vpop.f32.mrb[0].mxu0
        %799 = vmatprep.mubr.f32.mxu0 0.0
        %800 = vmatmul.mubr.f32.gmra.mrb[0].mxu0 %v722
        %v801 = vpop.f32.mrb[0].mxu0
        %v802 = vadd.f32 0.0, %v801
        %v803 = vpop.f32.mrb[0].mxu0
        %804 = vmatprep.mubr.f32.mxu0 0.0
        %805 = vmatmul.mubr.f32.gmra.mrb[0].mxu0 %v725
        %v806 = vpop.f32.mrb[0].mxu0
        %v807 = vadd.f32 0.0, %v806
        %v808 = vpop.f32.mrb[0].mxu0
        %809 = vmatprep.mubr.f32.mxu0 0.0
        %810 = vmatmul.mubr.f32.gmra.mrb[0].mxu0 %v728
        %v811 = vpop.f32.mrb[0].mxu0
        %v812 = vadd.f32 0.0, %v811
        %v813 = vpop.f32.mrb[0].mxu0
        %814 = vdwg.mxu0
        %815 = vmatprep.subr.mxu0 0.0
        %816 = vmatpush1.msra.mxu0 %v707
        %817 = vmatprep.subr.mxu0 0.0
        %818 = vmatpush1.msra.mxu0 %v710
        %819 = vmatprep.subr.mxu0 0.0
        %820 = vmatpush1.msra.mxu0 %v713
        %821 = vmatprep.subr.mxu0 0.0
        %822 = vmatpush1.msra.mxu0 %v716
        %823 = vmatprep.subr.mxu0 0.0
        %824 = vmatpush1.msra.mxu0 0.0
        %825 = vmatprep.subr.mxu0 0.0
        %826 = vmatpush1.msra.mxu0 0.0
        %827 = vmatprep.subr.mxu0 0.0
        %828 = vmatpush1.msra.mxu0 0.0
        %829 = vmatprep.subr.mxu0 0.0
        %830 = vmatpush1.msra.mxu0 0.0
        %831 = vmatprep.subr.mxu0 0.0
        %832 = vmatpush1.msra.mxu0 0.0
        %833 = vmatprep.subr.mxu0 0.0
        %834 = vmatpush1.msra.mxu0 0.0
        %835 = vmatprep.subr.mxu0 0.0
        %836 = vmatpush1.msra.mxu0 0.0
        %837 = vmatprep.subr.mxu0 0.0
        %838 = vmatpush1.msra.mxu0 0.0
        %839 = vmatprep.subr.mxu0 0.0
        %840 = vmatpush1.msra.mxu0 0.0
        %841 = vmatprep.subr.mxu0 0.0
        %842 = vmatpush1.msra.mxu0 0.0
        %843 = vmatprep.subr.mxu0 0.0
        %844 = vmatpush1.msra.mxu0 0.0
        %845 = vmatprep.subr.mxu0 0.0
        %846 = vmatpush1.msra.mxu0 0.0
        %847 = vmatprep.subr.mxu0 0.0
        %848 = vmatpush1.msra.mxu0 0.0
        %849 = vmatprep.subr.mxu0 0.0
        %850 = vmatpush1.msra.mxu0 0.0
        %851 = vmatprep.subr.mxu0 0.0
        %852 = vmatpush1.msra.mxu0 0.0
        %853 = vmatprep.subr.mxu0 0.0
        %854 = vmatpush1.msra.mxu0 0.0
        %855 = vmatprep.subr.mxu0 0.0
        %856 = vmatpush1.msra.mxu0 0.0
        %857 = vmatprep.subr.mxu0 0.0
        %858 = vmatpush1.msra.mxu0 0.0
        %859 = vmatprep.subr.mxu0 0.0
        %860 = vmatpush1.msra.mxu0 0.0
        %861 = vmatprep.subr.mxu0 0.0
        %862 = vmatpush1.msra.mxu0 0.0
        %863 = vmatprep.subr.mxu0 0.0
        %864 = vmatpush1.msra.mxu0 0.0
        %865 = vmatprep.subr.mxu0 0.0
        %866 = vmatpush1.msra.mxu0 0.0
        %867 = vmatprep.subr.mxu0 0.0
        %868 = vmatpush1.msra.mxu0 0.0
        %869 = vmatprep.subr.mxu0 0.0
        %870 = vmatpush1.msra.mxu0 0.0
        %871 = vmatprep.subr.mxu0 0.0
        %872 = vmatpush1.msra.mxu0 0.0
        %873 = vmatprep.subr.mxu0 0.0
        %874 = vmatpush1.msra.mxu0 0.0
        %875 = vmatprep.subr.mxu0 0.0
        %876 = vmatpush1.msra.mxu0 0.0
        %877 = vmatprep.subr.mxu0 0.0
        %878 = vmatpush1.msra.mxu0 0.0
        %879 = vmatprep.mubr.f32.mxu0 0.0
        %880 = vmatmul.mubr.f32.gmra.mrb[0].mxu0 %v719
        %v881 = vpop.f32.mrb[0].mxu0
        %v882 = vadd.f32 0.0, %v881
        %v883 = vpop.f32.mrb[0].mxu0
        %884 = vmatprep.mubr.f32.mxu0 0.0
        %885 = vmatmul.mubr.f32.gmra.mrb[0].mxu0 %v722
        %v886 = vpop.f32.mrb[0].mxu0
        %v887 = vadd.f32 0.0, %v886
        %v888 = vpop.f32.mrb[0].mxu0
        %889 = vmatprep.mubr.f32.mxu0 0.0
        %890 = vmatmul.mubr.f32.gmra.mrb[0].mxu0 %v725
        %v891 = vpop.f32.mrb[0].mxu0
        %v892 = vadd.f32 0.0, %v891
        %v893 = vpop.f32.mrb[0].mxu0
        %894 = vmatprep.mubr.f32.mxu0 0.0
        %895 = vmatmul.mubr.f32.gmra.mrb[0].mxu0 %v728
        %v896 = vpop.f32.mrb[0].mxu0
        %v897 = vadd.f32 0.0, %v896
        %v898 = vpop.f32.mrb[0].mxu0
        %899 = vdwg.mxu0
        %v900 = vmul.f32 %v797, 0.00390625
        %v901 = vmul.f32 %v802, 0.00390625
        %v902 = vmul.f32 %v807, 0.00390625
        %v903 = vmul.f32 %v812, 0.00390625
        %v904 = vmul.f32 %v882, 0.00390625
        %v905 = vmul.f32 %v887, 0.00390625
        %v906 = vmul.f32 %v892, 0.00390625
        %v907 = vmul.f32 %v897, 0.00390625
        %v908 = vmul.f32 %v900, %v900
        %v909 = vmul.f32 %v901, %v901
        %v910 = vmul.f32 %v902, %v902
        %v911 = vmul.f32 %v903, %v903
        %v912 = vsub.f32 %v904, %v908
        %v913 = vsub.f32 %v905, %v909
        %v914 = vsub.f32 %v906, %v910
        %v915 = vsub.f32 %v907, %v911
        %v916 = vmax.f32 %v912, 0.0
        %v917 = vmax.f32 %v913, 0.0
        %v918 = vmax.f32 %v914, 0.0
        %v919 = vmax.f32 %v915, 0.0
        %v920 = vadd.f32 %v916, 1e-05
        %v921 = vadd.f32 %v917, 1e-05
        %v922 = vadd.f32 %v918, 1e-05
        %v923 = vadd.f32 %v919, 1e-05
        %v924 = vrsqrt.pop %v920
        %v925 = vrsqrt.pop %v921
        %v926 = vrsqrt.pop %v922
        %v927 = vrsqrt.pop %v923
        %v929 = vsel %vm717, %v681, 0
        %v932 = vsel %vm717, %v682, 0
        %v935 = vsel %vm717, %v683, 0
        %v938 = vsel %vm717, %v684, 0
        %940 = vmatprep.subr.mxu0 0.0
        %941 = vmatpush1.msra.mxu0 %v900
        %942 = vmatprep.subr.mxu0 0.0
        %943 = vmatpush1.msra.mxu0 %v901
        %944 = vmatprep.subr.mxu0 0.0
        %945 = vmatpush1.msra.mxu0 %v902
        %946 = vmatprep.subr.mxu0 0.0
        %947 = vmatpush1.msra.mxu0 %v903
        %948 = vmatprep.subr.mxu0 0.0
        %949 = vmatpush1.msra.mxu0 0.0
        %950 = vmatprep.subr.mxu0 0.0
        %951 = vmatpush1.msra.mxu0 0.0
        %952 = vmatprep.subr.mxu0 0.0
        %953 = vmatpush1.msra.mxu0 0.0
        %954 = vmatprep.subr.mxu0 0.0
        %955 = vmatpush1.msra.mxu0 0.0
        %956 = vmatprep.subr.mxu0 0.0
        %957 = vmatpush1.msra.mxu0 0.0
        %958 = vmatprep.subr.mxu0 0.0
        %959 = vmatpush1.msra.mxu0 0.0
        %960 = vmatprep.subr.mxu0 0.0
        %961 = vmatpush1.msra.mxu0 0.0
        %962 = vmatprep.subr.mxu0 0.0
        %963 = vmatpush1.msra.mxu0 0.0
        %964 = vmatprep.subr.mxu0 0.0
        %965 = vmatpush1.msra.mxu0 0.0
        %966 = vmatprep.subr.mxu0 0.0
        %967 = vmatpush1.msra.mxu0 0.0
        %968 = vmatprep.subr.mxu0 0.0
        %969 = vmatpush1.msra.mxu0 0.0
        %970 = vmatprep.subr.mxu0 0.0
        %971 = vmatpush1.msra.mxu0 0.0
        %972 = vmatprep.subr.mxu0 0.0
        %973 = vmatpush1.msra.mxu0 0.0
        %974 = vmatprep.subr.mxu0 0.0
        %975 = vmatpush1.msra.mxu0 0.0
        %976 = vmatprep.subr.mxu0 0.0
        %977 = vmatpush1.msra.mxu0 0.0
        %978 = vmatprep.subr.mxu0 0.0
        %979 = vmatpush1.msra.mxu0 0.0
        %980 = vmatprep.subr.mxu0 0.0
        %981 = vmatpush1.msra.mxu0 0.0
        %982 = vmatprep.subr.mxu0 0.0
        %983 = vmatpush1.msra.mxu0 0.0
        %984 = vmatprep.subr.mxu0 0.0
        %985 = vmatpush1.msra.mxu0 0.0
        %986 = vmatprep.subr.mxu0 0.0
        %987 = vmatpush1.msra.mxu0 0.0
        %988 = vmatprep.subr.mxu0 0.0
        %989 = vmatpush1.msra.mxu0 0.0
        %990 = vmatprep.subr.mxu0 0.0
        %991 = vmatpush1.msra.mxu0 0.0
        %992 = vmatprep.subr.mxu0 0.0
        %993 = vmatpush1.msra.mxu0 0.0
        %994 = vmatprep.subr.mxu0 0.0
        %995 = vmatpush1.msra.mxu0 0.0
        %996 = vmatprep.subr.mxu0 0.0
        %997 = vmatpush1.msra.mxu0 0.0
        %998 = vmatprep.subr.mxu0 0.0
        %999 = vmatpush1.msra.mxu0 0.0
        %1000 = vmatprep.subr.mxu0 0.0
        %1001 = vmatpush1.msra.mxu0 0.0
        %1002 = vmatprep.subr.mxu0 0.0
        %1003 = vmatpush1.msra.mxu0 0.0
        %1004 = vmatprep.mubr.f32.mxu0 0.0
        %1005 = vmatmul.mubr.f32.gmra.mrb[0].mxu0 %v929
        %v1006 = vpop.f32.mrb[0].mxu0
        %v1007 = vadd.f32 0.0, %v1006
        %v1008 = vpop.f32.mrb[0].mxu0
        %1009 = vmatprep.mubr.f32.mxu0 0.0
        %1010 = vmatmul.mubr.f32.gmra.mrb[0].mxu0 %v932
        %v1011 = vpop.f32.mrb[0].mxu0
        %v1012 = vadd.f32 0.0, %v1011
        %v1013 = vpop.f32.mrb[0].mxu0
        %1014 = vmatprep.mubr.f32.mxu0 0.0
        %1015 = vmatmul.mubr.f32.gmra.mrb[0].mxu0 %v935
        %v1016 = vpop.f32.mrb[0].mxu0
        %v1017 = vadd.f32 0.0, %v1016
        %v1018 = vpop.f32.mrb[0].mxu0
        %1019 = vmatprep.mubr.f32.mxu0 0.0
        %1020 = vmatmul.mubr.f32.gmra.mrb[0].mxu0 %v938
        %v1021 = vpop.f32.mrb[0].mxu0
        %v1022 = vadd.f32 0.0, %v1021
        %v1023 = vpop.f32.mrb[0].mxu0
        %1024 = vdwg.mxu0
        %1025 = vmatprep.subr.mxu0 0.0
        %1026 = vmatpush1.msra.mxu0 %v924
        %1027 = vmatprep.subr.mxu0 0.0
        %1028 = vmatpush1.msra.mxu0 %v925
        %1029 = vmatprep.subr.mxu0 0.0
        %1030 = vmatpush1.msra.mxu0 %v926
        %1031 = vmatprep.subr.mxu0 0.0
        %1032 = vmatpush1.msra.mxu0 %v927
        %1033 = vmatprep.subr.mxu0 0.0
        %1034 = vmatpush1.msra.mxu0 0.0
        %1035 = vmatprep.subr.mxu0 0.0
        %1036 = vmatpush1.msra.mxu0 0.0
        %1037 = vmatprep.subr.mxu0 0.0
        %1038 = vmatpush1.msra.mxu0 0.0
        %1039 = vmatprep.subr.mxu0 0.0
        %1040 = vmatpush1.msra.mxu0 0.0
        %1041 = vmatprep.subr.mxu0 0.0
        %1042 = vmatpush1.msra.mxu0 0.0
        %1043 = vmatprep.subr.mxu0 0.0
        %1044 = vmatpush1.msra.mxu0 0.0
        %1045 = vmatprep.subr.mxu0 0.0
        %1046 = vmatpush1.msra.mxu0 0.0
        %1047 = vmatprep.subr.mxu0 0.0
        %1048 = vmatpush1.msra.mxu0 0.0
        %1049 = vmatprep.subr.mxu0 0.0
        %1050 = vmatpush1.msra.mxu0 0.0
        %1051 = vmatprep.subr.mxu0 0.0
        %1052 = vmatpush1.msra.mxu0 0.0
        %1053 = vmatprep.subr.mxu0 0.0
        %1054 = vmatpush1.msra.mxu0 0.0
        %1055 = vmatprep.subr.mxu0 0.0
        %1056 = vmatpush1.msra.mxu0 0.0
        %1057 = vmatprep.subr.mxu0 0.0
        %1058 = vmatpush1.msra.mxu0 0.0
        %1059 = vmatprep.subr.mxu0 0.0
        %1060 = vmatpush1.msra.mxu0 0.0
        %1061 = vmatprep.subr.mxu0 0.0
        %1062 = vmatpush1.msra.mxu0 0.0
        %1063 = vmatprep.subr.mxu0 0.0
        %1064 = vmatpush1.msra.mxu0 0.0
        %1065 = vmatprep.subr.mxu0 0.0
        %1066 = vmatpush1.msra.mxu0 0.0
        %1067 = vmatprep.subr.mxu0 0.0
        %1068 = vmatpush1.msra.mxu0 0.0
        %1069 = vmatprep.subr.mxu0 0.0
        %1070 = vmatpush1.msra.mxu0 0.0
        %1071 = vmatprep.subr.mxu0 0.0
        %1072 = vmatpush1.msra.mxu0 0.0
        %1073 = vmatprep.subr.mxu0 0.0
        %1074 = vmatpush1.msra.mxu0 0.0
        %1075 = vmatprep.subr.mxu0 0.0
        %1076 = vmatpush1.msra.mxu0 0.0
        %1077 = vmatprep.subr.mxu0 0.0
        %1078 = vmatpush1.msra.mxu0 0.0
        %1079 = vmatprep.subr.mxu0 0.0
        %1080 = vmatpush1.msra.mxu0 0.0
        %1081 = vmatprep.subr.mxu0 0.0
        %1082 = vmatpush1.msra.mxu0 0.0
        %1083 = vmatprep.subr.mxu0 0.0
        %1084 = vmatpush1.msra.mxu0 0.0
        %1085 = vmatprep.subr.mxu0 0.0
        %1086 = vmatpush1.msra.mxu0 0.0
        %1087 = vmatprep.subr.mxu0 0.0
        %1088 = vmatpush1.msra.mxu0 0.0
        %1089 = vmatprep.mubr.f32.mxu0 0.0
        %1090 = vmatmul.mubr.f32.gmra.mrb[0].mxu0 %v929
        %v1091 = vpop.f32.mrb[0].mxu0
        %v1092 = vadd.f32 0.0, %v1091
        %v1093 = vpop.f32.mrb[0].mxu0
        %1094 = vmatprep.mubr.f32.mxu0 0.0
        %1095 = vmatmul.mubr.f32.gmra.mrb[0].mxu0 %v932
        %v1096 = vpop.f32.mrb[0].mxu0
        %v1097 = vadd.f32 0.0, %v1096
        %v1098 = vpop.f32.mrb[0].mxu0
        %1099 = vmatprep.mubr.f32.mxu0 0.0
        %1100 = vmatmul.mubr.f32.gmra.mrb[0].mxu0 %v935
        %v1101 = vpop.f32.mrb[0].mxu0
        %v1102 = vadd.f32 0.0, %v1101
        %v1103 = vpop.f32.mrb[0].mxu0
        %1104 = vmatprep.mubr.f32.mxu0 0.0
        %1105 = vmatmul.mubr.f32.gmra.mrb[0].mxu0 %v938
        %v1106 = vpop.f32.mrb[0].mxu0
        %v1107 = vadd.f32 0.0, %v1106
        %v1108 = vpop.f32.mrb[0].mxu0
        %1109 = vdwg.mxu0
        %v1110 = vmul.f32 %v1092, %v625
        %v1111 = vmul.f32 %v1097, %v626
        %v1112 = vmul.f32 %v1102, %v627
        %v1113 = vmul.f32 %v1107, %v628
        %v1114 = vmul.f32 %v1007, %v1110
        %v1115 = vmul.f32 %v1012, %v1111
        %v1116 = vmul.f32 %v1017, %v1112
        %v1117 = vmul.f32 %v1022, %v1113
        %v1118 = vsub.f32 %v629, %v1114
        %v1119 = vsub.f32 %v630, %v1115
        %v1120 = vsub.f32 %v631, %v1116
        %v1121 = vsub.f32 %v632, %v1117
        %1123 = vset.pattern.permute.xlu0 0
        %1124 = vperm.xlu0 %1123, %v1110
        %v1125 = vpop.permute.xlu0 %1124
        %1128 = vset.pattern.permute.xlu0 0
        %1129 = vperm.xlu0 %1128, %v1111
        %v1130 = vpop.permute.xlu0 %1129
        %1133 = vset.pattern.permute.xlu0 0
        %1134 = vperm.xlu0 %1133, %v1112
        %v1135 = vpop.permute.xlu0 %1134
        %1138 = vset.pattern.permute.xlu0 0
        %1139 = vperm.xlu0 %1138, %v1113
        %v1140 = vpop.permute.xlu0 %1139
        %v1142 = vmul.f32 %v617, %v1125
        %v1143 = vmul.f32 %v618, %v1125
        %v1144 = vmul.f32 %v619, %v1130
        %v1145 = vmul.f32 %v620, %v1130
        %v1146 = vmul.f32 %v621, %v1135
        %v1147 = vmul.f32 %v622, %v1135
        %v1148 = vmul.f32 %v623, %v1140
        %v1149 = vmul.f32 %v624, %v1140
        %1151 = vset.pattern.permute.xlu0 0
        %1152 = vperm.xlu0 %1151, %v1118
        %v1153 = vpop.permute.xlu0 %1152
        %1156 = vset.pattern.permute.xlu0 0
        %1157 = vperm.xlu0 %1156, %v1119
        %v1158 = vpop.permute.xlu0 %1157
        %1161 = vset.pattern.permute.xlu0 0
        %1162 = vperm.xlu0 %1161, %v1120
        %v1163 = vpop.permute.xlu0 %1162
        %1166 = vset.pattern.permute.xlu0 0
        %1167 = vperm.xlu0 %1166, %v1121
        %v1168 = vpop.permute.xlu0 %1167
        %v1170 = vadd.f32 %v1142, %v1153
        %v1171 = vadd.f32 %v1143, %v1153
        %v1172 = vadd.f32 %v1144, %v1158
        %v1173 = vadd.f32 %v1145, %v1158
        %v1174 = vadd.f32 %v1146, %v1163
        %v1175 = vadd.f32 %v1147, %v1163
        %v1176 = vadd.f32 %v1148, %v1168
        %v1177 = vadd.f32 %v1149, %v1168
        %v1178 = vsub.f32 0.0, %v1170
        %v1179 = vsub.f32 0.0, %v1171
        %v1180 = vsub.f32 0.0, %v1172
        %v1181 = vsub.f32 0.0, %v1173
        %v1182 = vsub.f32 0.0, %v1174
        %v1183 = vsub.f32 0.0, %v1175
        %v1184 = vsub.f32 0.0, %v1176
        %v1185 = vsub.f32 0.0, %v1177
        %v1186 = vmul.f32 %v1178, 1.442695
        %v1187 = vpow.pop %v1186
        %v1188 = vmul.f32 %v1179, 1.442695
        %v1189 = vpow.pop %v1188
        %v1190 = vmul.f32 %v1180, 1.442695
        %v1191 = vpow.pop %v1190
        %v1192 = vmul.f32 %v1181, 1.442695
        %v1193 = vpow.pop %v1192
        %v1194 = vmul.f32 %v1182, 1.442695
        %v1195 = vpow.pop %v1194
        %v1196 = vmul.f32 %v1183, 1.442695
        %v1197 = vpow.pop %v1196
        %v1198 = vmul.f32 %v1184, 1.442695
        %v1199 = vpow.pop %v1198
        %v1200 = vmul.f32 %v1185, 1.442695
        %v1201 = vpow.pop %v1200
        %v1202 = vadd.f32 %v1187, 1.0
        %v1203 = vadd.f32 %v1189, 1.0
        %v1204 = vadd.f32 %v1191, 1.0
        %v1205 = vadd.f32 %v1193, 1.0
        %v1206 = vadd.f32 %v1195, 1.0
        %v1207 = vadd.f32 %v1197, 1.0
        %v1208 = vadd.f32 %v1199, 1.0
        %v1209 = vadd.f32 %v1201, 1.0
        %v1210 = vrcp.pop %v1202
        %v1211 = vmul.f32 1.0, %v1210
        %v1212 = vrcp.pop %v1203
        %v1213 = vmul.f32 1.0, %v1212
        %v1214 = vrcp.pop %v1204
        %v1215 = vmul.f32 1.0, %v1214
        %v1216 = vrcp.pop %v1205
        %v1217 = vmul.f32 1.0, %v1216
        %v1218 = vrcp.pop %v1206
        %v1219 = vmul.f32 1.0, %v1218
        %v1220 = vrcp.pop %v1207
        %v1221 = vmul.f32 1.0, %v1220
        %v1222 = vrcp.pop %v1208
        %v1223 = vmul.f32 1.0, %v1222
        %v1224 = vrcp.pop %v1209
        %v1225 = vmul.f32 1.0, %v1224
        %v1226 = vmul.f32 %v1170, %v1211
        %v1227 = vmul.f32 %v1171, %v1213
        %v1228 = vmul.f32 %v1172, %v1215
        %v1229 = vmul.f32 %v1173, %v1217
        %v1230 = vmul.f32 %v1174, %v1219
        %v1231 = vmul.f32 %v1175, %v1221
        %v1232 = vmul.f32 %v1176, %v1223
        %v1233 = vmul.f32 %v1177, %v1225
        %1234 = vrot.lane.b32.xlu0 %v1226, 17
        %v1235 = vpop.permute.xlu0 %1234
        %1236 = vrot.lane.b32.xlu0 %v1228, 17
        %v1237 = vpop.permute.xlu0 %1236
        %1238 = vrot.lane.b32.xlu0 %v1230, 17
        %v1239 = vpop.permute.xlu0 %1238
        %1240 = vrot.lane.b32.xlu0 %v1232, 17
        %v1241 = vpop.permute.xlu0 %1240
        %1242 = vrot.lane.b32.xlu0 %v1227, 17
        %v1243 = vpop.permute.xlu0 %1242
        %1244 = vrot.lane.b32.xlu0 %v1229, 17
        %v1245 = vpop.permute.xlu0 %1244
        %1246 = vrot.lane.b32.xlu0 %v1231, 17
        %v1247 = vpop.permute.xlu0 %1246
        %1248 = vrot.lane.b32.xlu0 %v1233, 17
        %v1249 = vpop.permute.xlu0 %1248
        %vm1250 = vcmp.lt.s32.totalorder %v639, 17
        %v1251 = vsel %vm1250, %v1235, %v1243
        %v1252 = vsel %vm1250, %v1237, %v1245
        %v1253 = vsel %vm1250, %v1239, %v1247
        %v1254 = vsel %vm1250, %v1241, %v1249
        %v1255 = vsel %vm1250, %v1243, %v1235
        %v1256 = vsel %vm1250, %v1245, %v1237
        %v1257 = vsel %vm1250, %v1247, %v1239
        %v1258 = vsel %vm1250, %v1249, %v1241
        %v1259 = vld [vmem:[#allocation19] ss:$8 sm:$0x3]
        %v1261 = vlaneseq
        %v1262 = vshrl.u32 %v1261, 7
        %v1263 = vsub.s32 0, %v1262
        %v1264 = vrot.slane %v1259, %v1263
        %v1265 = vlaneseq
        %v1266 = vshrl.u32 %v1265, 7
        %v1267 = vsub.s32 1, %v1266
        %v1268 = vrot.slane %v1259, %v1267
        %v1271 = vmul.f32 %v1255, %v1264
        %v1272 = vmul.f32 %v1251, %v1268
        %v1273 = vmul.f32 %v1256, %v1264
        %v1274 = vmul.f32 %v1252, %v1268
        %v1275 = vmul.f32 %v1257, %v1264
        %v1276 = vmul.f32 %v1253, %v1268
        %v1277 = vmul.f32 %v1258, %v1264
        %v1278 = vmul.f32 %v1254, %v1268
        %1279 = vst [vmem:[#allocation2] sm:$0xff] %v1271
        %1280 = vst [vmem:[#allocation2 + $0x8] sm:$0xff] %v1272
        %1281 = vst [vmem:[#allocation2 + $0x10] sm:$0xff] %v1273
        %1282 = vst [vmem:[#allocation2 + $0x18] sm:$0xff] %v1274
        %1283 = vst [vmem:[#allocation2 + $0x20] sm:$0xff] %v1275
        %1284 = vst [vmem:[#allocation2 + $0x28] sm:$0xff] %v1276
        %1285 = vst [vmem:[#allocation2 + $0x30] sm:$0xff] %v1277
        %1286 = vst [vmem:[#allocation2 + $0x38] sm:$0xff] %v1278
        %1287 = vrot.lane.b32.xlu0 %v1226, 16
        %v1288 = vpop.permute.xlu0 %1287
        %1289 = vrot.lane.b32.xlu0 %v1228, 16
        %v1290 = vpop.permute.xlu0 %1289
        %1291 = vrot.lane.b32.xlu0 %v1230, 16
        %v1292 = vpop.permute.xlu0 %1291
        %1293 = vrot.lane.b32.xlu0 %v1232, 16
        %v1294 = vpop.permute.xlu0 %1293
        %1295 = vrot.lane.b32.xlu0 %v1227, 16
        %v1296 = vpop.permute.xlu0 %1295
        %1297 = vrot.lane.b32.xlu0 %v1229, 16
        %v1298 = vpop.permute.xlu0 %1297
        %1299 = vrot.lane.b32.xlu0 %v1231, 16
        %v1300 = vpop.permute.xlu0 %1299
        %1301 = vrot.lane.b32.xlu0 %v1233, 16
        %v1302 = vpop.permute.xlu0 %1301
        %vm1303 = vcmp.lt.s32.totalorder %v639, 16
        %v1304 = vsel %vm1303, %v1288, %v1296
        %v1305 = vsel %vm1303, %v1290, %v1298
        %v1306 = vsel %vm1303, %v1292, %v1300
        %v1307 = vsel %vm1303, %v1294, %v1302
        %v1308 = vsel %vm1303, %v1296, %v1288
        %v1309 = vsel %vm1303, %v1298, %v1290
        %v1310 = vsel %vm1303, %v1300, %v1292
        %v1311 = vsel %vm1303, %v1302, %v1294
        %s1312 = scalar_lea.vmem [#allocation19], 1
        %v1313 = vld [vmem:[%s1312] ss:$8 sm:$0x3]
        %v1315 = vlaneseq
        %v1316 = vshrl.u32 %v1315, 7
        %v1317 = vsub.s32 0, %v1316
        %v1318 = vrot.slane %v1313, %v1317
        %v1319 = vlaneseq
        %v1320 = vshrl.u32 %v1319, 7
        %v1321 = vsub.s32 1, %v1320
        %v1322 = vrot.slane %v1313, %v1321
        %v1325 = vmul.f32 %v1308, %v1318
        %v1326 = vmul.f32 %v1304, %v1322
        %v1327 = vmul.f32 %v1309, %v1318
        %v1328 = vmul.f32 %v1305, %v1322
        %v1329 = vmul.f32 %v1310, %v1318
        %v1330 = vmul.f32 %v1306, %v1322
        %v1331 = vmul.f32 %v1311, %v1318
        %v1332 = vmul.f32 %v1307, %v1322
        %1333 = vst [vmem:[#allocation2 + $0x40] sm:$0xff] %v1325
        %1334 = vst [vmem:[#allocation2 + $0x48] sm:$0xff] %v1326
        %1335 = vst [vmem:[#allocation2 + $0x50] sm:$0xff] %v1327
        %1336 = vst [vmem:[#allocation2 + $0x58] sm:$0xff] %v1328
        %1337 = vst [vmem:[#allocation2 + $0x60] sm:$0xff] %v1329
        %1338 = vst [vmem:[#allocation2 + $0x68] sm:$0xff] %v1330
        %1339 = vst [vmem:[#allocation2 + $0x70] sm:$0xff] %v1331
        %1340 = vst [vmem:[#allocation2 + $0x78] sm:$0xff] %v1332
        %1341 = vrot.lane.b32.xlu0 %v1226, 15
        %v1342 = vpop.permute.xlu0 %1341
        %1343 = vrot.lane.b32.xlu0 %v1228, 15
        %v1344 = vpop.permute.xlu0 %1343
        %1345 = vrot.lane.b32.xlu0 %v1230, 15
        %v1346 = vpop.permute.xlu0 %1345
        %1347 = vrot.lane.b32.xlu0 %v1232, 15
        %v1348 = vpop.permute.xlu0 %1347
        %1349 = vrot.lane.b32.xlu0 %v1227, 15
        %v1350 = vpop.permute.xlu0 %1349
        %1351 = vrot.lane.b32.xlu0 %v1229, 15
        %v1352 = vpop.permute.xlu0 %1351
        %1353 = vrot.lane.b32.xlu0 %v1231, 15
        %v1354 = vpop.permute.xlu0 %1353
        %1355 = vrot.lane.b32.xlu0 %v1233, 15
        %v1356 = vpop.permute.xlu0 %1355
        %vm1357 = vcmp.lt.s32.totalorder %v639, 15
        %v1358 = vsel %vm1357, %v1342, %v1350
        %v1359 = vsel %vm1357, %v1344, %v1352
        %v1360 = vsel %vm1357, %v1346, %v1354
        %v1361 = vsel %vm1357, %v1348, %v1356
        %v1362 = vsel %vm1357, %v1350, %v1342
        %v1363 = vsel %vm1357, %v1352, %v1344
        %v1364 = vsel %vm1357, %v1354, %v1346
        %v1365 = vsel %vm1357, %v1356, %v1348
        %s1366 = scalar_lea.vmem [#allocation19], 2
        %v1367 = vld [vmem:[%s1366] ss:$8 sm:$0x3]
        %v1369 = vlaneseq
        %v1370 = vshrl.u32 %v1369, 7
        %v1371 = vsub.s32 0, %v1370
        %v1372 = vrot.slane %v1367, %v1371
        %v1373 = vlaneseq
        %v1374 = vshrl.u32 %v1373, 7
        %v1375 = vsub.s32 1, %v1374
        %v1376 = vrot.slane %v1367, %v1375
        %v1379 = vmul.f32 %v1362, %v1372
        %v1380 = vmul.f32 %v1358, %v1376
        %v1381 = vmul.f32 %v1363, %v1372
        %v1382 = vmul.f32 %v1359, %v1376
        %v1383 = vmul.f32 %v1364, %v1372
        %v1384 = vmul.f32 %v1360, %v1376
        %v1385 = vmul.f32 %v1365, %v1372
        %v1386 = vmul.f32 %v1361, %v1376
        %1387 = vst [vmem:[#allocation2 + $0x80] sm:$0xff] %v1379
        %1388 = vst [vmem:[#allocation2 + $0x88] sm:$0xff] %v1380
        %1389 = vst [vmem:[#allocation2 + $0x90] sm:$0xff] %v1381
        %1390 = vst [vmem:[#allocation2 + $0x98] sm:$0xff] %v1382
        %1391 = vst [vmem:[#allocation2 + $0xa0] sm:$0xff] %v1383
        %1392 = vst [vmem:[#allocation2 + $0xa8] sm:$0xff] %v1384
        %1393 = vst [vmem:[#allocation2 + $0xb0] sm:$0xff] %v1385
        %1394 = vst [vmem:[#allocation2 + $0xb8] sm:$0xff] %v1386
        %1395 = vrot.lane.b32.xlu0 %v1226, 1
        %v1396 = vpop.permute.xlu0 %1395
        %1397 = vrot.lane.b32.xlu0 %v1228, 1
        %v1398 = vpop.permute.xlu0 %1397
        %1399 = vrot.lane.b32.xlu0 %v1230, 1
        %v1400 = vpop.permute.xlu0 %1399
        %1401 = vrot.lane.b32.xlu0 %v1232, 1
        %v1402 = vpop.permute.xlu0 %1401
        %1403 = vrot.lane.b32.xlu0 %v1227, 1
        %v1404 = vpop.permute.xlu0 %1403
        %1405 = vrot.lane.b32.xlu0 %v1229, 1
        %v1406 = vpop.permute.xlu0 %1405
        %1407 = vrot.lane.b32.xlu0 %v1231, 1
        %v1408 = vpop.permute.xlu0 %1407
        %1409 = vrot.lane.b32.xlu0 %v1233, 1
        %v1410 = vpop.permute.xlu0 %1409
        %vm1411 = vcmp.lt.s32.totalorder %v639, 1
        %v1412 = vsel %vm1411, %v1396, %v1404
        %v1413 = vsel %vm1411, %v1398, %v1406
        %v1414 = vsel %vm1411, %v1400, %v1408
        %v1415 = vsel %vm1411, %v1402, %v1410
        %v1416 = vsel %vm1411, %v1404, %v1396
        %v1417 = vsel %vm1411, %v1406, %v1398
        %v1418 = vsel %vm1411, %v1408, %v1400
        %v1419 = vsel %vm1411, %v1410, %v1402
        %s1420 = scalar_lea.vmem [#allocation19], 3
        %v1421 = vld [vmem:[%s1420] ss:$8 sm:$0x3]
        %v1423 = vlaneseq
        %v1424 = vshrl.u32 %v1423, 7
        %v1425 = vsub.s32 0, %v1424
        %v1426 = vrot.slane %v1421, %v1425
        %v1427 = vlaneseq
        %v1428 = vshrl.u32 %v1427, 7
        %v1429 = vsub.s32 1, %v1428
        %v1430 = vrot.slane %v1421, %v1429
        %v1433 = vmul.f32 %v1416, %v1426
        %v1434 = vmul.f32 %v1412, %v1430
        %v1435 = vmul.f32 %v1417, %v1426
        %v1436 = vmul.f32 %v1413, %v1430
        %v1437 = vmul.f32 %v1418, %v1426
        %v1438 = vmul.f32 %v1414, %v1430
        %v1439 = vmul.f32 %v1419, %v1426
        %v1440 = vmul.f32 %v1415, %v1430
        %1441 = vst [vmem:[#allocation2 + $0xc0] sm:$0xff] %v1433
        %1442 = vst [vmem:[#allocation2 + $0xc8] sm:$0xff] %v1434
        %1443 = vst [vmem:[#allocation2 + $0xd0] sm:$0xff] %v1435
        %1444 = vst [vmem:[#allocation2 + $0xd8] sm:$0xff] %v1436
        %1445 = vst [vmem:[#allocation2 + $0xe0] sm:$0xff] %v1437
        %1446 = vst [vmem:[#allocation2 + $0xe8] sm:$0xff] %v1438
        %1447 = vst [vmem:[#allocation2 + $0xf0] sm:$0xff] %v1439
        %1448 = vst [vmem:[#allocation2 + $0xf8] sm:$0xff] %v1440
        %1449 = vst [vmem:[#allocation2 + $0x100] sm:$0xff] %v1226
        %1450 = vst [vmem:[#allocation2 + $0x108] sm:$0xff] %v1227
        %1451 = vst [vmem:[#allocation2 + $0x110] sm:$0xff] %v1228
        %1452 = vst [vmem:[#allocation2 + $0x118] sm:$0xff] %v1229
        %1453 = vst [vmem:[#allocation2 + $0x120] sm:$0xff] %v1230
        %1454 = vst [vmem:[#allocation2 + $0x128] sm:$0xff] %v1231
        %1455 = vst [vmem:[#allocation2 + $0x130] sm:$0xff] %v1232
        %1456 = vst [vmem:[#allocation2 + $0x138] sm:$0xff] %v1233
        %1457 = vrot.lane.b32.xlu0 %v1226, 127
        %v1458 = vpop.permute.xlu0 %1457
        %1459 = vrot.lane.b32.xlu0 %v1228, 127
        %v1460 = vpop.permute.xlu0 %1459
        %1461 = vrot.lane.b32.xlu0 %v1230, 127
        %v1462 = vpop.permute.xlu0 %1461
        %1463 = vrot.lane.b32.xlu0 %v1232, 127
        %v1464 = vpop.permute.xlu0 %1463
        %1465 = vrot.lane.b32.xlu0 %v1227, 127
        %v1466 = vpop.permute.xlu0 %1465
        %1467 = vrot.lane.b32.xlu0 %v1229, 127
        %v1468 = vpop.permute.xlu0 %1467
        %1469 = vrot.lane.b32.xlu0 %v1231, 127
        %v1470 = vpop.permute.xlu0 %1469
        %1471 = vrot.lane.b32.xlu0 %v1233, 127
        %v1472 = vpop.permute.xlu0 %1471
        %vm1473 = vcmp.lt.s32.totalorder %v639, 127
        %v1474 = vsel %vm1473, %v1458, %v1466
        %v1475 = vsel %vm1473, %v1460, %v1468
        %v1476 = vsel %vm1473, %v1462, %v1470
        %v1477 = vsel %vm1473, %v1464, %v1472
        %v1478 = vsel %vm1473, %v1466, %v1458
        %v1479 = vsel %vm1473, %v1468, %v1460
        %v1480 = vsel %vm1473, %v1470, %v1462
        %v1481 = vsel %vm1473, %v1472, %v1464
        %s1482 = scalar_lea.vmem [#allocation19], 5
        %v1483 = vld [vmem:[%s1482] ss:$8 sm:$0x3]
        %v1485 = vlaneseq
        %v1486 = vshrl.u32 %v1485, 7
        %v1487 = vsub.s32 0, %v1486
        %v1488 = vrot.slane %v1483, %v1487
        %v1489 = vlaneseq
        %v1490 = vshrl.u32 %v1489, 7
        %v1491 = vsub.s32 1, %v1490
        %v1492 = vrot.slane %v1483, %v1491
        %v1495 = vmul.f32 %v1474, %v1488
        %v1496 = vmul.f32 %v1478, %v1492
        %v1497 = vmul.f32 %v1475, %v1488
        %v1498 = vmul.f32 %v1479, %v1492
        %v1499 = vmul.f32 %v1476, %v1488
        %v1500 = vmul.f32 %v1480, %v1492
        %v1501 = vmul.f32 %v1477, %v1488
        %v1502 = vmul.f32 %v1481, %v1492
        %1503 = vst [vmem:[#allocation2 + $0x140] sm:$0xff] %v1495
        %1504 = vst [vmem:[#allocation2 + $0x148] sm:$0xff] %v1496
        %1505 = vst [vmem:[#allocation2 + $0x150] sm:$0xff] %v1497
        %1506 = vst [vmem:[#allocation2 + $0x158] sm:$0xff] %v1498
        %1507 = vst [vmem:[#allocation2 + $0x160] sm:$0xff] %v1499
        %1508 = vst [vmem:[#allocation2 + $0x168] sm:$0xff] %v1500
        %1509 = vst [vmem:[#allocation2 + $0x170] sm:$0xff] %v1501
        %1510 = vst [vmem:[#allocation2 + $0x178] sm:$0xff] %v1502
        %1511 = vrot.lane.b32.xlu0 %v1226, 113
        %v1512 = vpop.permute.xlu0 %1511
        %1513 = vrot.lane.b32.xlu0 %v1228, 113
        %v1514 = vpop.permute.xlu0 %1513
        %1515 = vrot.lane.b32.xlu0 %v1230, 113
        %v1516 = vpop.permute.xlu0 %1515
        %1517 = vrot.lane.b32.xlu0 %v1232, 113
        %v1518 = vpop.permute.xlu0 %1517
        %1519 = vrot.lane.b32.xlu0 %v1227, 113
        %v1520 = vpop.permute.xlu0 %1519
        %1521 = vrot.lane.b32.xlu0 %v1229, 113
        %v1522 = vpop.permute.xlu0 %1521
        %1523 = vrot.lane.b32.xlu0 %v1231, 113
        %v1524 = vpop.permute.xlu0 %1523
        %1525 = vrot.lane.b32.xlu0 %v1233, 113
        %v1526 = vpop.permute.xlu0 %1525
        %vm1527 = vcmp.lt.s32.totalorder %v639, 113
        %v1528 = vsel %vm1527, %v1512, %v1520
        %v1529 = vsel %vm1527, %v1514, %v1522
        %v1530 = vsel %vm1527, %v1516, %v1524
        %v1531 = vsel %vm1527, %v1518, %v1526
        %v1532 = vsel %vm1527, %v1520, %v1512
        %v1533 = vsel %vm1527, %v1522, %v1514
        %v1534 = vsel %vm1527, %v1524, %v1516
        %v1535 = vsel %vm1527, %v1526, %v1518
        %s1536 = scalar_lea.vmem [#allocation19], 6
        %v1537 = vld [vmem:[%s1536] ss:$8 sm:$0x3]
        %v1539 = vlaneseq
        %v1540 = vshrl.u32 %v1539, 7
        %v1541 = vsub.s32 0, %v1540
        %v1542 = vrot.slane %v1537, %v1541
        %v1543 = vlaneseq
        %v1544 = vshrl.u32 %v1543, 7
        %v1545 = vsub.s32 1, %v1544
        %v1546 = vrot.slane %v1537, %v1545
        %v1549 = vmul.f32 %v1528, %v1542
        %v1550 = vmul.f32 %v1532, %v1546
        %v1551 = vmul.f32 %v1529, %v1542
        %v1552 = vmul.f32 %v1533, %v1546
        %v1553 = vmul.f32 %v1530, %v1542
        %v1554 = vmul.f32 %v1534, %v1546
        %v1555 = vmul.f32 %v1531, %v1542
        %v1556 = vmul.f32 %v1535, %v1546
        %1557 = vst [vmem:[#allocation2 + $0x180] sm:$0xff] %v1549
        %1558 = vst [vmem:[#allocation2 + $0x188] sm:$0xff] %v1550
        %1559 = vst [vmem:[#allocation2 + $0x190] sm:$0xff] %v1551
        %1560 = vst [vmem:[#allocation2 + $0x198] sm:$0xff] %v1552
        %1561 = vst [vmem:[#allocation2 + $0x1a0] sm:$0xff] %v1553
        %1562 = vst [vmem:[#allocation2 + $0x1a8] sm:$0xff] %v1554
        %1563 = vst [vmem:[#allocation2 + $0x1b0] sm:$0xff] %v1555
        %1564 = vst [vmem:[#allocation2 + $0x1b8] sm:$0xff] %v1556
        %1565 = vrot.lane.b32.xlu0 %v1226, 112
        %v1566 = vpop.permute.xlu0 %1565
        %1567 = vrot.lane.b32.xlu0 %v1228, 112
        %v1568 = vpop.permute.xlu0 %1567
        %1569 = vrot.lane.b32.xlu0 %v1230, 112
        %v1570 = vpop.permute.xlu0 %1569
        %1571 = vrot.lane.b32.xlu0 %v1232, 112
        %v1572 = vpop.permute.xlu0 %1571
        %1573 = vrot.lane.b32.xlu0 %v1227, 112
        %v1574 = vpop.permute.xlu0 %1573
        %1575 = vrot.lane.b32.xlu0 %v1229, 112
        %v1576 = vpop.permute.xlu0 %1575
        %1577 = vrot.lane.b32.xlu0 %v1231, 112
        %v1578 = vpop.permute.xlu0 %1577
        %1579 = vrot.lane.b32.xlu0 %v1233, 112
        %v1580 = vpop.permute.xlu0 %1579
        %vm1581 = vcmp.lt.s32.totalorder %v639, 112
        %v1582 = vsel %vm1581, %v1566, %v1574
        %v1583 = vsel %vm1581, %v1568, %v1576
        %v1584 = vsel %vm1581, %v1570, %v1578
        %v1585 = vsel %vm1581, %v1572, %v1580
        %v1586 = vsel %vm1581, %v1574, %v1566
        %v1587 = vsel %vm1581, %v1576, %v1568
        %v1588 = vsel %vm1581, %v1578, %v1570
        %v1589 = vsel %vm1581, %v1580, %v1572
        %s1590 = scalar_lea.vmem [#allocation19], 7
        %v1591 = vld [vmem:[%s1590] ss:$8 sm:$0x3]
        %v1593 = vlaneseq
        %v1594 = vshrl.u32 %v1593, 7
        %v1595 = vsub.s32 0, %v1594
        %v1596 = vrot.slane %v1591, %v1595
        %v1597 = vlaneseq
        %v1598 = vshrl.u32 %v1597, 7
        %v1599 = vsub.s32 1, %v1598
        %v1600 = vrot.slane %v1591, %v1599
        %v1603 = vmul.f32 %v1582, %v1596
        %v1604 = vmul.f32 %v1586, %v1600
        %v1605 = vmul.f32 %v1583, %v1596
        %v1606 = vmul.f32 %v1587, %v1600
        %v1607 = vmul.f32 %v1584, %v1596
        %v1608 = vmul.f32 %v1588, %v1600
        %v1609 = vmul.f32 %v1585, %v1596
        %v1610 = vmul.f32 %v1589, %v1600
        %1611 = vst [vmem:[#allocation2 + $0x1c0] sm:$0xff] %v1603
        %1612 = vst [vmem:[#allocation2 + $0x1c8] sm:$0xff] %v1604
        %1613 = vst [vmem:[#allocation2 + $0x1d0] sm:$0xff] %v1605
        %1614 = vst [vmem:[#allocation2 + $0x1d8] sm:$0xff] %v1606
        %1615 = vst [vmem:[#allocation2 + $0x1e0] sm:$0xff] %v1607
        %1616 = vst [vmem:[#allocation2 + $0x1e8] sm:$0xff] %v1608
        %1617 = vst [vmem:[#allocation2 + $0x1f0] sm:$0xff] %v1609
        %1618 = vst [vmem:[#allocation2 + $0x1f8] sm:$0xff] %v1610
        %1619 = vrot.lane.b32.xlu0 %v1226, 111
        %v1620 = vpop.permute.xlu0 %1619
        %1621 = vrot.lane.b32.xlu0 %v1228, 111
        %v1622 = vpop.permute.xlu0 %1621
        %1623 = vrot.lane.b32.xlu0 %v1230, 111
        %v1624 = vpop.permute.xlu0 %1623
        %1625 = vrot.lane.b32.xlu0 %v1232, 111
        %v1626 = vpop.permute.xlu0 %1625
        %1627 = vrot.lane.b32.xlu0 %v1227, 111
        %v1628 = vpop.permute.xlu0 %1627
        %1629 = vrot.lane.b32.xlu0 %v1229, 111
        %v1630 = vpop.permute.xlu0 %1629
        %1631 = vrot.lane.b32.xlu0 %v1231, 111
        %v1632 = vpop.permute.xlu0 %1631
        %1633 = vrot.lane.b32.xlu0 %v1233, 111
        %v1634 = vpop.permute.xlu0 %1633
        %vm1635 = vcmp.lt.s32.totalorder %v639, 111
        %v1636 = vsel %vm1635, %v1620, %v1628
        %v1637 = vsel %vm1635, %v1622, %v1630
        %v1638 = vsel %vm1635, %v1624, %v1632
        %v1639 = vsel %vm1635, %v1626, %v1634
        %v1640 = vsel %vm1635, %v1628, %v1620
        %v1641 = vsel %vm1635, %v1630, %v1622
        %v1642 = vsel %vm1635, %v1632, %v1624
        %v1643 = vsel %vm1635, %v1634, %v1626
        %s1644 = scalar_lea.vmem [#allocation19], 16
        %v1645 = vld [vmem:[%s1644] ss:$8 sm:$0x3]
        %v1647 = vlaneseq
        %v1648 = vshrl.u32 %v1647, 7
        %v1649 = vsub.s32 0, %v1648
        %v1650 = vrot.slane %v1645, %v1649
        %v1651 = vlaneseq
        %v1652 = vshrl.u32 %v1651, 7
        %v1653 = vsub.s32 1, %v1652
        %v1654 = vrot.slane %v1645, %v1653
        %v1657 = vmul.f32 %v1636, %v1650
        %v1658 = vmul.f32 %v1640, %v1654
        %v1659 = vmul.f32 %v1637, %v1650
        %v1660 = vmul.f32 %v1641, %v1654
        %v1661 = vmul.f32 %v1638, %v1650
        %v1662 = vmul.f32 %v1642, %v1654
        %v1663 = vmul.f32 %v1639, %v1650
        %v1664 = vmul.f32 %v1643, %v1654
        %1665 = vst [vmem:[#allocation2 + $0x200] sm:$0xff] %v1657
        %1666 = vst [vmem:[#allocation2 + $0x208] sm:$0xff] %v1658
        %1667 = vst [vmem:[#allocation2 + $0x210] sm:$0xff] %v1659
        %1668 = vst [vmem:[#allocation2 + $0x218] sm:$0xff] %v1660
        %1669 = vst [vmem:[#allocation2 + $0x220] sm:$0xff] %v1661
        %1670 = vst [vmem:[#allocation2 + $0x228] sm:$0xff] %v1662
        %1671 = vst [vmem:[#allocation2 + $0x230] sm:$0xff] %v1663
        %1672 = vst [vmem:[#allocation2 + $0x238] sm:$0xff] %v1664
        %v1673 = vld [vmem:[#allocation12] sm:$0xff]
        %v1674 = vld [vmem:[#allocation12 + $0x8] sm:$0xff]
        %v1675 = vld [vmem:[#allocation12 + $0x10] sm:$0xff]
        %v1676 = vld [vmem:[#allocation12 + $0x18] sm:$0xff]
        %v1677 = vld [vmem:[#allocation12 + $0x20] sm:$0xff]
        %v1678 = vld [vmem:[#allocation12 + $0x28] sm:$0xff]
        %v1679 = vld [vmem:[#allocation12 + $0x30] sm:$0xff]
        %v1680 = vld [vmem:[#allocation12 + $0x38] sm:$0xff]
        %v1681 = vld [vmem:[#allocation12 + $0x40] sm:$0xff]
        %v1682 = vld [vmem:[#allocation12 + $0x48] sm:$0xff]
        %v1683 = vld [vmem:[#allocation12 + $0x50] sm:$0xff]
        %v1684 = vld [vmem:[#allocation12 + $0x58] sm:$0xff]
        %v1685 = vld [vmem:[#allocation12 + $0x60] sm:$0xff]
        %v1686 = vld [vmem:[#allocation12 + $0x68] sm:$0xff]
        %v1687 = vld [vmem:[#allocation12 + $0x70] sm:$0xff]
        %v1688 = vld [vmem:[#allocation12 + $0x78] sm:$0xff]
        %v1689 = vld [vmem:[#allocation12 + $0x80] sm:$0xff]
        %v1690 = vld [vmem:[#allocation12 + $0x88] sm:$0xff]
        %v1691 = vld [vmem:[#allocation12 + $0x90] sm:$0xff]
        %v1692 = vld [vmem:[#allocation12 + $0x98] sm:$0xff]
        %v1693 = vld [vmem:[#allocation12 + $0xa0] sm:$0xff]
        %v1694 = vld [vmem:[#allocation12 + $0xa8] sm:$0xff]
        %v1695 = vld [vmem:[#allocation12 + $0xb0] sm:$0xff]
        %v1696 = vld [vmem:[#allocation12 + $0xb8] sm:$0xff]
        %v1697 = vld [vmem:[#allocation2] sm:$0xff]
        %v1698 = vld [vmem:[#allocation2 + $0x8] sm:$0xff]
        %v1699 = vld [vmem:[#allocation2 + $0x10] sm:$0xff]
        %v1700 = vld [vmem:[#allocation2 + $0x18] sm:$0xff]
        %v1701 = vld [vmem:[#allocation2 + $0x20] sm:$0xff]
        %v1702 = vld [vmem:[#allocation2 + $0x28] sm:$0xff]
        %v1703 = vld [vmem:[#allocation2 + $0x30] sm:$0xff]
        %v1704 = vld [vmem:[#allocation2 + $0x38] sm:$0xff]
        %v1705 = vld [vmem:[#allocation2 + $0x40] sm:$0xff]
        %v1706 = vld [vmem:[#allocation2 + $0x48] sm:$0xff]
        %v1707 = vld [vmem:[#allocation2 + $0x50] sm:$0xff]
        %v1708 = vld [vmem:[#allocation2 + $0x58] sm:$0xff]
        %v1709 = vld [vmem:[#allocation2 + $0x60] sm:$0xff]
        %v1710 = vld [vmem:[#allocation2 + $0x68] sm:$0xff]
        %v1711 = vld [vmem:[#allocation2 + $0x70] sm:$0xff]
        %v1712 = vld [vmem:[#allocation2 + $0x78] sm:$0xff]
        %v1713 = vld [vmem:[#allocation2 + $0x80] sm:$0xff]
        %v1714 = vld [vmem:[#allocation2 + $0x88] sm:$0xff]
        %v1715 = vld [vmem:[#allocation2 + $0x90] sm:$0xff]
        %v1716 = vld [vmem:[#allocation2 + $0x98] sm:$0xff]
        %v1717 = vld [vmem:[#allocation2 + $0xa0] sm:$0xff]
        %v1718 = vld [vmem:[#allocation2 + $0xa8] sm:$0xff]
        %v1719 = vld [vmem:[#allocation2 + $0xb0] sm:$0xff]
        %v1720 = vld [vmem:[#allocation2 + $0xb8] sm:$0xff]
        %v1721 = vld [vmem:[#allocation2 + $0xc0] sm:$0xff]
        %v1722 = vld [vmem:[#allocation2 + $0xc8] sm:$0xff]
        %v1723 = vld [vmem:[#allocation2 + $0xd0] sm:$0xff]
        %v1724 = vld [vmem:[#allocation2 + $0xd8] sm:$0xff]
        %v1725 = vld [vmem:[#allocation2 + $0xe0] sm:$0xff]
        %v1726 = vld [vmem:[#allocation2 + $0xe8] sm:$0xff]
        %v1727 = vld [vmem:[#allocation2 + $0xf0] sm:$0xff]
        %v1728 = vld [vmem:[#allocation2 + $0xf8] sm:$0xff]
        %v1729 = vld [vmem:[#allocation2 + $0x100] sm:$0xff]
        %v1730 = vld [vmem:[#allocation2 + $0x108] sm:$0xff]
        %v1731 = vld [vmem:[#allocation2 + $0x110] sm:$0xff]
        %v1732 = vld [vmem:[#allocation2 + $0x118] sm:$0xff]
        %v1733 = vld [vmem:[#allocation2 + $0x120] sm:$0xff]
        %v1734 = vld [vmem:[#allocation2 + $0x128] sm:$0xff]
        %v1735 = vld [vmem:[#allocation2 + $0x130] sm:$0xff]
        %v1736 = vld [vmem:[#allocation2 + $0x138] sm:$0xff]
        %v1737 = vld [vmem:[#allocation2 + $0x140] sm:$0xff]
        %v1738 = vld [vmem:[#allocation2 + $0x148] sm:$0xff]
        %v1739 = vld [vmem:[#allocation2 + $0x150] sm:$0xff]
        %v1740 = vld [vmem:[#allocation2 + $0x158] sm:$0xff]
        %v1741 = vld [vmem:[#allocation2 + $0x160] sm:$0xff]
        %v1742 = vld [vmem:[#allocation2 + $0x168] sm:$0xff]
        %v1743 = vld [vmem:[#allocation2 + $0x170] sm:$0xff]
        %v1744 = vld [vmem:[#allocation2 + $0x178] sm:$0xff]
        %v1745 = vld [vmem:[#allocation2 + $0x180] sm:$0xff]
        %v1746 = vld [vmem:[#allocation2 + $0x188] sm:$0xff]
        %v1747 = vld [vmem:[#allocation2 + $0x190] sm:$0xff]
        %v1748 = vld [vmem:[#allocation2 + $0x198] sm:$0xff]
        %v1749 = vld [vmem:[#allocation2 + $0x1a0] sm:$0xff]
        %v1750 = vld [vmem:[#allocation2 + $0x1a8] sm:$0xff]
        %v1751 = vld [vmem:[#allocation2 + $0x1b0] sm:$0xff]
        %v1752 = vld [vmem:[#allocation2 + $0x1b8] sm:$0xff]
        %v1753 = vld [vmem:[#allocation2 + $0x1c0] sm:$0xff]
        %v1754 = vld [vmem:[#allocation2 + $0x1c8] sm:$0xff]
        %v1755 = vld [vmem:[#allocation2 + $0x1d0] sm:$0xff]
        %v1756 = vld [vmem:[#allocation2 + $0x1d8] sm:$0xff]
        %v1757 = vld [vmem:[#allocation2 + $0x1e0] sm:$0xff]
        %v1758 = vld [vmem:[#allocation2 + $0x1e8] sm:$0xff]
        %v1759 = vld [vmem:[#allocation2 + $0x1f0] sm:$0xff]
        %v1760 = vld [vmem:[#allocation2 + $0x1f8] sm:$0xff]
        %v1761 = vld [vmem:[#allocation2 + $0x200] sm:$0xff]
        %v1762 = vld [vmem:[#allocation2 + $0x208] sm:$0xff]
        %v1763 = vld [vmem:[#allocation2 + $0x210] sm:$0xff]
        %v1764 = vld [vmem:[#allocation2 + $0x218] sm:$0xff]
        %v1765 = vld [vmem:[#allocation2 + $0x220] sm:$0xff]
        %v1766 = vld [vmem:[#allocation2 + $0x228] sm:$0xff]
        %v1767 = vld [vmem:[#allocation2 + $0x230] sm:$0xff]
        %v1768 = vld [vmem:[#allocation2 + $0x238] sm:$0xff]
        %v1769 = vld [vmem:[%s531] sm:$0xff]
        %v1770 = vld [vmem:[%s531 + $0x8] sm:$0xff]
        %v1771 = vld [vmem:[%s531 + $0x10] sm:$0xff]
        %v1772 = vld [vmem:[%s531 + $0x18] sm:$0xff]
        %v1773 = vld [vmem:[%s531 + $0x20] sm:$0xff]
        %v1774 = vld [vmem:[%s531 + $0x28] sm:$0xff]
        %v1775 = vld [vmem:[%s531 + $0x30] sm:$0xff]
        %v1776 = vld [vmem:[%s531 + $0x38] sm:$0xff]
        %1778 = vset.pattern.permute.xlu0 0
        %1779 = vperm.xlu0 %1778, %v1769
        %v1780 = vpop.permute.xlu0 %1779
        %1783 = vset.pattern.permute.xlu0 0
        %1784 = vperm.xlu0 %1783, %v1770
        %v1785 = vpop.permute.xlu0 %1784
        %1788 = vset.pattern.permute.xlu0 0
        %1789 = vperm.xlu0 %1788, %v1771
        %v1790 = vpop.permute.xlu0 %1789
        %1793 = vset.pattern.permute.xlu0 0
        %1794 = vperm.xlu0 %1793, %v1772
        %v1795 = vpop.permute.xlu0 %1794
        %1798 = vset.pattern.permute.xlu0 0
        %1799 = vperm.xlu0 %1798, %v1773
        %v1800 = vpop.permute.xlu0 %1799
        %1803 = vset.pattern.permute.xlu0 0
        %1804 = vperm.xlu0 %1803, %v1774
        %v1805 = vpop.permute.xlu0 %1804
        %1808 = vset.pattern.permute.xlu0 0
        %1809 = vperm.xlu0 %1808, %v1775
        %v1810 = vpop.permute.xlu0 %1809
        %1813 = vset.pattern.permute.xlu0 0
        %1814 = vperm.xlu0 %1813, %v1776
        %v1815 = vpop.permute.xlu0 %1814
        %v1818 = vsel %vm717, %v1675, 0
        %v1821 = vsel %vm717, %v1678, 0
        %v1824 = vsel %vm717, %v1681, 0
        %v1827 = vsel %vm717, %v1684, 0
        %v1830 = vsel %vm717, %v1687, 0
        %v1833 = vsel %vm717, %v1690, 0
        %v1836 = vsel %vm717, %v1693, 0
        %v1839 = vsel %vm717, %v1696, 0
        %1841 = vmatprep.subr.mxu0 %v1698
        %1842 = vmatpush1.msra.mxu0 %v1697
        %1843 = vmatprep.subr.mxu0 %v1700
        %1844 = vmatpush1.msra.mxu0 %v1699
        %1845 = vmatprep.subr.mxu0 %v1702
        %1846 = vmatpush1.msra.mxu0 %v1701
        %1847 = vmatprep.subr.mxu0 %v1704
        %1848 = vmatpush1.msra.mxu0 %v1703
        %1849 = vmatprep.subr.mxu0 %v1706
        %1850 = vmatpush1.msra.mxu0 %v1705
        %1851 = vmatprep.subr.mxu0 %v1708
        %1852 = vmatpush1.msra.mxu0 %v1707
        %1853 = vmatprep.subr.mxu0 %v1710
        %1854 = vmatpush1.msra.mxu0 %v1709
        %1855 = vmatprep.subr.mxu0 %v1712
        %1856 = vmatpush1.msra.mxu0 %v1711
        %1857 = vmatprep.subr.mxu0 %v1714
        %1858 = vmatpush1.msra.mxu0 %v1713
        %1859 = vmatprep.subr.mxu0 %v1716
        %1860 = vmatpush1.msra.mxu0 %v1715
        %1861 = vmatprep.subr.mxu0 %v1718
        %1862 = vmatpush1.msra.mxu0 %v1717
        %1863 = vmatprep.subr.mxu0 %v1720
        %1864 = vmatpush1.msra.mxu0 %v1719
        %1865 = vmatprep.subr.mxu0 %v1722
        %1866 = vmatpush1.msra.mxu0 %v1721
        %1867 = vmatprep.subr.mxu0 %v1724
        %1868 = vmatpush1.msra.mxu0 %v1723
        %1869 = vmatprep.subr.mxu0 %v1726
        %1870 = vmatpush1.msra.mxu0 %v1725
        %1871 = vmatprep.subr.mxu0 %v1728
        %1872 = vmatpush1.msra.mxu0 %v1727
        %1873 = vmatprep.subr.mxu0 %v1730
        %1874 = vmatpush1.msra.mxu0 %v1729
        %1875 = vmatprep.subr.mxu0 %v1732
        %1876 = vmatpush1.msra.mxu0 %v1731
        %1877 = vmatprep.subr.mxu0 %v1734
        %1878 = vmatpush1.msra.mxu0 %v1733
        %1879 = vmatprep.subr.mxu0 %v1736
        %1880 = vmatpush1.msra.mxu0 %v1735
        %1881 = vmatprep.subr.mxu0 %v1738
        %1882 = vmatpush1.msra.mxu0 %v1737
        %1883 = vmatprep.subr.mxu0 %v1740
        %1884 = vmatpush1.msra.mxu0 %v1739
        %1885 = vmatprep.subr.mxu0 %v1742
        %1886 = vmatpush1.msra.mxu0 %v1741
        %1887 = vmatprep.subr.mxu0 %v1744
        %1888 = vmatpush1.msra.mxu0 %v1743
        %1889 = vmatprep.subr.mxu0 %v1746
        %1890 = vmatpush1.msra.mxu0 %v1745
        %1891 = vmatprep.subr.mxu0 %v1748
        %1892 = vmatpush1.msra.mxu0 %v1747
        %1893 = vmatprep.subr.mxu0 %v1750
        %1894 = vmatpush1.msra.mxu0 %v1749
        %1895 = vmatprep.subr.mxu0 %v1752
        %1896 = vmatpush1.msra.mxu0 %v1751
        %1897 = vmatprep.subr.mxu0 %v1754
        %1898 = vmatpush1.msra.mxu0 %v1753
        %1899 = vmatprep.subr.mxu0 %v1756
        %1900 = vmatpush1.msra.mxu0 %v1755
        %1901 = vmatprep.subr.mxu0 %v1758
        %1902 = vmatpush1.msra.mxu0 %v1757
        %1903 = vmatprep.subr.mxu0 %v1760
        %1904 = vmatpush1.msra.mxu0 %v1759
        %1905 = vmatprep.mubr.f32.mxu0 %v1674
        %1906 = vmatmul.mubr.f32.gmra.mrb[0].mxu0 %v1673
        %v1907 = vpop.f32.mrb[0].mxu0
        %v1908 = vadd.f32 %v1780, %v1907
        %v1909 = vpop.f32.mrb[0].mxu0
        %v1910 = vadd.f32 %v1780, %v1909
        %1911 = vmatprep.mubr.f32.mxu0 %v1677
        %1912 = vmatmul.mubr.f32.gmra.mrb[0].mxu0 %v1676
        %v1913 = vpop.f32.mrb[0].mxu0
        %v1914 = vadd.f32 %v1785, %v1913
        %v1915 = vpop.f32.mrb[0].mxu0
        %v1916 = vadd.f32 %v1785, %v1915
        %1917 = vmatprep.mubr.f32.mxu0 %v1680
        %1918 = vmatmul.mubr.f32.gmra.mrb[0].mxu0 %v1679
        %v1919 = vpop.f32.mrb[0].mxu0
        %v1920 = vadd.f32 %v1790, %v1919
        %v1921 = vpop.f32.mrb[0].mxu0
        %v1922 = vadd.f32 %v1790, %v1921
        %1923 = vmatprep.mubr.f32.mxu0 %v1683
        %1924 = vmatmul.mubr.f32.gmra.mrb[0].mxu0 %v1682
        %v1925 = vpop.f32.mrb[0].mxu0
        %v1926 = vadd.f32 %v1795, %v1925
        %v1927 = vpop.f32.mrb[0].mxu0
        %v1928 = vadd.f32 %v1795, %v1927
        %1929 = vmatprep.mubr.f32.mxu0 %v1686
        %1930 = vmatmul.mubr.f32.gmra.mrb[0].mxu0 %v1685
        %v1931 = vpop.f32.mrb[0].mxu0
        %v1932 = vadd.f32 %v1800, %v1931
        %v1933 = vpop.f32.mrb[0].mxu0
        %v1934 = vadd.f32 %v1800, %v1933
        %1935 = vmatprep.mubr.f32.mxu0 %v1689
        %1936 = vmatmul.mubr.f32.gmra.mrb[0].mxu0 %v1688
        %v1937 = vpop.f32.mrb[0].mxu0
        %v1938 = vadd.f32 %v1805, %v1937
        %v1939 = vpop.f32.mrb[0].mxu0
        %v1940 = vadd.f32 %v1805, %v1939
        %1941 = vmatprep.mubr.f32.mxu0 %v1692
        %1942 = vmatmul.mubr.f32.gmra.mrb[0].mxu0 %v1691
        %v1943 = vpop.f32.mrb[0].mxu0
        %v1944 = vadd.f32 %v1810, %v1943
        %v1945 = vpop.f32.mrb[0].mxu0
        %v1946 = vadd.f32 %v1810, %v1945
        %1947 = vmatprep.mubr.f32.mxu0 %v1695
        %1948 = vmatmul.mubr.f32.gmra.mrb[0].mxu0 %v1694
        %v1949 = vpop.f32.mrb[0].mxu0
        %v1950 = vadd.f32 %v1815, %v1949
        %v1951 = vpop.f32.mrb[0].mxu0
        %v1952 = vadd.f32 %v1815, %v1951
        %1953 = vdwg.mxu0
        %1954 = vmatprep.subr.mxu0 %v1762
        %1955 = vmatpush1.msra.mxu0 %v1761
        %1956 = vmatprep.subr.mxu0 %v1764
        %1957 = vmatpush1.msra.mxu0 %v1763
        %1958 = vmatprep.subr.mxu0 %v1766
        %1959 = vmatpush1.msra.mxu0 %v1765
        %1960 = vmatprep.subr.mxu0 %v1768
        %1961 = vmatpush1.msra.mxu0 %v1767
        %1962 = vmatprep.subr.mxu0 0.0
        %1963 = vmatpush1.msra.mxu0 0.0
        %1964 = vmatprep.subr.mxu0 0.0
        %1965 = vmatpush1.msra.mxu0 0.0
        %1966 = vmatprep.subr.mxu0 0.0
        %1967 = vmatpush1.msra.mxu0 0.0
        %1968 = vmatprep.subr.mxu0 0.0
        %1969 = vmatpush1.msra.mxu0 0.0
        %1970 = vmatprep.subr.mxu0 0.0
        %1971 = vmatpush1.msra.mxu0 0.0
        %1972 = vmatprep.subr.mxu0 0.0
        %1973 = vmatpush1.msra.mxu0 0.0
        %1974 = vmatprep.subr.mxu0 0.0
        %1975 = vmatpush1.msra.mxu0 0.0
        %1976 = vmatprep.subr.mxu0 0.0
        %1977 = vmatpush1.msra.mxu0 0.0
        %1978 = vmatprep.subr.mxu0 0.0
        %1979 = vmatpush1.msra.mxu0 0.0
        %1980 = vmatprep.subr.mxu0 0.0
        %1981 = vmatpush1.msra.mxu0 0.0
        %1982 = vmatprep.subr.mxu0 0.0
        %1983 = vmatpush1.msra.mxu0 0.0
        %1984 = vmatprep.subr.mxu0 0.0
        %1985 = vmatpush1.msra.mxu0 0.0
        %1986 = vmatprep.subr.mxu0 0.0
        %1987 = vmatpush1.msra.mxu0 0.0
        %1988 = vmatprep.subr.mxu0 0.0
        %1989 = vmatpush1.msra.mxu0 0.0
        %1990 = vmatprep.subr.mxu0 0.0
        %1991 = vmatpush1.msra.mxu0 0.0
        %1992 = vmatprep.subr.mxu0 0.0
        %1993 = vmatpush1.msra.mxu0 0.0
        %1994 = vmatprep.subr.mxu0 0.0
        %1995 = vmatpush1.msra.mxu0 0.0
        %1996 = vmatprep.subr.mxu0 0.0
        %1997 = vmatpush1.msra.mxu0 0.0
        %1998 = vmatprep.subr.mxu0 0.0
        %1999 = vmatpush1.msra.mxu0 0.0
        %2000 = vmatprep.subr.mxu0 0.0
        %2001 = vmatpush1.msra.mxu0 0.0
        %2002 = vmatprep.subr.mxu0 0.0
        %2003 = vmatpush1.msra.mxu0 0.0
        %2004 = vmatprep.subr.mxu0 0.0
        %2005 = vmatpush1.msra.mxu0 0.0
        %2006 = vmatprep.subr.mxu0 0.0
        %2007 = vmatpush1.msra.mxu0 0.0
        %2008 = vmatprep.subr.mxu0 0.0
        %2009 = vmatpush1.msra.mxu0 0.0
        %2010 = vmatprep.subr.mxu0 0.0
        %2011 = vmatpush1.msra.mxu0 0.0
        %2012 = vmatprep.subr.mxu0 0.0
        %2013 = vmatpush1.msra.mxu0 0.0
        %2014 = vmatprep.subr.mxu0 0.0
        %2015 = vmatpush1.msra.mxu0 0.0
        %2016 = vmatprep.subr.mxu0 0.0
        %2017 = vmatpush1.msra.mxu0 0.0
        %2018 = vmatprep.mubr.f32.mxu0 0.0
        %2019 = vmatmul.mubr.f32.gmra.mrb[0].mxu0 %v1818
        %v2020 = vpop.f32.mrb[0].mxu0
        %v2021 = vadd.f32 %v1908, %v2020
        %v2022 = vpop.f32.mrb[0].mxu0
        %v2023 = vadd.f32 %v1910, %v2022
        %2024 = vmatprep.mubr.f32.mxu0 0.0
        %2025 = vmatmul.mubr.f32.gmra.mrb[0].mxu0 %v1821
        %v2026 = vpop.f32.mrb[0].mxu0
        %v2027 = vadd.f32 %v1914, %v2026
        %v2028 = vpop.f32.mrb[0].mxu0
        %v2029 = vadd.f32 %v1916, %v2028
        %2030 = vmatprep.mubr.f32.mxu0 0.0
        %2031 = vmatmul.mubr.f32.gmra.mrb[0].mxu0 %v1824
        %v2032 = vpop.f32.mrb[0].mxu0
        %v2033 = vadd.f32 %v1920, %v2032
        %v2034 = vpop.f32.mrb[0].mxu0
        %v2035 = vadd.f32 %v1922, %v2034
        %2036 = vmatprep.mubr.f32.mxu0 0.0
        %2037 = vmatmul.mubr.f32.gmra.mrb[0].mxu0 %v1827
        %v2038 = vpop.f32.mrb[0].mxu0
        %v2039 = vadd.f32 %v1926, %v2038
        %v2040 = vpop.f32.mrb[0].mxu0
        %v2041 = vadd.f32 %v1928, %v2040
        %2042 = vmatprep.mubr.f32.mxu0 0.0
        %2043 = vmatmul.mubr.f32.gmra.mrb[0].mxu0 %v1830
        %v2044 = vpop.f32.mrb[0].mxu0
        %v2045 = vadd.f32 %v1932, %v2044
        %v2046 = vpop.f32.mrb[0].mxu0
        %v2047 = vadd.f32 %v1934, %v2046
        %2048 = vmatprep.mubr.f32.mxu0 0.0
        %2049 = vmatmul.mubr.f32.gmra.mrb[0].mxu0 %v1833
        %v2050 = vpop.f32.mrb[0].mxu0
        %v2051 = vadd.f32 %v1938, %v2050
        %v2052 = vpop.f32.mrb[0].mxu0
        %v2053 = vadd.f32 %v1940, %v2052
        %2054 = vmatprep.mubr.f32.mxu0 0.0
        %2055 = vmatmul.mubr.f32.gmra.mrb[0].mxu0 %v1836
        %v2056 = vpop.f32.mrb[0].mxu0
        %v2057 = vadd.f32 %v1944, %v2056
        %v2058 = vpop.f32.mrb[0].mxu0
        %v2059 = vadd.f32 %v1946, %v2058
        %2060 = vmatprep.mubr.f32.mxu0 0.0
        %2061 = vmatmul.mubr.f32.gmra.mrb[0].mxu0 %v1839
        %v2062 = vpop.f32.mrb[0].mxu0
        %v2063 = vadd.f32 %v1950, %v2062
        %v2064 = vpop.f32.mrb[0].mxu0
        %v2065 = vadd.f32 %v1952, %v2064
        %2066 = vdwg.mxu0
        %v2067 = vld [vmem:[#allocation13] sm:$0xff]
        %v2068 = vld [vmem:[#allocation13 + $0x8] sm:$0xff]
        %v2069 = vld [vmem:[#allocation13 + $0x10] sm:$0xff]
        %v2070 = vld [vmem:[#allocation13 + $0x18] sm:$0xff]
        %v2071 = vld [vmem:[#allocation13 + $0x20] sm:$0xff]
        %v2072 = vld [vmem:[#allocation13 + $0x28] sm:$0xff]
        %v2073 = vld [vmem:[#allocation13 + $0x30] sm:$0xff]
        %v2074 = vld [vmem:[#allocation13 + $0x38] sm:$0xff]
        %v2075 = vld [vmem:[#allocation15] sm:$0xff]
        %v2076 = vld [vmem:[#allocation15 + $0x8] sm:$0xff]
        %v2077 = vld [vmem:[#allocation15 + $0x10] sm:$0xff]
        %v2078 = vld [vmem:[#allocation15 + $0x18] sm:$0xff]
        %v2079 = vld [vmem:[#allocation15 + $0x20] sm:$0xff]
        %v2080 = vld [vmem:[#allocation15 + $0x28] sm:$0xff]
        %v2081 = vld [vmem:[#allocation15 + $0x30] sm:$0xff]
        %v2082 = vld [vmem:[#allocation15 + $0x38] sm:$0xff]
        %v2083 = vmul.u32 %v634, 2
        %v2084 = vmul.u32 %v635, 2
        %v2085 = vmul.u32 %v636, 2
        %v2086 = vmul.u32 %v637, 2
        %vm2087 = vcmp.ge.s32.totalorder %v639, %v2083
        %vm2088 = vcmp.ge.s32.totalorder %v639, %v2084
        %vm2089 = vcmp.ge.s32.totalorder %v639, %v2085
        %vm2090 = vcmp.ge.s32.totalorder %v639, %v2086
        %v2091 = vmul.u32 %v644, 2
        %v2092 = vmul.u32 %v645, 2
        %v2093 = vmul.u32 %v646, 2
        %v2094 = vmul.u32 %v647, 2
        %vm2095 = vcmp.lt.s32.totalorder %v639, %v2091
        %vm2096 = vcmp.lt.s32.totalorder %v639, %v2092
        %vm2097 = vcmp.lt.s32.totalorder %v639, %v2093
        %vm2098 = vcmp.lt.s32.totalorder %v639, %v2094
        %vm2099 = vmand %vm2087, %vm2095
        %vm2100 = vmand %vm2088, %vm2096
        %vm2101 = vmand %vm2089, %vm2097
        %vm2102 = vmand %vm2090, %vm2098
        %v2103 = vsel %vm2099, 1, 0
        %v2104 = vsel %vm2100, 1, 0
        %v2105 = vsel %vm2101, 1, 0
        %v2106 = vsel %vm2102, 1, 0
        %v2107 = vcvt.s32.f32 %v2103
        %v2108 = vcvt.s32.f32 %v2104
        %v2109 = vcvt.s32.f32 %v2105
        %v2110 = vcvt.s32.f32 %v2106
        %v2111 = vadd.s32 %v634, 32
        %v2112 = vadd.s32 %v634, 40
        %v2113 = vadd.s32 %v634, 48
        %v2114 = vadd.s32 %v634, 56
        %v2115 = vmul.u32 %v639, 2
        %vm2116 = vcmp.ge.s32.totalorder %v634, %v2115
        %vm2117 = vcmp.ge.s32.totalorder %v635, %v2115
        %vm2118 = vcmp.ge.s32.totalorder %v636, %v2115
        %vm2119 = vcmp.ge.s32.totalorder %v637, %v2115
        %vm2120 = vcmp.ge.s32.totalorder %v2111, %v2115
        %vm2121 = vcmp.ge.s32.totalorder %v2112, %v2115
        %vm2122 = vcmp.ge.s32.totalorder %v2113, %v2115
        %vm2123 = vcmp.ge.s32.totalorder %v2114, %v2115
        %v2124 = vmul.u32 %v668, 2
        %vm2125 = vcmp.lt.s32.totalorder %v634, %v2124
        %vm2126 = vcmp.lt.s32.totalorder %v635, %v2124
        %vm2127 = vcmp.lt.s32.totalorder %v636, %v2124
        %vm2128 = vcmp.lt.s32.totalorder %v637, %v2124
        %vm2129 = vcmp.lt.s32.totalorder %v2111, %v2124
        %vm2130 = vcmp.lt.s32.totalorder %v2112, %v2124
        %vm2131 = vcmp.lt.s32.totalorder %v2113, %v2124
        %vm2132 = vcmp.lt.s32.totalorder %v2114, %v2124
        %vm2133 = vmand %vm2116, %vm2125
        %vm2134 = vmand %vm2117, %vm2126
        %vm2135 = vmand %vm2118, %vm2127
        %vm2136 = vmand %vm2119, %vm2128
        %vm2137 = vmand %vm2120, %vm2129
        %vm2138 = vmand %vm2121, %vm2130
        %vm2139 = vmand %vm2122, %vm2131
        %vm2140 = vmand %vm2123, %vm2132
        %v2141 = vsel %vm2133, 1, 0
        %v2142 = vsel %vm2134, 1, 0
        %v2143 = vsel %vm2135, 1, 0
        %v2144 = vsel %vm2136, 1, 0
        %v2145 = vsel %vm2137, 1, 0
        %v2146 = vsel %vm2138, 1, 0
        %v2147 = vsel %vm2139, 1, 0
        %v2148 = vsel %vm2140, 1, 0
        %v2149 = vcvt.s32.f32 %v2141
        %v2150 = vcvt.s32.f32 %v2142
        %v2151 = vcvt.s32.f32 %v2143
        %v2152 = vcvt.s32.f32 %v2144
        %v2153 = vcvt.s32.f32 %v2145
        %v2154 = vcvt.s32.f32 %v2146
        %v2155 = vcvt.s32.f32 %v2147
        %v2156 = vcvt.s32.f32 %v2148
        %v2157 = vadd.f32 %v2021, %v2023
        %2158 = vadd.xlane.f32.xlu0 %v2157
        %v2159 = vpop.xlane.xlu0 %2158
        %v2160 = vadd.f32 %v2027, %v2029
        %2161 = vadd.xlane.f32.xlu0 %v2160
        %v2162 = vpop.xlane.xlu0 %2161
        %v2163 = vadd.f32 %v2033, %v2035
        %2164 = vadd.xlane.f32.xlu0 %v2163
        %v2165 = vpop.xlane.xlu0 %2164
        %v2166 = vadd.f32 %v2039, %v2041
        %2167 = vadd.xlane.f32.xlu0 %v2166
        %v2168 = vpop.xlane.xlu0 %2167
        %v2169 = vadd.f32 %v2045, %v2047
        %2170 = vadd.xlane.f32.xlu0 %v2169
        %v2171 = vpop.xlane.xlu0 %2170
        %v2172 = vadd.f32 %v2051, %v2053
        %2173 = vadd.xlane.f32.xlu0 %v2172
        %v2174 = vpop.xlane.xlu0 %2173
        %v2175 = vadd.f32 %v2057, %v2059
        %2176 = vadd.xlane.f32.xlu0 %v2175
        %v2177 = vpop.xlane.xlu0 %2176
        %v2178 = vadd.f32 %v2063, %v2065
        %2179 = vadd.xlane.f32.xlu0 %v2178
        %v2180 = vpop.xlane.xlu0 %2179
        %v2181 = vmul.f32 %v2021, %v2021
        %v2182 = vmul.f32 %v2023, %v2023
        %v2183 = vmul.f32 %v2027, %v2027
        %v2184 = vmul.f32 %v2029, %v2029
        %v2185 = vmul.f32 %v2033, %v2033
        %v2186 = vmul.f32 %v2035, %v2035
        %v2187 = vmul.f32 %v2039, %v2039
        %v2188 = vmul.f32 %v2041, %v2041
        %v2189 = vmul.f32 %v2045, %v2045
        %v2190 = vmul.f32 %v2047, %v2047
        %v2191 = vmul.f32 %v2051, %v2051
        %v2192 = vmul.f32 %v2053, %v2053
        %v2193 = vmul.f32 %v2057, %v2057
        %v2194 = vmul.f32 %v2059, %v2059
        %v2195 = vmul.f32 %v2063, %v2063
        %v2196 = vmul.f32 %v2065, %v2065
        %v2197 = vadd.f32 %v2181, %v2182
        %2198 = vadd.xlane.f32.xlu0 %v2197
        %v2199 = vpop.xlane.xlu0 %2198
        %v2200 = vadd.f32 %v2183, %v2184
        %2201 = vadd.xlane.f32.xlu0 %v2200
        %v2202 = vpop.xlane.xlu0 %2201
        %v2203 = vadd.f32 %v2185, %v2186
        %2204 = vadd.xlane.f32.xlu0 %v2203
        %v2205 = vpop.xlane.xlu0 %2204
        %v2206 = vadd.f32 %v2187, %v2188
        %2207 = vadd.xlane.f32.xlu0 %v2206
        %v2208 = vpop.xlane.xlu0 %2207
        %v2209 = vadd.f32 %v2189, %v2190
        %2210 = vadd.xlane.f32.xlu0 %v2209
        %v2211 = vpop.xlane.xlu0 %2210
        %v2212 = vadd.f32 %v2191, %v2192
        %2213 = vadd.xlane.f32.xlu0 %v2212
        %v2214 = vpop.xlane.xlu0 %2213
        %v2215 = vadd.f32 %v2193, %v2194
        %2216 = vadd.xlane.f32.xlu0 %v2215
        %v2217 = vpop.xlane.xlu0 %2216
        %v2218 = vadd.f32 %v2195, %v2196
        %2219 = vadd.xlane.f32.xlu0 %v2218
        %v2220 = vpop.xlane.xlu0 %2219
        %vm2221 = vcmask 523264
        %v2223 = vsel %vm2221, %v2107, 0
        %v2226 = vsel %vm2221, %v2108, 0
        %v2229 = vsel %vm2221, %v2109, 0
        %v2232 = vsel %vm2221, %v2110, 0
        %2234 = vmatprep.subr.mxu0 0.0
        %2235 = vmatpush1.msra.mxu0 %v2159
        %2236 = vmatprep.subr.mxu0 0.0
        %2237 = vmatpush1.msra.mxu0 %v2162
        %2238 = vmatprep.subr.mxu0 0.0
        %2239 = vmatpush1.msra.mxu0 %v2165
        %2240 = vmatprep.subr.mxu0 0.0
        %2241 = vmatpush1.msra.mxu0 %v2168
        %2242 = vmatprep.subr.mxu0 0.0
        %2243 = vmatpush1.msra.mxu0 %v2171
        %2244 = vmatprep.subr.mxu0 0.0
        %2245 = vmatpush1.msra.mxu0 %v2174
        %2246 = vmatprep.subr.mxu0 0.0
        %2247 = vmatpush1.msra.mxu0 %v2177
        %2248 = vmatprep.subr.mxu0 0.0
        %2249 = vmatpush1.msra.mxu0 %v2180
        %2250 = vmatprep.subr.mxu0 0.0
        %2251 = vmatpush1.msra.mxu0 0.0
        %2252 = vmatprep.subr.mxu0 0.0
        %2253 = vmatpush1.msra.mxu0 0.0
        %2254 = vmatprep.subr.mxu0 0.0
        %2255 = vmatpush1.msra.mxu0 0.0
        %2256 = vmatprep.subr.mxu0 0.0
        %2257 = vmatpush1.msra.mxu0 0.0
        %2258 = vmatprep.subr.mxu0 0.0
        %2259 = vmatpush1.msra.mxu0 0.0
        %2260 = vmatprep.subr.mxu0 0.0
        %2261 = vmatpush1.msra.mxu0 0.0
        %2262 = vmatprep.subr.mxu0 0.0
        %2263 = vmatpush1.msra.mxu0 0.0
        %2264 = vmatprep.subr.mxu0 0.0
        %2265 = vmatpush1.msra.mxu0 0.0
        %2266 = vmatprep.subr.mxu0 0.0
        %2267 = vmatpush1.msra.mxu0 0.0
        %2268 = vmatprep.subr.mxu0 0.0
        %2269 = vmatpush1.msra.mxu0 0.0
        %2270 = vmatprep.subr.mxu0 0.0
        %2271 = vmatpush1.msra.mxu0 0.0
        %2272 = vmatprep.subr.mxu0 0.0
        %2273 = vmatpush1.msra.mxu0 0.0
        %2274 = vmatprep.subr.mxu0 0.0
        %2275 = vmatpush1.msra.mxu0 0.0
        %2276 = vmatprep.subr.mxu0 0.0
        %2277 = vmatpush1.msra.mxu0 0.0
        %2278 = vmatprep.subr.mxu0 0.0
        %2279 = vmatpush1.msra.mxu0 0.0
        %2280 = vmatprep.subr.mxu0 0.0
        %2281 = vmatpush1.msra.mxu0 0.0
        %2282 = vmatprep.subr.mxu0 0.0
        %2283 = vmatpush1.msra.mxu0 0.0
        %2284 = vmatprep.subr.mxu0 0.0
        %2285 = vmatpush1.msra.mxu0 0.0
        %2286 = vmatprep.subr.mxu0 0.0
        %2287 = vmatpush1.msra.mxu0 0.0
        %2288 = vmatprep.subr.mxu0 0.0
        %2289 = vmatpush1.msra.mxu0 0.0
        %2290 = vmatprep.subr.mxu0 0.0
        %2291 = vmatpush1.msra.mxu0 0.0
        %2292 = vmatprep.subr.mxu0 0.0
        %2293 = vmatpush1.msra.mxu0 0.0
        %2294 = vmatprep.subr.mxu0 0.0
        %2295 = vmatpush1.msra.mxu0 0.0
        %2296 = vmatprep.subr.mxu0 0.0
        %2297 = vmatpush1.msra.mxu0 0.0
        %2298 = vmatprep.mubr.f32.mxu0 0.0
        %2299 = vmatmul.mubr.f32.gmra.mrb[0].mxu0 %v2223
        %v2300 = vpop.f32.mrb[0].mxu0
        %v2301 = vadd.f32 0.0, %v2300
        %v2302 = vpop.f32.mrb[0].mxu0
        %2303 = vmatprep.mubr.f32.mxu0 0.0
        %2304 = vmatmul.mubr.f32.gmra.mrb[0].mxu0 %v2226
        %v2305 = vpop.f32.mrb[0].mxu0
        %v2306 = vadd.f32 0.0, %v2305
        %v2307 = vpop.f32.mrb[0].mxu0
        %2308 = vmatprep.mubr.f32.mxu0 0.0
        %2309 = vmatmul.mubr.f32.gmra.mrb[0].mxu0 %v2229
        %v2310 = vpop.f32.mrb[0].mxu0
        %v2311 = vadd.f32 0.0, %v2310
        %v2312 = vpop.f32.mrb[0].mxu0
        %2313 = vmatprep.mubr.f32.mxu0 0.0
        %2314 = vmatmul.mubr.f32.gmra.mrb[0].mxu0 %v2232
        %v2315 = vpop.f32.mrb[0].mxu0
        %v2316 = vadd.f32 0.0, %v2315
        %v2317 = vpop.f32.mrb[0].mxu0
        %2318 = vdwg.mxu0
        %2319 = vmatprep.subr.mxu0 0.0
        %2320 = vmatpush1.msra.mxu0 %v2199
        %2321 = vmatprep.subr.mxu0 0.0
        %2322 = vmatpush1.msra.mxu0 %v2202
        %2323 = vmatprep.subr.mxu0 0.0
        %2324 = vmatpush1.msra.mxu0 %v2205
        %2325 = vmatprep.subr.mxu0 0.0
        %2326 = vmatpush1.msra.mxu0 %v2208
        %2327 = vmatprep.subr.mxu0 0.0
        %2328 = vmatpush1.msra.mxu0 %v2211
        %2329 = vmatprep.subr.mxu0 0.0
        %2330 = vmatpush1.msra.mxu0 %v2214
        %2331 = vmatprep.subr.mxu0 0.0
        %2332 = vmatpush1.msra.mxu0 %v2217
        %2333 = vmatprep.subr.mxu0 0.0
        %2334 = vmatpush1.msra.mxu0 %v2220
        %2335 = vmatprep.subr.mxu0 0.0
        %2336 = vmatpush1.msra.mxu0 0.0
        %2337 = vmatprep.subr.mxu0 0.0
        %2338 = vmatpush1.msra.mxu0 0.0
        %2339 = vmatprep.subr.mxu0 0.0
        %2340 = vmatpush1.msra.mxu0 0.0
        %2341 = vmatprep.subr.mxu0 0.0
        %2342 = vmatpush1.msra.mxu0 0.0
        %2343 = vmatprep.subr.mxu0 0.0
        %2344 = vmatpush1.msra.mxu0 0.0
        %2345 = vmatprep.subr.mxu0 0.0
        %2346 = vmatpush1.msra.mxu0 0.0
        %2347 = vmatprep.subr.mxu0 0.0
        %2348 = vmatpush1.msra.mxu0 0.0
        %2349 = vmatprep.subr.mxu0 0.0
        %2350 = vmatpush1.msra.mxu0 0.0
        %2351 = vmatprep.subr.mxu0 0.0
        %2352 = vmatpush1.msra.mxu0 0.0
        %2353 = vmatprep.subr.mxu0 0.0
        %2354 = vmatpush1.msra.mxu0 0.0
        %2355 = vmatprep.subr.mxu0 0.0
        %2356 = vmatpush1.msra.mxu0 0.0
        %2357 = vmatprep.subr.mxu0 0.0
        %2358 = vmatpush1.msra.mxu0 0.0
        %2359 = vmatprep.subr.mxu0 0.0
        %2360 = vmatpush1.msra.mxu0 0.0
        %2361 = vmatprep.subr.mxu0 0.0
        %2362 = vmatpush1.msra.mxu0 0.0
        %2363 = vmatprep.subr.mxu0 0.0
        %2364 = vmatpush1.msra.mxu0 0.0
        %2365 = vmatprep.subr.mxu0 0.0
        %2366 = vmatpush1.msra.mxu0 0.0
        %2367 = vmatprep.subr.mxu0 0.0
        %2368 = vmatpush1.msra.mxu0 0.0
        %2369 = vmatprep.subr.mxu0 0.0
        %2370 = vmatpush1.msra.mxu0 0.0
        %2371 = vmatprep.subr.mxu0 0.0
        %2372 = vmatpush1.msra.mxu0 0.0
        %2373 = vmatprep.subr.mxu0 0.0
        %2374 = vmatpush1.msra.mxu0 0.0
        %2375 = vmatprep.subr.mxu0 0.0
        %2376 = vmatpush1.msra.mxu0 0.0
        %2377 = vmatprep.subr.mxu0 0.0
        %2378 = vmatpush1.msra.mxu0 0.0
        %2379 = vmatprep.subr.mxu0 0.0
        %2380 = vmatpush1.msra.mxu0 0.0
        %2381 = vmatprep.subr.mxu0 0.0
        %2382 = vmatpush1.msra.mxu0 0.0
        %2383 = vmatprep.mubr.f32.mxu0 0.0
        %2384 = vmatmul.mubr.f32.gmra.mrb[0].mxu0 %v2223
        %v2385 = vpop.f32.mrb[0].mxu0
        %v2386 = vadd.f32 0.0, %v2385
        %v2387 = vpop.f32.mrb[0].mxu0
        %2388 = vmatprep.mubr.f32.mxu0 0.0
        %2389 = vmatmul.mubr.f32.gmra.mrb[0].mxu0 %v2226
        %v2390 = vpop.f32.mrb[0].mxu0
        %v2391 = vadd.f32 0.0, %v2390
        %v2392 = vpop.f32.mrb[0].mxu0
        %2393 = vmatprep.mubr.f32.mxu0 0.0
        %2394 = vmatmul.mubr.f32.gmra.mrb[0].mxu0 %v2229
        %v2395 = vpop.f32.mrb[0].mxu0
        %v2396 = vadd.f32 0.0, %v2395
        %v2397 = vpop.f32.mrb[0].mxu0
        %2398 = vmatprep.mubr.f32.mxu0 0.0
        %2399 = vmatmul.mubr.f32.gmra.mrb[0].mxu0 %v2232
        %v2400 = vpop.f32.mrb[0].mxu0
        %v2401 = vadd.f32 0.0, %v2400
        %v2402 = vpop.f32.mrb[0].mxu0
        %2403 = vdwg.mxu0
        %v2404 = vmul.f32 %v2301, 0.001953125
        %v2405 = vmul.f32 %v2306, 0.001953125
        %v2406 = vmul.f32 %v2311, 0.001953125
        %v2407 = vmul.f32 %v2316, 0.001953125
        %v2408 = vmul.f32 %v2386, 0.001953125
        %v2409 = vmul.f32 %v2391, 0.001953125
        %v2410 = vmul.f32 %v2396, 0.001953125
        %v2411 = vmul.f32 %v2401, 0.001953125
        %v2412 = vmul.f32 %v2404, %v2404
        %v2413 = vmul.f32 %v2405, %v2405
        %v2414 = vmul.f32 %v2406, %v2406
        %v2415 = vmul.f32 %v2407, %v2407
        %v2416 = vsub.f32 %v2408, %v2412
        %v2417 = vsub.f32 %v2409, %v2413
        %v2418 = vsub.f32 %v2410, %v2414
        %v2419 = vsub.f32 %v2411, %v2415
        %v2420 = vmax.f32 %v2416, 0.0
        %v2421 = vmax.f32 %v2417, 0.0
        %v2422 = vmax.f32 %v2418, 0.0
        %v2423 = vmax.f32 %v2419, 0.0
        %v2424 = vadd.f32 %v2420, 1e-05
        %v2425 = vadd.f32 %v2421, 1e-05
        %v2426 = vadd.f32 %v2422, 1e-05
        %v2427 = vadd.f32 %v2423, 1e-05
        %v2428 = vrsqrt.pop %v2424
        %v2429 = vrsqrt.pop %v2425
        %v2430 = vrsqrt.pop %v2426
        %v2431 = vrsqrt.pop %v2427
        %v2433 = vsel %vm717, %v2149, 0
        %v2436 = vsel %vm717, %v2150, 0
        %v2439 = vsel %vm717, %v2151, 0
        %v2442 = vsel %vm717, %v2152, 0
        %v2445 = vsel %vm717, %v2153, 0
        %v2448 = vsel %vm717, %v2154, 0
        %v2451 = vsel %vm717, %v2155, 0
        %v2454 = vsel %vm717, %v2156, 0
        %2456 = vmatprep.subr.mxu0 0.0
        %2457 = vmatpush1.msra.mxu0 %v2404
        %2458 = vmatprep.subr.mxu0 0.0
        %2459 = vmatpush1.msra.mxu0 %v2405
        %2460 = vmatprep.subr.mxu0 0.0
        %2461 = vmatpush1.msra.mxu0 %v2406
        %2462 = vmatprep.subr.mxu0 0.0
        %2463 = vmatpush1.msra.mxu0 %v2407
        %2464 = vmatprep.subr.mxu0 0.0
        %2465 = vmatpush1.msra.mxu0 0.0
        %2466 = vmatprep.subr.mxu0 0.0
        %2467 = vmatpush1.msra.mxu0 0.0
        %2468 = vmatprep.subr.mxu0 0.0
        %2469 = vmatpush1.msra.mxu0 0.0
        %2470 = vmatprep.subr.mxu0 0.0
        %2471 = vmatpush1.msra.mxu0 0.0
        %2472 = vmatprep.subr.mxu0 0.0
        %2473 = vmatpush1.msra.mxu0 0.0
        %2474 = vmatprep.subr.mxu0 0.0
        %2475 = vmatpush1.msra.mxu0 0.0
        %2476 = vmatprep.subr.mxu0 0.0
        %2477 = vmatpush1.msra.mxu0 0.0
        %2478 = vmatprep.subr.mxu0 0.0
        %2479 = vmatpush1.msra.mxu0 0.0
        %2480 = vmatprep.subr.mxu0 0.0
        %2481 = vmatpush1.msra.mxu0 0.0
        %2482 = vmatprep.subr.mxu0 0.0
        %2483 = vmatpush1.msra.mxu0 0.0
        %2484 = vmatprep.subr.mxu0 0.0
        %2485 = vmatpush1.msra.mxu0 0.0
        %2486 = vmatprep.subr.mxu0 0.0
        %2487 = vmatpush1.msra.mxu0 0.0
        %2488 = vmatprep.subr.mxu0 0.0
        %2489 = vmatpush1.msra.mxu0 0.0
        %2490 = vmatprep.subr.mxu0 0.0
        %2491 = vmatpush1.msra.mxu0 0.0
        %2492 = vmatprep.subr.mxu0 0.0
        %2493 = vmatpush1.msra.mxu0 0.0
        %2494 = vmatprep.subr.mxu0 0.0
        %2495 = vmatpush1.msra.mxu0 0.0
        %2496 = vmatprep.subr.mxu0 0.0
        %2497 = vmatpush1.msra.mxu0 0.0
        %2498 = vmatprep.subr.mxu0 0.0
        %2499 = vmatpush1.msra.mxu0 0.0
        %2500 = vmatprep.subr.mxu0 0.0
        %2501 = vmatpush1.msra.mxu0 0.0
        %2502 = vmatprep.subr.mxu0 0.0
        %2503 = vmatpush1.msra.mxu0 0.0
        %2504 = vmatprep.subr.mxu0 0.0
        %2505 = vmatpush1.msra.mxu0 0.0
        %2506 = vmatprep.subr.mxu0 0.0
        %2507 = vmatpush1.msra.mxu0 0.0
        %2508 = vmatprep.subr.mxu0 0.0
        %2509 = vmatpush1.msra.mxu0 0.0
        %2510 = vmatprep.subr.mxu0 0.0
        %2511 = vmatpush1.msra.mxu0 0.0
        %2512 = vmatprep.subr.mxu0 0.0
        %2513 = vmatpush1.msra.mxu0 0.0
        %2514 = vmatprep.subr.mxu0 0.0
        %2515 = vmatpush1.msra.mxu0 0.0
        %2516 = vmatprep.subr.mxu0 0.0
        %2517 = vmatpush1.msra.mxu0 0.0
        %2518 = vmatprep.subr.mxu0 0.0
        %2519 = vmatpush1.msra.mxu0 0.0
        %2520 = vmatprep.mubr.f32.mxu0 0.0
        %2521 = vmatmul.mubr.f32.gmra.mrb[0].mxu0 %v2433
        %v2522 = vpop.f32.mrb[0].mxu0
        %v2523 = vadd.f32 0.0, %v2522
        %v2524 = vpop.f32.mrb[0].mxu0
        %2525 = vmatprep.mubr.f32.mxu0 0.0
        %2526 = vmatmul.mubr.f32.gmra.mrb[0].mxu0 %v2436
        %v2527 = vpop.f32.mrb[0].mxu0
        %v2528 = vadd.f32 0.0, %v2527
        %v2529 = vpop.f32.mrb[0].mxu0
        %2530 = vmatprep.mubr.f32.mxu0 0.0
        %2531 = vmatmul.mubr.f32.gmra.mrb[0].mxu0 %v2439
        %v2532 = vpop.f32.mrb[0].mxu0
        %v2533 = vadd.f32 0.0, %v2532
        %v2534 = vpop.f32.mrb[0].mxu0
        %2535 = vmatprep.mubr.f32.mxu0 0.0
        %2536 = vmatmul.mubr.f32.gmra.mrb[0].mxu0 %v2442
        %v2537 = vpop.f32.mrb[0].mxu0
        %v2538 = vadd.f32 0.0, %v2537
        %v2539 = vpop.f32.mrb[0].mxu0
        %2540 = vmatprep.mubr.f32.mxu0 0.0
        %2541 = vmatmul.mubr.f32.gmra.mrb[0].mxu0 %v2445
        %v2542 = vpop.f32.mrb[0].mxu0
        %v2543 = vadd.f32 0.0, %v2542
        %v2544 = vpop.f32.mrb[0].mxu0
        %2545 = vmatprep.mubr.f32.mxu0 0.0
        %2546 = vmatmul.mubr.f32.gmra.mrb[0].mxu0 %v2448
        %v2547 = vpop.f32.mrb[0].mxu0
        %v2548 = vadd.f32 0.0, %v2547
        %v2549 = vpop.f32.mrb[0].mxu0
        %2550 = vmatprep.mubr.f32.mxu0 0.0
        %2551 = vmatmul.mubr.f32.gmra.mrb[0].mxu0 %v2451
        %v2552 = vpop.f32.mrb[0].mxu0
        %v2553 = vadd.f32 0.0, %v2552
        %v2554 = vpop.f32.mrb[0].mxu0
        %2555 = vmatprep.mubr.f32.mxu0 0.0
        %2556 = vmatmul.mubr.f32.gmra.mrb[0].mxu0 %v2454
        %v2557 = vpop.f32.mrb[0].mxu0
        %v2558 = vadd.f32 0.0, %v2557
        %v2559 = vpop.f32.mrb[0].mxu0
        %2560 = vdwg.mxu0
        %2561 = vmatprep.subr.mxu0 0.0
        %2562 = vmatpush1.msra.mxu0 %v2428
        %2563 = vmatprep.subr.mxu0 0.0
        %2564 = vmatpush1.msra.mxu0 %v2429
        %2565 = vmatprep.subr.mxu0 0.0
        %2566 = vmatpush1.msra.mxu0 %v2430
        %2567 = vmatprep.subr.mxu0 0.0
        %2568 = vmatpush1.msra.mxu0 %v2431
        %2569 = vmatprep.subr.mxu0 0.0
        %2570 = vmatpush1.msra.mxu0 0.0
        %2571 = vmatprep.subr.mxu0 0.0
        %2572 = vmatpush1.msra.mxu0 0.0
        %2573 = vmatprep.subr.mxu0 0.0
        %2574 = vmatpush1.msra.mxu0 0.0
        %2575 = vmatprep.subr.mxu0 0.0
        %2576 = vmatpush1.msra.mxu0 0.0
        %2577 = vmatprep.subr.mxu0 0.0
        %2578 = vmatpush1.msra.mxu0 0.0
        %2579 = vmatprep.subr.mxu0 0.0
        %2580 = vmatpush1.msra.mxu0 0.0
        %2581 = vmatprep.subr.mxu0 0.0
        %2582 = vmatpush1.msra.mxu0 0.0
        %2583 = vmatprep.subr.mxu0 0.0
        %2584 = vmatpush1.msra.mxu0 0.0
        %2585 = vmatprep.subr.mxu0 0.0
        %2586 = vmatpush1.msra.mxu0 0.0
        %2587 = vmatprep.subr.mxu0 0.0
        %2588 = vmatpush1.msra.mxu0 0.0
        %2589 = vmatprep.subr.mxu0 0.0
        %2590 = vmatpush1.msra.mxu0 0.0
        %2591 = vmatprep.subr.mxu0 0.0
        %2592 = vmatpush1.msra.mxu0 0.0
        %2593 = vmatprep.subr.mxu0 0.0
        %2594 = vmatpush1.msra.mxu0 0.0
        %2595 = vmatprep.subr.mxu0 0.0
        %2596 = vmatpush1.msra.mxu0 0.0
        %2597 = vmatprep.subr.mxu0 0.0
        %2598 = vmatpush1.msra.mxu0 0.0
        %2599 = vmatprep.subr.mxu0 0.0
        %2600 = vmatpush1.msra.mxu0 0.0
        %2601 = vmatprep.subr.mxu0 0.0
        %2602 = vmatpush1.msra.mxu0 0.0
        %2603 = vmatprep.subr.mxu0 0.0
        %2604 = vmatpush1.msra.mxu0 0.0
        %2605 = vmatprep.subr.mxu0 0.0
        %2606 = vmatpush1.msra.mxu0 0.0
        %2607 = vmatprep.subr.mxu0 0.0
        %2608 = vmatpush1.msra.mxu0 0.0
        %2609 = vmatprep.subr.mxu0 0.0
        %2610 = vmatpush1.msra.mxu0 0.0
        %2611 = vmatprep.subr.mxu0 0.0
        %2612 = vmatpush1.msra.mxu0 0.0
        %2613 = vmatprep.subr.mxu0 0.0
        %2614 = vmatpush1.msra.mxu0 0.0
        %2615 = vmatprep.subr.mxu0 0.0
        %2616 = vmatpush1.msra.mxu0 0.0
        %2617 = vmatprep.subr.mxu0 0.0
        %2618 = vmatpush1.msra.mxu0 0.0
        %2619 = vmatprep.subr.mxu0 0.0
        %2620 = vmatpush1.msra.mxu0 0.0
        %2621 = vmatprep.subr.mxu0 0.0
        %2622 = vmatpush1.msra.mxu0 0.0
        %2623 = vmatprep.subr.mxu0 0.0
        %2624 = vmatpush1.msra.mxu0 0.0
        %2625 = vmatprep.mubr.f32.mxu0 0.0
        %2626 = vmatmul.mubr.f32.gmra.mrb[0].mxu0 %v2433
        %v2627 = vpop.f32.mrb[0].mxu0
        %v2628 = vadd.f32 0.0, %v2627
        %v2629 = vpop.f32.mrb[0].mxu0
        %2630 = vmatprep.mubr.f32.mxu0 0.0
        %2631 = vmatmul.mubr.f32.gmra.mrb[0].mxu0 %v2436
        %v2632 = vpop.f32.mrb[0].mxu0
        %v2633 = vadd.f32 0.0, %v2632
        %v2634 = vpop.f32.mrb[0].mxu0
        %2635 = vmatprep.mubr.f32.mxu0 0.0
        %2636 = vmatmul.mubr.f32.gmra.mrb[0].mxu0 %v2439
        %v2637 = vpop.f32.mrb[0].mxu0
        %v2638 = vadd.f32 0.0, %v2637
        %v2639 = vpop.f32.mrb[0].mxu0
        %2640 = vmatprep.mubr.f32.mxu0 0.0
        %2641 = vmatmul.mubr.f32.gmra.mrb[0].mxu0 %v2442
        %v2642 = vpop.f32.mrb[0].mxu0
        %v2643 = vadd.f32 0.0, %v2642
        %v2644 = vpop.f32.mrb[0].mxu0
        %2645 = vmatprep.mubr.f32.mxu0 0.0
        %2646 = vmatmul.mubr.f32.gmra.mrb[0].mxu0 %v2445
        %v2647 = vpop.f32.mrb[0].mxu0
        %v2648 = vadd.f32 0.0, %v2647
        %v2649 = vpop.f32.mrb[0].mxu0
        %2650 = vmatprep.mubr.f32.mxu0 0.0
        %2651 = vmatmul.mubr.f32.gmra.mrb[0].mxu0 %v2448
        %v2652 = vpop.f32.mrb[0].mxu0
        %v2653 = vadd.f32 0.0, %v2652
        %v2654 = vpop.f32.mrb[0].mxu0
        %2655 = vmatprep.mubr.f32.mxu0 0.0
        %2656 = vmatmul.mubr.f32.gmra.mrb[0].mxu0 %v2451
        %v2657 = vpop.f32.mrb[0].mxu0
        %v2658 = vadd.f32 0.0, %v2657
        %v2659 = vpop.f32.mrb[0].mxu0
        %2660 = vmatprep.mubr.f32.mxu0 0.0
        %2661 = vmatmul.mubr.f32.gmra.mrb[0].mxu0 %v2454
        %v2662 = vpop.f32.mrb[0].mxu0
        %v2663 = vadd.f32 0.0, %v2662
        %v2664 = vpop.f32.mrb[0].mxu0
        %2665 = vdwg.mxu0
        %v2666 = vmul.f32 %v2628, %v2067
        %v2667 = vmul.f32 %v2633, %v2068
        %v2668 = vmul.f32 %v2638, %v2069
        %v2669 = vmul.f32 %v2643, %v2070
        %v2670 = vmul.f32 %v2648, %v2071
        %v2671 = vmul.f32 %v2653, %v2072
        %v2672 = vmul.f32 %v2658, %v2073
        %v2673 = vmul.f32 %v2663, %v2074
        %v2674 = vmul.f32 %v2523, %v2666
        %v2675 = vmul.f32 %v2528, %v2667
        %v2676 = vmul.f32 %v2533, %v2668
        %v2677 = vmul.f32 %v2538, %v2669
        %v2678 = vmul.f32 %v2543, %v2670
        %v2679 = vmul.f32 %v2548, %v2671
        %v2680 = vmul.f32 %v2553, %v2672
        %v2681 = vmul.f32 %v2558, %v2673
        %v2682 = vsub.f32 %v2075, %v2674
        %v2683 = vsub.f32 %v2076, %v2675
        %v2684 = vsub.f32 %v2077, %v2676
        %v2685 = vsub.f32 %v2078, %v2677
        %v2686 = vsub.f32 %v2079, %v2678
        %v2687 = vsub.f32 %v2080, %v2679
        %v2688 = vsub.f32 %v2081, %v2680
        %v2689 = vsub.f32 %v2082, %v2681
        %2691 = vset.pattern.permute.xlu0 0
        %2692 = vperm.xlu0 %2691, %v2666
        %v2693 = vpop.permute.xlu0 %2692
        %2696 = vset.pattern.permute.xlu0 0
        %2697 = vperm.xlu0 %2696, %v2667
        %v2698 = vpop.permute.xlu0 %2697
        %2701 = vset.pattern.permute.xlu0 0
        %2702 = vperm.xlu0 %2701, %v2668
        %v2703 = vpop.permute.xlu0 %2702
        %2706 = vset.pattern.permute.xlu0 0
        %2707 = vperm.xlu0 %2706, %v2669
        %v2708 = vpop.permute.xlu0 %2707
        %2711 = vset.pattern.permute.xlu0 0
        %2712 = vperm.xlu0 %2711, %v2670
        %v2713 = vpop.permute.xlu0 %2712
        %2716 = vset.pattern.permute.xlu0 0
        %2717 = vperm.xlu0 %2716, %v2671
        %v2718 = vpop.permute.xlu0 %2717
        %2721 = vset.pattern.permute.xlu0 0
        %2722 = vperm.xlu0 %2721, %v2672
        %v2723 = vpop.permute.xlu0 %2722
        %2726 = vset.pattern.permute.xlu0 0
        %2727 = vperm.xlu0 %2726, %v2673
        %v2728 = vpop.permute.xlu0 %2727
        %v2730 = vmul.f32 %v2021, %v2693
        %v2731 = vmul.f32 %v2023, %v2693
        %v2732 = vmul.f32 %v2027, %v2698
        %v2733 = vmul.f32 %v2029, %v2698
        %v2734 = vmul.f32 %v2033, %v2703
        %v2735 = vmul.f32 %v2035, %v2703
        %v2736 = vmul.f32 %v2039, %v2708
        %v2737 = vmul.f32 %v2041, %v2708
        %v2738 = vmul.f32 %v2045, %v2713
        %v2739 = vmul.f32 %v2047, %v2713
        %v2740 = vmul.f32 %v2051, %v2718
        %v2741 = vmul.f32 %v2053, %v2718
        %v2742 = vmul.f32 %v2057, %v2723
        %v2743 = vmul.f32 %v2059, %v2723
        %v2744 = vmul.f32 %v2063, %v2728
        %v2745 = vmul.f32 %v2065, %v2728
        %2747 = vset.pattern.permute.xlu0 0
        %2748 = vperm.xlu0 %2747, %v2682
        %v2749 = vpop.permute.xlu0 %2748
        %2752 = vset.pattern.permute.xlu0 0
        %2753 = vperm.xlu0 %2752, %v2683
        %v2754 = vpop.permute.xlu0 %2753
        %2757 = vset.pattern.permute.xlu0 0
        %2758 = vperm.xlu0 %2757, %v2684
        %v2759 = vpop.permute.xlu0 %2758
        %2762 = vset.pattern.permute.xlu0 0
        %2763 = vperm.xlu0 %2762, %v2685
        %v2764 = vpop.permute.xlu0 %2763
        %2767 = vset.pattern.permute.xlu0 0
        %2768 = vperm.xlu0 %2767, %v2686
        %v2769 = vpop.permute.xlu0 %2768
        %2772 = vset.pattern.permute.xlu0 0
        %2773 = vperm.xlu0 %2772, %v2687
        %v2774 = vpop.permute.xlu0 %2773
        %2777 = vset.pattern.permute.xlu0 0
        %2778 = vperm.xlu0 %2777, %v2688
        %v2779 = vpop.permute.xlu0 %2778
        %2782 = vset.pattern.permute.xlu0 0
        %2783 = vperm.xlu0 %2782, %v2689
        %v2784 = vpop.permute.xlu0 %2783
        %v2786 = vadd.f32 %v2730, %v2749
        %v2787 = vadd.f32 %v2731, %v2749
        %v2788 = vadd.f32 %v2732, %v2754
        %v2789 = vadd.f32 %v2733, %v2754
        %v2790 = vadd.f32 %v2734, %v2759
        %v2791 = vadd.f32 %v2735, %v2759
        %v2792 = vadd.f32 %v2736, %v2764
        %v2793 = vadd.f32 %v2737, %v2764
        %v2794 = vadd.f32 %v2738, %v2769
        %v2795 = vadd.f32 %v2739, %v2769
        %v2796 = vadd.f32 %v2740, %v2774
        %v2797 = vadd.f32 %v2741, %v2774
        %v2798 = vadd.f32 %v2742, %v2779
        %v2799 = vadd.f32 %v2743, %v2779
        %v2800 = vadd.f32 %v2744, %v2784
        %v2801 = vadd.f32 %v2745, %v2784
        %v2802 = vsub.f32 0.0, %v2786
        %v2803 = vsub.f32 0.0, %v2787
        %v2804 = vsub.f32 0.0, %v2788
        %v2805 = vsub.f32 0.0, %v2789
        %v2806 = vsub.f32 0.0, %v2790
        %v2807 = vsub.f32 0.0, %v2791
        %v2808 = vsub.f32 0.0, %v2792
        %v2809 = vsub.f32 0.0, %v2793
        %v2810 = vsub.f32 0.0, %v2794
        %v2811 = vsub.f32 0.0, %v2795
        %v2812 = vsub.f32 0.0, %v2796
        %v2813 = vsub.f32 0.0, %v2797
        %v2814 = vsub.f32 0.0, %v2798
        %v2815 = vsub.f32 0.0, %v2799
        %v2816 = vsub.f32 0.0, %v2800
        %v2817 = vsub.f32 0.0, %v2801
        %v2818 = vmul.f32 %v2802, 1.442695
        %v2819 = vpow.pop %v2818
        %v2820 = vmul.f32 %v2803, 1.442695
        %v2821 = vpow.pop %v2820
        %v2822 = vmul.f32 %v2804, 1.442695
        %v2823 = vpow.pop %v2822
        %v2824 = vmul.f32 %v2805, 1.442695
        %v2825 = vpow.pop %v2824
        %v2826 = vmul.f32 %v2806, 1.442695
        %v2827 = vpow.pop %v2826
        %v2828 = vmul.f32 %v2807, 1.442695
        %v2829 = vpow.pop %v2828
        %v2830 = vmul.f32 %v2808, 1.442695
        %v2831 = vpow.pop %v2830
        %v2832 = vmul.f32 %v2809, 1.442695
        %v2833 = vpow.pop %v2832
        %v2834 = vmul.f32 %v2810, 1.442695
        %v2835 = vpow.pop %v2834
        %v2836 = vmul.f32 %v2811, 1.442695
        %v2837 = vpow.pop %v2836
        %v2838 = vmul.f32 %v2812, 1.442695
        %v2839 = vpow.pop %v2838
        %v2840 = vmul.f32 %v2813, 1.442695
        %v2841 = vpow.pop %v2840
        %v2842 = vmul.f32 %v2814, 1.442695
        %v2843 = vpow.pop %v2842
        %v2844 = vmul.f32 %v2815, 1.442695
        %v2845 = vpow.pop %v2844
        %v2846 = vmul.f32 %v2816, 1.442695
        %v2847 = vpow.pop %v2846
        %v2848 = vmul.f32 %v2817, 1.442695
        %v2849 = vpow.pop %v2848
        %v2850 = vadd.f32 %v2819, 1.0
        %v2851 = vadd.f32 %v2821, 1.0
        %v2852 = vadd.f32 %v2823, 1.0
        %v2853 = vadd.f32 %v2825, 1.0
        %v2854 = vadd.f32 %v2827, 1.0
        %v2855 = vadd.f32 %v2829, 1.0
        %v2856 = vadd.f32 %v2831, 1.0
        %v2857 = vadd.f32 %v2833, 1.0
        %v2858 = vadd.f32 %v2835, 1.0
        %v2859 = vadd.f32 %v2837, 1.0
        %v2860 = vadd.f32 %v2839, 1.0
        %v2861 = vadd.f32 %v2841, 1.0
        %v2862 = vadd.f32 %v2843, 1.0
        %v2863 = vadd.f32 %v2845, 1.0
        %v2864 = vadd.f32 %v2847, 1.0
        %v2865 = vadd.f32 %v2849, 1.0
        %v2866 = vrcp.pop %v2850
        %v2867 = vmul.f32 1.0, %v2866
        %v2868 = vrcp.pop %v2851
        %v2869 = vmul.f32 1.0, %v2868
        %v2870 = vrcp.pop %v2852
        %v2871 = vmul.f32 1.0, %v2870
        %v2872 = vrcp.pop %v2853
        %v2873 = vmul.f32 1.0, %v2872
        %v2874 = vrcp.pop %v2854
        %v2875 = vmul.f32 1.0, %v2874
        %v2876 = vrcp.pop %v2855
        %v2877 = vmul.f32 1.0, %v2876
        %v2878 = vrcp.pop %v2856
        %v2879 = vmul.f32 1.0, %v2878
        %v2880 = vrcp.pop %v2857
        %v2881 = vmul.f32 1.0, %v2880
        %v2882 = vrcp.pop %v2858
        %v2883 = vmul.f32 1.0, %v2882
        %v2884 = vrcp.pop %v2859
        %v2885 = vmul.f32 1.0, %v2884
        %v2886 = vrcp.pop %v2860
        %v2887 = vmul.f32 1.0, %v2886
        %v2888 = vrcp.pop %v2861
        %v2889 = vmul.f32 1.0, %v2888
        %v2890 = vrcp.pop %v2862
        %v2891 = vmul.f32 1.0, %v2890
        %v2892 = vrcp.pop %v2863
        %v2893 = vmul.f32 1.0, %v2892
        %v2894 = vrcp.pop %v2864
        %v2895 = vmul.f32 1.0, %v2894
        %v2896 = vrcp.pop %v2865
        %v2897 = vmul.f32 1.0, %v2896
        %v2898 = vmul.f32 %v2786, %v2867
        %v2899 = vmul.f32 %v2787, %v2869
        %v2900 = vmul.f32 %v2788, %v2871
        %v2901 = vmul.f32 %v2789, %v2873
        %v2902 = vmul.f32 %v2790, %v2875
        %v2903 = vmul.f32 %v2791, %v2877
        %v2904 = vmul.f32 %v2792, %v2879
        %v2905 = vmul.f32 %v2793, %v2881
        %v2906 = vmul.f32 %v2794, %v2883
        %v2907 = vmul.f32 %v2795, %v2885
        %v2908 = vmul.f32 %v2796, %v2887
        %v2909 = vmul.f32 %v2797, %v2889
        %v2910 = vmul.f32 %v2798, %v2891
        %v2911 = vmul.f32 %v2799, %v2893
        %v2912 = vmul.f32 %v2800, %v2895
        %v2913 = vmul.f32 %v2801, %v2897
        %2914 = vrot.lane.b32.xlu0 %v2898, 17
        %v2915 = vpop.permute.xlu0 %2914
        %2916 = vrot.lane.b32.xlu0 %v2900, 17
        %v2917 = vpop.permute.xlu0 %2916
        %2918 = vrot.lane.b32.xlu0 %v2902, 17
        %v2919 = vpop.permute.xlu0 %2918
        %2920 = vrot.lane.b32.xlu0 %v2904, 17
        %v2921 = vpop.permute.xlu0 %2920
        %2922 = vrot.lane.b32.xlu0 %v2906, 17
        %v2923 = vpop.permute.xlu0 %2922
        %2924 = vrot.lane.b32.xlu0 %v2908, 17
        %v2925 = vpop.permute.xlu0 %2924
        %2926 = vrot.lane.b32.xlu0 %v2910, 17
        %v2927 = vpop.permute.xlu0 %2926
        %2928 = vrot.lane.b32.xlu0 %v2912, 17
        %v2929 = vpop.permute.xlu0 %2928
        %2930 = vrot.lane.b32.xlu0 %v2899, 17
        %v2931 = vpop.permute.xlu0 %2930
        %2932 = vrot.lane.b32.xlu0 %v2901, 17
        %v2933 = vpop.permute.xlu0 %2932
        %2934 = vrot.lane.b32.xlu0 %v2903, 17
        %v2935 = vpop.permute.xlu0 %2934
        %2936 = vrot.lane.b32.xlu0 %v2905, 17
        %v2937 = vpop.permute.xlu0 %2936
        %2938 = vrot.lane.b32.xlu0 %v2907, 17
        %v2939 = vpop.permute.xlu0 %2938
        %2940 = vrot.lane.b32.xlu0 %v2909, 17
        %v2941 = vpop.permute.xlu0 %2940
        %2942 = vrot.lane.b32.xlu0 %v2911, 17
        %v2943 = vpop.permute.xlu0 %2942
        %2944 = vrot.lane.b32.xlu0 %v2913, 17
        %v2945 = vpop.permute.xlu0 %2944
        %v2946 = vsel %vm1250, %v2915, %v2931
        %v2947 = vsel %vm1250, %v2917, %v2933
        %v2948 = vsel %vm1250, %v2919, %v2935
        %v2949 = vsel %vm1250, %v2921, %v2937
        %v2950 = vsel %vm1250, %v2923, %v2939
        %v2951 = vsel %vm1250, %v2925, %v2941
        %v2952 = vsel %vm1250, %v2927, %v2943
        %v2953 = vsel %vm1250, %v2929, %v2945
        %v2954 = vsel %vm1250, %v2931, %v2915
        %v2955 = vsel %vm1250, %v2933, %v2917
        %v2956 = vsel %vm1250, %v2935, %v2919
        %v2957 = vsel %vm1250, %v2937, %v2921
        %v2958 = vsel %vm1250, %v2939, %v2923
        %v2959 = vsel %vm1250, %v2941, %v2925
        %v2960 = vsel %vm1250, %v2943, %v2927
        %v2961 = vsel %vm1250, %v2945, %v2929
        %v2962 = vld [vmem:[#allocation19] ss:$8 sm:$0x3]
        %v2964 = vlaneseq
        %v2965 = vshrl.u32 %v2964, 7
        %v2966 = vsub.s32 0, %v2965
        %v2967 = vrot.slane %v2962, %v2966
        %v2968 = vlaneseq
        %v2969 = vshrl.u32 %v2968, 7
        %v2970 = vsub.s32 1, %v2969
        %v2971 = vrot.slane %v2962, %v2970
        %v2974 = vmul.f32 %v2954, %v2967
        %v2975 = vmul.f32 %v2946, %v2971
        %v2976 = vmul.f32 %v2955, %v2967
        %v2977 = vmul.f32 %v2947, %v2971
        %v2978 = vmul.f32 %v2956, %v2967
        %v2979 = vmul.f32 %v2948, %v2971
        %v2980 = vmul.f32 %v2957, %v2967
        %v2981 = vmul.f32 %v2949, %v2971
        %v2982 = vmul.f32 %v2958, %v2967
        %v2983 = vmul.f32 %v2950, %v2971
        %v2984 = vmul.f32 %v2959, %v2967
        %v2985 = vmul.f32 %v2951, %v2971
        %v2986 = vmul.f32 %v2960, %v2967
        %v2987 = vmul.f32 %v2952, %v2971
        %v2988 = vmul.f32 %v2961, %v2967
        %v2989 = vmul.f32 %v2953, %v2971
        %2990 = vst [vmem:[#allocation3] sm:$0xff] %v2974
        %2991 = vst [vmem:[#allocation3 + $0x8] sm:$0xff] %v2975
        %2992 = vst [vmem:[#allocation3 + $0x10] sm:$0xff] %v2976
        %2993 = vst [vmem:[#allocation3 + $0x18] sm:$0xff] %v2977
        %2994 = vst [vmem:[#allocation3 + $0x20] sm:$0xff] %v2978
        %2995 = vst [vmem:[#allocation3 + $0x28] sm:$0xff] %v2979
        %2996 = vst [vmem:[#allocation3 + $0x30] sm:$0xff] %v2980
        %2997 = vst [vmem:[#allocation3 + $0x38] sm:$0xff] %v2981
        %2998 = vst [vmem:[#allocation3 + $0x40] sm:$0xff] %v2982
        %2999 = vst [vmem:[#allocation3 + $0x48] sm:$0xff] %v2983
        %3000 = vst [vmem:[#allocation3 + $0x50] sm:$0xff] %v2984
        %3001 = vst [vmem:[#allocation3 + $0x58] sm:$0xff] %v2985
        %3002 = vst [vmem:[#allocation3 + $0x60] sm:$0xff] %v2986
        %3003 = vst [vmem:[#allocation3 + $0x68] sm:$0xff] %v2987
        %3004 = vst [vmem:[#allocation3 + $0x70] sm:$0xff] %v2988
        %3005 = vst [vmem:[#allocation3 + $0x78] sm:$0xff] %v2989
        %3006 = vrot.lane.b32.xlu0 %v2898, 16
        %v3007 = vpop.permute.xlu0 %3006
        %3008 = vrot.lane.b32.xlu0 %v2900, 16
        %v3009 = vpop.permute.xlu0 %3008
        %3010 = vrot.lane.b32.xlu0 %v2902, 16
        %v3011 = vpop.permute.xlu0 %3010
        %3012 = vrot.lane.b32.xlu0 %v2904, 16
        %v3013 = vpop.permute.xlu0 %3012
        %3014 = vrot.lane.b32.xlu0 %v2906, 16
        %v3015 = vpop.permute.xlu0 %3014
        %3016 = vrot.lane.b32.xlu0 %v2908, 16
        %v3017 = vpop.permute.xlu0 %3016
        %3018 = vrot.lane.b32.xlu0 %v2910, 16
        %v3019 = vpop.permute.xlu0 %3018
        %3020 = vrot.lane.b32.xlu0 %v2912, 16
        %v3021 = vpop.permute.xlu0 %3020
        %3022 = vrot.lane.b32.xlu0 %v2899, 16
        %v3023 = vpop.permute.xlu0 %3022
        %3024 = vrot.lane.b32.xlu0 %v2901, 16
        %v3025 = vpop.permute.xlu0 %3024
        %3026 = vrot.lane.b32.xlu0 %v2903, 16
        %v3027 = vpop.permute.xlu0 %3026
        %3028 = vrot.lane.b32.xlu0 %v2905, 16
        %v3029 = vpop.permute.xlu0 %3028
        %3030 = vrot.lane.b32.xlu0 %v2907, 16
        %v3031 = vpop.permute.xlu0 %3030
        %3032 = vrot.lane.b32.xlu0 %v2909, 16
        %v3033 = vpop.permute.xlu0 %3032
        %3034 = vrot.lane.b32.xlu0 %v2911, 16
        %v3035 = vpop.permute.xlu0 %3034
        %3036 = vrot.lane.b32.xlu0 %v2913, 16
        %v3037 = vpop.permute.xlu0 %3036
        %v3038 = vsel %vm1303, %v3007, %v3023
        %v3039 = vsel %vm1303, %v3009, %v3025
        %v3040 = vsel %vm1303, %v3011, %v3027
        %v3041 = vsel %vm1303, %v3013, %v3029
        %v3042 = vsel %vm1303, %v3015, %v3031
        %v3043 = vsel %vm1303, %v3017, %v3033
        %v3044 = vsel %vm1303, %v3019, %v3035
        %v3045 = vsel %vm1303, %v3021, %v3037
        %v3046 = vsel %vm1303, %v3023, %v3007
        %v3047 = vsel %vm1303, %v3025, %v3009
        %v3048 = vsel %vm1303, %v3027, %v3011
        %v3049 = vsel %vm1303, %v3029, %v3013
        %v3050 = vsel %vm1303, %v3031, %v3015
        %v3051 = vsel %vm1303, %v3033, %v3017
        %v3052 = vsel %vm1303, %v3035, %v3019
        %v3053 = vsel %vm1303, %v3037, %v3021
        %v3054 = vld [vmem:[%s1312] ss:$8 sm:$0x3]
        %v3056 = vlaneseq
        %v3057 = vshrl.u32 %v3056, 7
        %v3058 = vsub.s32 0, %v3057
        %v3059 = vrot.slane %v3054, %v3058
        %v3060 = vlaneseq
        %v3061 = vshrl.u32 %v3060, 7
        %v3062 = vsub.s32 1, %v3061
        %v3063 = vrot.slane %v3054, %v3062
        %v3066 = vmul.f32 %v3046, %v3059
        %v3067 = vmul.f32 %v3038, %v3063
        %v3068 = vmul.f32 %v3047, %v3059
        %v3069 = vmul.f32 %v3039, %v3063
        %v3070 = vmul.f32 %v3048, %v3059
        %v3071 = vmul.f32 %v3040, %v3063
        %v3072 = vmul.f32 %v3049, %v3059
        %v3073 = vmul.f32 %v3041, %v3063
        %v3074 = vmul.f32 %v3050, %v3059
        %v3075 = vmul.f32 %v3042, %v3063
        %v3076 = vmul.f32 %v3051, %v3059
        %v3077 = vmul.f32 %v3043, %v3063
        %v3078 = vmul.f32 %v3052, %v3059
        %v3079 = vmul.f32 %v3044, %v3063
        %v3080 = vmul.f32 %v3053, %v3059
        %v3081 = vmul.f32 %v3045, %v3063
        %3082 = vst [vmem:[#allocation3 + $0x80] sm:$0xff] %v3066
        %3083 = vst [vmem:[#allocation3 + $0x88] sm:$0xff] %v3067
        %3084 = vst [vmem:[#allocation3 + $0x90] sm:$0xff] %v3068
        %3085 = vst [vmem:[#allocation3 + $0x98] sm:$0xff] %v3069
        %3086 = vst [vmem:[#allocation3 + $0xa0] sm:$0xff] %v3070
        %3087 = vst [vmem:[#allocation3 + $0xa8] sm:$0xff] %v3071
        %3088 = vst [vmem:[#allocation3 + $0xb0] sm:$0xff] %v3072
        %3089 = vst [vmem:[#allocation3 + $0xb8] sm:$0xff] %v3073
        %3090 = vst [vmem:[#allocation3 + $0xc0] sm:$0xff] %v3074
        %3091 = vst [vmem:[#allocation3 + $0xc8] sm:$0xff] %v3075
        %3092 = vst [vmem:[#allocation3 + $0xd0] sm:$0xff] %v3076
        %3093 = vst [vmem:[#allocation3 + $0xd8] sm:$0xff] %v3077
        %3094 = vst [vmem:[#allocation3 + $0xe0] sm:$0xff] %v3078
        %3095 = vst [vmem:[#allocation3 + $0xe8] sm:$0xff] %v3079
        %3096 = vst [vmem:[#allocation3 + $0xf0] sm:$0xff] %v3080
        %3097 = vst [vmem:[#allocation3 + $0xf8] sm:$0xff] %v3081
        %3098 = vrot.lane.b32.xlu0 %v2898, 15
        %v3099 = vpop.permute.xlu0 %3098
        %3100 = vrot.lane.b32.xlu0 %v2900, 15
        %v3101 = vpop.permute.xlu0 %3100
        %3102 = vrot.lane.b32.xlu0 %v2902, 15
        %v3103 = vpop.permute.xlu0 %3102
        %3104 = vrot.lane.b32.xlu0 %v2904, 15
        %v3105 = vpop.permute.xlu0 %3104
        %3106 = vrot.lane.b32.xlu0 %v2906, 15
        %v3107 = vpop.permute.xlu0 %3106
        %3108 = vrot.lane.b32.xlu0 %v2908, 15
        %v3109 = vpop.permute.xlu0 %3108
        %3110 = vrot.lane.b32.xlu0 %v2910, 15
        %v3111 = vpop.permute.xlu0 %3110
        %3112 = vrot.lane.b32.xlu0 %v2912, 15
        %v3113 = vpop.permute.xlu0 %3112
        %3114 = vrot.lane.b32.xlu0 %v2899, 15
        %v3115 = vpop.permute.xlu0 %3114
        %3116 = vrot.lane.b32.xlu0 %v2901, 15
        %v3117 = vpop.permute.xlu0 %3116
        %3118 = vrot.lane.b32.xlu0 %v2903, 15
        %v3119 = vpop.permute.xlu0 %3118
        %3120 = vrot.lane.b32.xlu0 %v2905, 15
        %v3121 = vpop.permute.xlu0 %3120
        %3122 = vrot.lane.b32.xlu0 %v2907, 15
        %v3123 = vpop.permute.xlu0 %3122
        %3124 = vrot.lane.b32.xlu0 %v2909, 15
        %v3125 = vpop.permute.xlu0 %3124
        %3126 = vrot.lane.b32.xlu0 %v2911, 15
        %v3127 = vpop.permute.xlu0 %3126
        %3128 = vrot.lane.b32.xlu0 %v2913, 15
        %v3129 = vpop.permute.xlu0 %3128
        %v3130 = vsel %vm1357, %v3099, %v3115
        %v3131 = vsel %vm1357, %v3101, %v3117
        %v3132 = vsel %vm1357, %v3103, %v3119
        %v3133 = vsel %vm1357, %v3105, %v3121
        %v3134 = vsel %vm1357, %v3107, %v3123
        %v3135 = vsel %vm1357, %v3109, %v3125
        %v3136 = vsel %vm1357, %v3111, %v3127
        %v3137 = vsel %vm1357, %v3113, %v3129
        %v3138 = vsel %vm1357, %v3115, %v3099
        %v3139 = vsel %vm1357, %v3117, %v3101
        %v3140 = vsel %vm1357, %v3119, %v3103
        %v3141 = vsel %vm1357, %v3121, %v3105
        %v3142 = vsel %vm1357, %v3123, %v3107
        %v3143 = vsel %vm1357, %v3125, %v3109
        %v3144 = vsel %vm1357, %v3127, %v3111
        %v3145 = vsel %vm1357, %v3129, %v3113
        %v3146 = vld [vmem:[%s1366] ss:$8 sm:$0x3]
        %v3148 = vlaneseq
        %v3149 = vshrl.u32 %v3148, 7
        %v3150 = vsub.s32 0, %v3149
        %v3151 = vrot.slane %v3146, %v3150
        %v3152 = vlaneseq
        %v3153 = vshrl.u32 %v3152, 7
        %v3154 = vsub.s32 1, %v3153
        %v3155 = vrot.slane %v3146, %v3154
        %v3158 = vmul.f32 %v3138, %v3151
        %v3159 = vmul.f32 %v3130, %v3155
        %v3160 = vmul.f32 %v3139, %v3151
        %v3161 = vmul.f32 %v3131, %v3155
        %v3162 = vmul.f32 %v3140, %v3151
        %v3163 = vmul.f32 %v3132, %v3155
        %v3164 = vmul.f32 %v3141, %v3151
        %v3165 = vmul.f32 %v3133, %v3155
        %v3166 = vmul.f32 %v3142, %v3151
        %v3167 = vmul.f32 %v3134, %v3155
        %v3168 = vmul.f32 %v3143, %v3151
        %v3169 = vmul.f32 %v3135, %v3155
        %v3170 = vmul.f32 %v3144, %v3151
        %v3171 = vmul.f32 %v3136, %v3155
        %v3172 = vmul.f32 %v3145, %v3151
        %v3173 = vmul.f32 %v3137, %v3155
        %3174 = vst [vmem:[#allocation3 + $0x100] sm:$0xff] %v3158
        %3175 = vst [vmem:[#allocation3 + $0x108] sm:$0xff] %v3159
        %3176 = vst [vmem:[#allocation3 + $0x110] sm:$0xff] %v3160
        %3177 = vst [vmem:[#allocation3 + $0x118] sm:$0xff] %v3161
        %3178 = vst [vmem:[#allocation3 + $0x120] sm:$0xff] %v3162
        %3179 = vst [vmem:[#allocation3 + $0x128] sm:$0xff] %v3163
        %3180 = vst [vmem:[#allocation3 + $0x130] sm:$0xff] %v3164
        %3181 = vst [vmem:[#allocation3 + $0x138] sm:$0xff] %v3165
        %3182 = vst [vmem:[#allocation3 + $0x140] sm:$0xff] %v3166
        %3183 = vst [vmem:[#allocation3 + $0x148] sm:$0xff] %v3167
        %3184 = vst [vmem:[#allocation3 + $0x150] sm:$0xff] %v3168
        %3185 = vst [vmem:[#allocation3 + $0x158] sm:$0xff] %v3169
        %3186 = vst [vmem:[#allocation3 + $0x160] sm:$0xff] %v3170
        %3187 = vst [vmem:[#allocation3 + $0x168] sm:$0xff] %v3171
        %3188 = vst [vmem:[#allocation3 + $0x170] sm:$0xff] %v3172
        %3189 = vst [vmem:[#allocation3 + $0x178] sm:$0xff] %v3173
        %3190 = vrot.lane.b32.xlu0 %v2898, 1
        %v3191 = vpop.permute.xlu0 %3190
        %3192 = vrot.lane.b32.xlu0 %v2900, 1
        %v3193 = vpop.permute.xlu0 %3192
        %3194 = vrot.lane.b32.xlu0 %v2902, 1
        %v3195 = vpop.permute.xlu0 %3194
        %3196 = vrot.lane.b32.xlu0 %v2904, 1
        %v3197 = vpop.permute.xlu0 %3196
        %3198 = vrot.lane.b32.xlu0 %v2906, 1
        %v3199 = vpop.permute.xlu0 %3198
        %3200 = vrot.lane.b32.xlu0 %v2908, 1
        %v3201 = vpop.permute.xlu0 %3200
        %3202 = vrot.lane.b32.xlu0 %v2910, 1
        %v3203 = vpop.permute.xlu0 %3202
        %3204 = vrot.lane.b32.xlu0 %v2912, 1
        %v3205 = vpop.permute.xlu0 %3204
        %3206 = vrot.lane.b32.xlu0 %v2899, 1
        %v3207 = vpop.permute.xlu0 %3206
        %3208 = vrot.lane.b32.xlu0 %v2901, 1
        %v3209 = vpop.permute.xlu0 %3208
        %3210 = vrot.lane.b32.xlu0 %v2903, 1
        %v3211 = vpop.permute.xlu0 %3210
        %3212 = vrot.lane.b32.xlu0 %v2905, 1
        %v3213 = vpop.permute.xlu0 %3212
        %3214 = vrot.lane.b32.xlu0 %v2907, 1
        %v3215 = vpop.permute.xlu0 %3214
        %3216 = vrot.lane.b32.xlu0 %v2909, 1
        %v3217 = vpop.permute.xlu0 %3216
        %3218 = vrot.lane.b32.xlu0 %v2911, 1
        %v3219 = vpop.permute.xlu0 %3218
        %3220 = vrot.lane.b32.xlu0 %v2913, 1
        %v3221 = vpop.permute.xlu0 %3220
        %v3222 = vsel %vm1411, %v3191, %v3207
        %v3223 = vsel %vm1411, %v3193, %v3209
        %v3224 = vsel %vm1411, %v3195, %v3211
        %v3225 = vsel %vm1411, %v3197, %v3213
        %v3226 = vsel %vm1411, %v3199, %v3215
        %v3227 = vsel %vm1411, %v3201, %v3217
        %v3228 = vsel %vm1411, %v3203, %v3219
        %v3229 = vsel %vm1411, %v3205, %v3221
        %v3230 = vsel %vm1411, %v3207, %v3191
        %v3231 = vsel %vm1411, %v3209, %v3193
        %v3232 = vsel %vm1411, %v3211, %v3195
        %v3233 = vsel %vm1411, %v3213, %v3197
        %v3234 = vsel %vm1411, %v3215, %v3199
        %v3235 = vsel %vm1411, %v3217, %v3201
        %v3236 = vsel %vm1411, %v3219, %v3203
        %v3237 = vsel %vm1411, %v3221, %v3205
        %v3238 = vld [vmem:[%s1420] ss:$8 sm:$0x3]
        %v3240 = vlaneseq
        %v3241 = vshrl.u32 %v3240, 7
        %v3242 = vsub.s32 0, %v3241
        %v3243 = vrot.slane %v3238, %v3242
        %v3244 = vlaneseq
        %v3245 = vshrl.u32 %v3244, 7
        %v3246 = vsub.s32 1, %v3245
        %v3247 = vrot.slane %v3238, %v3246
        %v3250 = vmul.f32 %v3230, %v3243
        %v3251 = vmul.f32 %v3222, %v3247
        %v3252 = vmul.f32 %v3231, %v3243
        %v3253 = vmul.f32 %v3223, %v3247
        %v3254 = vmul.f32 %v3232, %v3243
        %v3255 = vmul.f32 %v3224, %v3247
        %v3256 = vmul.f32 %v3233, %v3243
        %v3257 = vmul.f32 %v3225, %v3247
        %v3258 = vmul.f32 %v3234, %v3243
        %v3259 = vmul.f32 %v3226, %v3247
        %v3260 = vmul.f32 %v3235, %v3243
        %v3261 = vmul.f32 %v3227, %v3247
        %v3262 = vmul.f32 %v3236, %v3243
        %v3263 = vmul.f32 %v3228, %v3247
        %v3264 = vmul.f32 %v3237, %v3243
        %v3265 = vmul.f32 %v3229, %v3247
        %3266 = vst [vmem:[#allocation3 + $0x180] sm:$0xff] %v3250
        %3267 = vst [vmem:[#allocation3 + $0x188] sm:$0xff] %v3251
        %3268 = vst [vmem:[#allocation3 + $0x190] sm:$0xff] %v3252
        %3269 = vst [vmem:[#allocation3 + $0x198] sm:$0xff] %v3253
        %3270 = vst [vmem:[#allocation3 + $0x1a0] sm:$0xff] %v3254
        %3271 = vst [vmem:[#allocation3 + $0x1a8] sm:$0xff] %v3255
        %3272 = vst [vmem:[#allocation3 + $0x1b0] sm:$0xff] %v3256
        %3273 = vst [vmem:[#allocation3 + $0x1b8] sm:$0xff] %v3257
        %3274 = vst [vmem:[#allocation3 + $0x1c0] sm:$0xff] %v3258
        %3275 = vst [vmem:[#allocation3 + $0x1c8] sm:$0xff] %v3259
        %3276 = vst [vmem:[#allocation3 + $0x1d0] sm:$0xff] %v3260
        %3277 = vst [vmem:[#allocation3 + $0x1d8] sm:$0xff] %v3261
        %3278 = vst [vmem:[#allocation3 + $0x1e0] sm:$0xff] %v3262
        %3279 = vst [vmem:[#allocation3 + $0x1e8] sm:$0xff] %v3263
        %3280 = vst [vmem:[#allocation3 + $0x1f0] sm:$0xff] %v3264
        %3281 = vst [vmem:[#allocation3 + $0x1f8] sm:$0xff] %v3265
        %3282 = vst [vmem:[#allocation3 + $0x200] sm:$0xff] %v2898
        %3283 = vst [vmem:[#allocation3 + $0x208] sm:$0xff] %v2899
        %3284 = vst [vmem:[#allocation3 + $0x210] sm:$0xff] %v2900
        %3285 = vst [vmem:[#allocation3 + $0x218] sm:$0xff] %v2901
        %3286 = vst [vmem:[#allocation3 + $0x220] sm:$0xff] %v2902
        %3287 = vst [vmem:[#allocation3 + $0x228] sm:$0xff] %v2903
        %3288 = vst [vmem:[#allocation3 + $0x230] sm:$0xff] %v2904
        %3289 = vst [vmem:[#allocation3 + $0x238] sm:$0xff] %v2905
        %3290 = vst [vmem:[#allocation3 + $0x240] sm:$0xff] %v2906
        %3291 = vst [vmem:[#allocation3 + $0x248] sm:$0xff] %v2907
        %3292 = vst [vmem:[#allocation3 + $0x250] sm:$0xff] %v2908
        %3293 = vst [vmem:[#allocation3 + $0x258] sm:$0xff] %v2909
        %3294 = vst [vmem:[#allocation3 + $0x260] sm:$0xff] %v2910
        %3295 = vst [vmem:[#allocation3 + $0x268] sm:$0xff] %v2911
        %3296 = vst [vmem:[#allocation3 + $0x270] sm:$0xff] %v2912
        %3297 = vst [vmem:[#allocation3 + $0x278] sm:$0xff] %v2913
        %3298 = vrot.lane.b32.xlu0 %v2898, 127
        %v3299 = vpop.permute.xlu0 %3298
        %3300 = vrot.lane.b32.xlu0 %v2900, 127
        %v3301 = vpop.permute.xlu0 %3300
        %3302 = vrot.lane.b32.xlu0 %v2902, 127
        %v3303 = vpop.permute.xlu0 %3302
        %3304 = vrot.lane.b32.xlu0 %v2904, 127
        %v3305 = vpop.permute.xlu0 %3304
        %3306 = vrot.lane.b32.xlu0 %v2906, 127
        %v3307 = vpop.permute.xlu0 %3306
        %3308 = vrot.lane.b32.xlu0 %v2908, 127
        %v3309 = vpop.permute.xlu0 %3308
        %3310 = vrot.lane.b32.xlu0 %v2910, 127
        %v3311 = vpop.permute.xlu0 %3310
        %3312 = vrot.lane.b32.xlu0 %v2912, 127
        %v3313 = vpop.permute.xlu0 %3312
        %3314 = vrot.lane.b32.xlu0 %v2899, 127
        %v3315 = vpop.permute.xlu0 %3314
        %3316 = vrot.lane.b32.xlu0 %v2901, 127
        %v3317 = vpop.permute.xlu0 %3316
        %3318 = vrot.lane.b32.xlu0 %v2903, 127
        %v3319 = vpop.permute.xlu0 %3318
        %3320 = vrot.lane.b32.xlu0 %v2905, 127
        %v3321 = vpop.permute.xlu0 %3320
        %3322 = vrot.lane.b32.xlu0 %v2907, 127
        %v3323 = vpop.permute.xlu0 %3322
        %3324 = vrot.lane.b32.xlu0 %v2909, 127
        %v3325 = vpop.permute.xlu0 %3324
        %3326 = vrot.lane.b32.xlu0 %v2911, 127
        %v3327 = vpop.permute.xlu0 %3326
        %3328 = vrot.lane.b32.xlu0 %v2913, 127
        %v3329 = vpop.permute.xlu0 %3328
        %v3330 = vsel %vm1473, %v3299, %v3315
        %v3331 = vsel %vm1473, %v3301, %v3317
        %v3332 = vsel %vm1473, %v3303, %v3319
        %v3333 = vsel %vm1473, %v3305, %v3321
        %v3334 = vsel %vm1473, %v3307, %v3323
        %v3335 = vsel %vm1473, %v3309, %v3325
        %v3336 = vsel %vm1473, %v3311, %v3327
        %v3337 = vsel %vm1473, %v3313, %v3329
        %v3338 = vsel %vm1473, %v3315, %v3299
        %v3339 = vsel %vm1473, %v3317, %v3301
        %v3340 = vsel %vm1473, %v3319, %v3303
        %v3341 = vsel %vm1473, %v3321, %v3305
        %v3342 = vsel %vm1473, %v3323, %v3307
        %v3343 = vsel %vm1473, %v3325, %v3309
        %v3344 = vsel %vm1473, %v3327, %v3311
        %v3345 = vsel %vm1473, %v3329, %v3313
        %v3346 = vld [vmem:[%s1482] ss:$8 sm:$0x3]
        %v3348 = vlaneseq
        %v3349 = vshrl.u32 %v3348, 7
        %v3350 = vsub.s32 0, %v3349
        %v3351 = vrot.slane %v3346, %v3350
        %v3352 = vlaneseq
        %v3353 = vshrl.u32 %v3352, 7
        %v3354 = vsub.s32 1, %v3353
        %v3355 = vrot.slane %v3346, %v3354
        %v3358 = vmul.f32 %v3330, %v3351
        %v3359 = vmul.f32 %v3338, %v3355
        %v3360 = vmul.f32 %v3331, %v3351
        %v3361 = vmul.f32 %v3339, %v3355
        %v3362 = vmul.f32 %v3332, %v3351
        %v3363 = vmul.f32 %v3340, %v3355
        %v3364 = vmul.f32 %v3333, %v3351
        %v3365 = vmul.f32 %v3341, %v3355
        %v3366 = vmul.f32 %v3334, %v3351
        %v3367 = vmul.f32 %v3342, %v3355
        %v3368 = vmul.f32 %v3335, %v3351
        %v3369 = vmul.f32 %v3343, %v3355
        %v3370 = vmul.f32 %v3336, %v3351
        %v3371 = vmul.f32 %v3344, %v3355
        %v3372 = vmul.f32 %v3337, %v3351
        %v3373 = vmul.f32 %v3345, %v3355
        %3374 = vst [vmem:[#allocation3 + $0x280] sm:$0xff] %v3358
        %3375 = vst [vmem:[#allocation3 + $0x288] sm:$0xff] %v3359
        %3376 = vst [vmem:[#allocation3 + $0x290] sm:$0xff] %v3360
        %3377 = vst [vmem:[#allocation3 + $0x298] sm:$0xff] %v3361
        %3378 = vst [vmem:[#allocation3 + $0x2a0] sm:$0xff] %v3362
        %3379 = vst [vmem:[#allocation3 + $0x2a8] sm:$0xff] %v3363
        %3380 = vst [vmem:[#allocation3 + $0x2b0] sm:$0xff] %v3364
        %3381 = vst [vmem:[#allocation3 + $0x2b8] sm:$0xff] %v3365
        %3382 = vst [vmem:[#allocation3 + $0x2c0] sm:$0xff] %v3366
        %3383 = vst [vmem:[#allocation3 + $0x2c8] sm:$0xff] %v3367
        %3384 = vst [vmem:[#allocation3 + $0x2d0] sm:$0xff] %v3368
        %3385 = vst [vmem:[#allocation3 + $0x2d8] sm:$0xff] %v3369
        %3386 = vst [vmem:[#allocation3 + $0x2e0] sm:$0xff] %v3370
        %3387 = vst [vmem:[#allocation3 + $0x2e8] sm:$0xff] %v3371
        %3388 = vst [vmem:[#allocation3 + $0x2f0] sm:$0xff] %v3372
        %3389 = vst [vmem:[#allocation3 + $0x2f8] sm:$0xff] %v3373
        %3390 = vrot.lane.b32.xlu0 %v2898, 113
        %v3391 = vpop.permute.xlu0 %3390
        %3392 = vrot.lane.b32.xlu0 %v2900, 113
        %v3393 = vpop.permute.xlu0 %3392
        %3394 = vrot.lane.b32.xlu0 %v2902, 113
        %v3395 = vpop.permute.xlu0 %3394
        %3396 = vrot.lane.b32.xlu0 %v2904, 113
        %v3397 = vpop.permute.xlu0 %3396
        %3398 = vrot.lane.b32.xlu0 %v2906, 113
        %v3399 = vpop.permute.xlu0 %3398
        %3400 = vrot.lane.b32.xlu0 %v2908, 113
        %v3401 = vpop.permute.xlu0 %3400
        %3402 = vrot.lane.b32.xlu0 %v2910, 113
        %v3403 = vpop.permute.xlu0 %3402
        %3404 = vrot.lane.b32.xlu0 %v2912, 113
        %v3405 = vpop.permute.xlu0 %3404
        %3406 = vrot.lane.b32.xlu0 %v2899, 113
        %v3407 = vpop.permute.xlu0 %3406
        %3408 = vrot.lane.b32.xlu0 %v2901, 113
        %v3409 = vpop.permute.xlu0 %3408
        %3410 = vrot.lane.b32.xlu0 %v2903, 113
        %v3411 = vpop.permute.xlu0 %3410
        %3412 = vrot.lane.b32.xlu0 %v2905, 113
        %v3413 = vpop.permute.xlu0 %3412
        %3414 = vrot.lane.b32.xlu0 %v2907, 113
        %v3415 = vpop.permute.xlu0 %3414
        %3416 = vrot.lane.b32.xlu0 %v2909, 113
        %v3417 = vpop.permute.xlu0 %3416
        %3418 = vrot.lane.b32.xlu0 %v2911, 113
        %v3419 = vpop.permute.xlu0 %3418
        %3420 = vrot.lane.b32.xlu0 %v2913, 113
        %v3421 = vpop.permute.xlu0 %3420
        %v3422 = vsel %vm1527, %v3391, %v3407
        %v3423 = vsel %vm1527, %v3393, %v3409
        %v3424 = vsel %vm1527, %v3395, %v3411
        %v3425 = vsel %vm1527, %v3397, %v3413
        %v3426 = vsel %vm1527, %v3399, %v3415
        %v3427 = vsel %vm1527, %v3401, %v3417
        %v3428 = vsel %vm1527, %v3403, %v3419
        %v3429 = vsel %vm1527, %v3405, %v3421
        %v3430 = vsel %vm1527, %v3407, %v3391
        %v3431 = vsel %vm1527, %v3409, %v3393
        %v3432 = vsel %vm1527, %v3411, %v3395
        %v3433 = vsel %vm1527, %v3413, %v3397
        %v3434 = vsel %vm1527, %v3415, %v3399
        %v3435 = vsel %vm1527, %v3417, %v3401
        %v3436 = vsel %vm1527, %v3419, %v3403
        %v3437 = vsel %vm1527, %v3421, %v3405
        %v3438 = vld [vmem:[%s1536] ss:$8 sm:$0x3]
        %v3440 = vlaneseq
        %v3441 = vshrl.u32 %v3440, 7
        %v3442 = vsub.s32 0, %v3441
        %v3443 = vrot.slane %v3438, %v3442
        %v3444 = vlaneseq
        %v3445 = vshrl.u32 %v3444, 7
        %v3446 = vsub.s32 1, %v3445
        %v3447 = vrot.slane %v3438, %v3446
        %v3450 = vmul.f32 %v3422, %v3443
        %v3451 = vmul.f32 %v3430, %v3447
        %v3452 = vmul.f32 %v3423, %v3443
        %v3453 = vmul.f32 %v3431, %v3447
        %v3454 = vmul.f32 %v3424, %v3443
        %v3455 = vmul.f32 %v3432, %v3447
        %v3456 = vmul.f32 %v3425, %v3443
        %v3457 = vmul.f32 %v3433, %v3447
        %v3458 = vmul.f32 %v3426, %v3443
        %v3459 = vmul.f32 %v3434, %v3447
        %v3460 = vmul.f32 %v3427, %v3443
        %v3461 = vmul.f32 %v3435, %v3447
        %v3462 = vmul.f32 %v3428, %v3443
        %v3463 = vmul.f32 %v3436, %v3447
        %v3464 = vmul.f32 %v3429, %v3443
        %v3465 = vmul.f32 %v3437, %v3447
        %3466 = vst [vmem:[#allocation3 + $0x300] sm:$0xff] %v3450
        %3467 = vst [vmem:[#allocation3 + $0x308] sm:$0xff] %v3451
        %3468 = vst [vmem:[#allocation3 + $0x310] sm:$0xff] %v3452
        %3469 = vst [vmem:[#allocation3 + $0x318] sm:$0xff] %v3453
        %3470 = vst [vmem:[#allocation3 + $0x320] sm:$0xff] %v3454
        %3471 = vst [vmem:[#allocation3 + $0x328] sm:$0xff] %v3455
        %3472 = vst [vmem:[#allocation3 + $0x330] sm:$0xff] %v3456
        %3473 = vst [vmem:[#allocation3 + $0x338] sm:$0xff] %v3457
        %3474 = vst [vmem:[#allocation3 + $0x340] sm:$0xff] %v3458
        %3475 = vst [vmem:[#allocation3 + $0x348] sm:$0xff] %v3459
        %3476 = vst [vmem:[#allocation3 + $0x350] sm:$0xff] %v3460
        %3477 = vst [vmem:[#allocation3 + $0x358] sm:$0xff] %v3461
        %3478 = vst [vmem:[#allocation3 + $0x360] sm:$0xff] %v3462
        %3479 = vst [vmem:[#allocation3 + $0x368] sm:$0xff] %v3463
        %3480 = vst [vmem:[#allocation3 + $0x370] sm:$0xff] %v3464
        %3481 = vst [vmem:[#allocation3 + $0x378] sm:$0xff] %v3465
        %3482 = vrot.lane.b32.xlu0 %v2898, 112
        %v3483 = vpop.permute.xlu0 %3482
        %3484 = vrot.lane.b32.xlu0 %v2900, 112
        %v3485 = vpop.permute.xlu0 %3484
        %3486 = vrot.lane.b32.xlu0 %v2902, 112
        %v3487 = vpop.permute.xlu0 %3486
        %3488 = vrot.lane.b32.xlu0 %v2904, 112
        %v3489 = vpop.permute.xlu0 %3488
        %3490 = vrot.lane.b32.xlu0 %v2906, 112
        %v3491 = vpop.permute.xlu0 %3490
        %3492 = vrot.lane.b32.xlu0 %v2908, 112
        %v3493 = vpop.permute.xlu0 %3492
        %3494 = vrot.lane.b32.xlu0 %v2910, 112
        %v3495 = vpop.permute.xlu0 %3494
        %3496 = vrot.lane.b32.xlu0 %v2912, 112
        %v3497 = vpop.permute.xlu0 %3496
        %3498 = vrot.lane.b32.xlu0 %v2899, 112
        %v3499 = vpop.permute.xlu0 %3498
        %3500 = vrot.lane.b32.xlu0 %v2901, 112
        %v3501 = vpop.permute.xlu0 %3500
        %3502 = vrot.lane.b32.xlu0 %v2903, 112
        %v3503 = vpop.permute.xlu0 %3502
        %3504 = vrot.lane.b32.xlu0 %v2905, 112
        %v3505 = vpop.permute.xlu0 %3504
        %3506 = vrot.lane.b32.xlu0 %v2907, 112
        %v3507 = vpop.permute.xlu0 %3506
        %3508 = vrot.lane.b32.xlu0 %v2909, 112
        %v3509 = vpop.permute.xlu0 %3508
        %3510 = vrot.lane.b32.xlu0 %v2911, 112
        %v3511 = vpop.permute.xlu0 %3510
        %3512 = vrot.lane.b32.xlu0 %v2913, 112
        %v3513 = vpop.permute.xlu0 %3512
        %v3514 = vsel %vm1581, %v3483, %v3499
        %v3515 = vsel %vm1581, %v3485, %v3501
        %v3516 = vsel %vm1581, %v3487, %v3503
        %v3517 = vsel %vm1581, %v3489, %v3505
        %v3518 = vsel %vm1581, %v3491, %v3507
        %v3519 = vsel %vm1581, %v3493, %v3509
        %v3520 = vsel %vm1581, %v3495, %v3511
        %v3521 = vsel %vm1581, %v3497, %v3513
        %v3522 = vsel %vm1581, %v3499, %v3483
        %v3523 = vsel %vm1581, %v3501, %v3485
        %v3524 = vsel %vm1581, %v3503, %v3487
        %v3525 = vsel %vm1581, %v3505, %v3489
        %v3526 = vsel %vm1581, %v3507, %v3491
        %v3527 = vsel %vm1581, %v3509, %v3493
        %v3528 = vsel %vm1581, %v3511, %v3495
        %v3529 = vsel %vm1581, %v3513, %v3497
        %v3530 = vld [vmem:[%s1590] ss:$8 sm:$0x3]
        %v3532 = vlaneseq
        %v3533 = vshrl.u32 %v3532, 7
        %v3534 = vsub.s32 0, %v3533
        %v3535 = vrot.slane %v3530, %v3534
        %v3536 = vlaneseq
        %v3537 = vshrl.u32 %v3536, 7
        %v3538 = vsub.s32 1, %v3537
        %v3539 = vrot.slane %v3530, %v3538
        %v3542 = vmul.f32 %v3514, %v3535
        %v3543 = vmul.f32 %v3522, %v3539
        %v3544 = vmul.f32 %v3515, %v3535
        %v3545 = vmul.f32 %v3523, %v3539
        %v3546 = vmul.f32 %v3516, %v3535
        %v3547 = vmul.f32 %v3524, %v3539
        %v3548 = vmul.f32 %v3517, %v3535
        %v3549 = vmul.f32 %v3525, %v3539
        %v3550 = vmul.f32 %v3518, %v3535
        %v3551 = vmul.f32 %v3526, %v3539
        %v3552 = vmul.f32 %v3519, %v3535
        %v3553 = vmul.f32 %v3527, %v3539
        %v3554 = vmul.f32 %v3520, %v3535
        %v3555 = vmul.f32 %v3528, %v3539
        %v3556 = vmul.f32 %v3521, %v3535
        %v3557 = vmul.f32 %v3529, %v3539
        %3558 = vst [vmem:[#allocation3 + $0x380] sm:$0xff] %v3542
        %3559 = vst [vmem:[#allocation3 + $0x388] sm:$0xff] %v3543
        %3560 = vst [vmem:[#allocation3 + $0x390] sm:$0xff] %v3544
        %3561 = vst [vmem:[#allocation3 + $0x398] sm:$0xff] %v3545
        %3562 = vst [vmem:[#allocation3 + $0x3a0] sm:$0xff] %v3546
        %3563 = vst [vmem:[#allocation3 + $0x3a8] sm:$0xff] %v3547
        %3564 = vst [vmem:[#allocation3 + $0x3b0] sm:$0xff] %v3548
        %3565 = vst [vmem:[#allocation3 + $0x3b8] sm:$0xff] %v3549
        %3566 = vst [vmem:[#allocation3 + $0x3c0] sm:$0xff] %v3550
        %3567 = vst [vmem:[#allocation3 + $0x3c8] sm:$0xff] %v3551
        %3568 = vst [vmem:[#allocation3 + $0x3d0] sm:$0xff] %v3552
        %3569 = vst [vmem:[#allocation3 + $0x3d8] sm:$0xff] %v3553
        %3570 = vst [vmem:[#allocation3 + $0x3e0] sm:$0xff] %v3554
        %3571 = vst [vmem:[#allocation3 + $0x3e8] sm:$0xff] %v3555
        %3572 = vst [vmem:[#allocation3 + $0x3f0] sm:$0xff] %v3556
        %3573 = vst [vmem:[#allocation3 + $0x3f8] sm:$0xff] %v3557
        %3574 = vrot.lane.b32.xlu0 %v2898, 111
        %v3575 = vpop.permute.xlu0 %3574
        %3576 = vrot.lane.b32.xlu0 %v2900, 111
        %v3577 = vpop.permute.xlu0 %3576
        %3578 = vrot.lane.b32.xlu0 %v2902, 111
        %v3579 = vpop.permute.xlu0 %3578
        %3580 = vrot.lane.b32.xlu0 %v2904, 111
        %v3581 = vpop.permute.xlu0 %3580
        %3582 = vrot.lane.b32.xlu0 %v2906, 111
        %v3583 = vpop.permute.xlu0 %3582
        %3584 = vrot.lane.b32.xlu0 %v2908, 111
        %v3585 = vpop.permute.xlu0 %3584
        %3586 = vrot.lane.b32.xlu0 %v2910, 111
        %v3587 = vpop.permute.xlu0 %3586
        %3588 = vrot.lane.b32.xlu0 %v2912, 111
        %v3589 = vpop.permute.xlu0 %3588
        %3590 = vrot.lane.b32.xlu0 %v2899, 111
        %v3591 = vpop.permute.xlu0 %3590
        %3592 = vrot.lane.b32.xlu0 %v2901, 111
        %v3593 = vpop.permute.xlu0 %3592
        %3594 = vrot.lane.b32.xlu0 %v2903, 111
        %v3595 = vpop.permute.xlu0 %3594
        %3596 = vrot.lane.b32.xlu0 %v2905, 111
        %v3597 = vpop.permute.xlu0 %3596
        %3598 = vrot.lane.b32.xlu0 %v2907, 111
        %v3599 = vpop.permute.xlu0 %3598
        %3600 = vrot.lane.b32.xlu0 %v2909, 111
        %v3601 = vpop.permute.xlu0 %3600
        %3602 = vrot.lane.b32.xlu0 %v2911, 111
        %v3603 = vpop.permute.xlu0 %3602
        %3604 = vrot.lane.b32.xlu0 %v2913, 111
        %v3605 = vpop.permute.xlu0 %3604
        %v3606 = vsel %vm1635, %v3575, %v3591
        %v3607 = vsel %vm1635, %v3577, %v3593
        %v3608 = vsel %vm1635, %v3579, %v3595
        %v3609 = vsel %vm1635, %v3581, %v3597
        %v3610 = vsel %vm1635, %v3583, %v3599
        %v3611 = vsel %vm1635, %v3585, %v3601
        %v3612 = vsel %vm1635, %v3587, %v3603
        %v3613 = vsel %vm1635, %v3589, %v3605
        %v3614 = vsel %vm1635, %v3591, %v3575
        %v3615 = vsel %vm1635, %v3593, %v3577
        %v3616 = vsel %vm1635, %v3595, %v3579
        %v3617 = vsel %vm1635, %v3597, %v3581
        %v3618 = vsel %vm1635, %v3599, %v3583
        %v3619 = vsel %vm1635, %v3601, %v3585
        %v3620 = vsel %vm1635, %v3603, %v3587
        %v3621 = vsel %vm1635, %v3605, %v3589
        %v3622 = vld [vmem:[%s1644] ss:$8 sm:$0x3]
        %v3624 = vlaneseq
        %v3625 = vshrl.u32 %v3624, 7
        %v3626 = vsub.s32 0, %v3625
        %v3627 = vrot.slane %v3622, %v3626
        %v3628 = vlaneseq
        %v3629 = vshrl.u32 %v3628, 7
        %v3630 = vsub.s32 1, %v3629
        %v3631 = vrot.slane %v3622, %v3630
        %v3634 = vmul.f32 %v3606, %v3627
        %v3635 = vmul.f32 %v3614, %v3631
        %v3636 = vmul.f32 %v3607, %v3627
        %v3637 = vmul.f32 %v3615, %v3631
        %v3638 = vmul.f32 %v3608, %v3627
        %v3639 = vmul.f32 %v3616, %v3631
        %v3640 = vmul.f32 %v3609, %v3627
        %v3641 = vmul.f32 %v3617, %v3631
        %v3642 = vmul.f32 %v3610, %v3627
        %v3643 = vmul.f32 %v3618, %v3631
        %v3644 = vmul.f32 %v3611, %v3627
        %v3645 = vmul.f32 %v3619, %v3631
        %v3646 = vmul.f32 %v3612, %v3627
        %v3647 = vmul.f32 %v3620, %v3631
        %v3648 = vmul.f32 %v3613, %v3627
        %v3649 = vmul.f32 %v3621, %v3631
        %3650 = vst [vmem:[#allocation3 + $0x400] sm:$0xff] %v3634
        %3651 = vst [vmem:[#allocation3 + $0x408] sm:$0xff] %v3635
        %3652 = vst [vmem:[#allocation3 + $0x410] sm:$0xff] %v3636
        %3653 = vst [vmem:[#allocation3 + $0x418] sm:$0xff] %v3637
        %3654 = vst [vmem:[#allocation3 + $0x420] sm:$0xff] %v3638
        %3655 = vst [vmem:[#allocation3 + $0x428] sm:$0xff] %v3639
        %3656 = vst [vmem:[#allocation3 + $0x430] sm:$0xff] %v3640
        %3657 = vst [vmem:[#allocation3 + $0x438] sm:$0xff] %v3641
        %3658 = vst [vmem:[#allocation3 + $0x440] sm:$0xff] %v3642
        %3659 = vst [vmem:[#allocation3 + $0x448] sm:$0xff] %v3643
        %3660 = vst [vmem:[#allocation3 + $0x450] sm:$0xff] %v3644
        %3661 = vst [vmem:[#allocation3 + $0x458] sm:$0xff] %v3645
        %3662 = vst [vmem:[#allocation3 + $0x460] sm:$0xff] %v3646
        %3663 = vst [vmem:[#allocation3 + $0x468] sm:$0xff] %v3647
        %3664 = vst [vmem:[#allocation3 + $0x470] sm:$0xff] %v3648
        %3665 = vst [vmem:[#allocation3 + $0x478] sm:$0xff] %v3649
        %v3666 = vld [vmem:[#allocation16] sm:$0xff]
        %v3667 = vld [vmem:[#allocation16 + $0x8] sm:$0xff]
        %v3668 = vld [vmem:[#allocation16 + $0x10] sm:$0xff]
        %v3669 = vld [vmem:[#allocation16 + $0x18] sm:$0xff]
        %v3670 = vld [vmem:[#allocation16 + $0x20] sm:$0xff]
        %v3671 = vld [vmem:[#allocation16 + $0x28] sm:$0xff]
        %v3672 = vld [vmem:[#allocation16 + $0x30] sm:$0xff]
        %v3673 = vld [vmem:[#allocation16 + $0x38] sm:$0xff]
        %v3674 = vld [vmem:[#allocation16 + $0x40] sm:$0xff]
        %v3675 = vld [vmem:[#allocation16 + $0x48] sm:$0xff]
        %v3676 = vld [vmem:[#allocation16 + $0x50] sm:$0xff]
        %v3677 = vld [vmem:[#allocation16 + $0x58] sm:$0xff]
        %v3678 = vld [vmem:[#allocation16 + $0x60] sm:$0xff]
        %v3679 = vld [vmem:[#allocation16 + $0x68] sm:$0xff]
        %v3680 = vld [vmem:[#allocation16 + $0x70] sm:$0xff]
        %v3681 = vld [vmem:[#allocation16 + $0x78] sm:$0xff]
        %v3682 = vld [vmem:[#allocation16 + $0x80] sm:$0xff]
        %v3683 = vld [vmem:[#allocation16 + $0x88] sm:$0xff]
        %v3684 = vld [vmem:[#allocation16 + $0x90] sm:$0xff]
        %v3685 = vld [vmem:[#allocation16 + $0x98] sm:$0xff]
        %v3686 = vld [vmem:[#allocation16 + $0xa0] sm:$0xff]
        %v3687 = vld [vmem:[#allocation16 + $0xa8] sm:$0xff]
        %v3688 = vld [vmem:[#allocation16 + $0xb0] sm:$0xff]
        %v3689 = vld [vmem:[#allocation16 + $0xb8] sm:$0xff]
        %v3690 = vld [vmem:[#allocation16 + $0xc0] sm:$0xff]
        %v3691 = vld [vmem:[#allocation16 + $0xc8] sm:$0xff]
        %v3692 = vld [vmem:[#allocation16 + $0xd0] sm:$0xff]
        %v3693 = vld [vmem:[#allocation16 + $0xd8] sm:$0xff]
        %v3694 = vld [vmem:[#allocation16 + $0xe0] sm:$0xff]
        %v3695 = vld [vmem:[#allocation16 + $0xe8] sm:$0xff]
        %v3696 = vld [vmem:[#allocation16 + $0xf0] sm:$0xff]
        %v3697 = vld [vmem:[#allocation16 + $0xf8] sm:$0xff]
        %v3698 = vld [vmem:[#allocation16 + $0x100] sm:$0xff]
        %v3699 = vld [vmem:[#allocation16 + $0x108] sm:$0xff]
        %v3700 = vld [vmem:[#allocation16 + $0x110] sm:$0xff]
        %v3701 = vld [vmem:[#allocation16 + $0x118] sm:$0xff]
        %v3702 = vld [vmem:[#allocation16 + $0x120] sm:$0xff]
        %v3703 = vld [vmem:[#allocation16 + $0x128] sm:$0xff]
        %v3704 = vld [vmem:[#allocation16 + $0x130] sm:$0xff]
        %v3705 = vld [vmem:[#allocation16 + $0x138] sm:$0xff]
        %v3706 = vld [vmem:[#allocation3] sm:$0xff]
        %v3707 = vld [vmem:[#allocation3 + $0x8] sm:$0xff]
        %v3708 = vld [vmem:[#allocation3 + $0x10] sm:$0xff]
        %v3709 = vld [vmem:[#allocation3 + $0x18] sm:$0xff]
        %v3710 = vld [vmem:[#allocation3 + $0x20] sm:$0xff]
        %v3711 = vld [vmem:[#allocation3 + $0x28] sm:$0xff]
        %v3712 = vld [vmem:[#allocation3 + $0x30] sm:$0xff]
        %v3713 = vld [vmem:[#allocation3 + $0x38] sm:$0xff]
        %v3714 = vld [vmem:[#allocation3 + $0x40] sm:$0xff]
        %v3715 = vld [vmem:[#allocation3 + $0x48] sm:$0xff]
        %v3716 = vld [vmem:[#allocation3 + $0x50] sm:$0xff]
        %v3717 = vld [vmem:[#allocation3 + $0x58] sm:$0xff]
        %v3718 = vld [vmem:[#allocation3 + $0x60] sm:$0xff]
        %v3719 = vld [vmem:[#allocation3 + $0x68] sm:$0xff]
        %v3720 = vld [vmem:[#allocation3 + $0x70] sm:$0xff]
        %v3721 = vld [vmem:[#allocation3 + $0x78] sm:$0xff]
        %v3722 = vld [vmem:[#allocation3 + $0x80] sm:$0xff]
        %v3723 = vld [vmem:[#allocation3 + $0x88] sm:$0xff]
        %v3724 = vld [vmem:[#allocation3 + $0x90] sm:$0xff]
        %v3725 = vld [vmem:[#allocation3 + $0x98] sm:$0xff]
        %v3726 = vld [vmem:[#allocation3 + $0xa0] sm:$0xff]
        %v3727 = vld [vmem:[#allocation3 + $0xa8] sm:$0xff]
        %v3728 = vld [vmem:[#allocation3 + $0xb0] sm:$0xff]
        %v3729 = vld [vmem:[#allocation3 + $0xb8] sm:$0xff]
        %v3730 = vld [vmem:[#allocation3 + $0xc0] sm:$0xff]
        %v3731 = vld [vmem:[#allocation3 + $0xc8] sm:$0xff]
        %v3732 = vld [vmem:[#allocation3 + $0xd0] sm:$0xff]
        %v3733 = vld [vmem:[#allocation3 + $0xd8] sm:$0xff]
        %v3734 = vld [vmem:[#allocation3 + $0xe0] sm:$0xff]
        %v3735 = vld [vmem:[#allocation3 + $0xe8] sm:$0xff]
        %v3736 = vld [vmem:[#allocation3 + $0xf0] sm:$0xff]
        %v3737 = vld [vmem:[#allocation3 + $0xf8] sm:$0xff]
        %v3738 = vld [vmem:[#allocation3 + $0x100] sm:$0xff]
        %v3739 = vld [vmem:[#allocation3 + $0x108] sm:$0xff]
        %v3740 = vld [vmem:[#allocation3 + $0x110] sm:$0xff]
        %v3741 = vld [vmem:[#allocation3 + $0x118] sm:$0xff]
        %v3742 = vld [vmem:[#allocation3 + $0x120] sm:$0xff]
        %v3743 = vld [vmem:[#allocation3 + $0x128] sm:$0xff]
        %v3744 = vld [vmem:[#allocation3 + $0x130] sm:$0xff]
        %v3745 = vld [vmem:[#allocation3 + $0x138] sm:$0xff]
        %v3746 = vld [vmem:[#allocation3 + $0x140] sm:$0xff]
        %v3747 = vld [vmem:[#allocation3 + $0x148] sm:$0xff]
        %v3748 = vld [vmem:[#allocation3 + $0x150] sm:$0xff]
        %v3749 = vld [vmem:[#allocation3 + $0x158] sm:$0xff]
        %v3750 = vld [vmem:[#allocation3 + $0x160] sm:$0xff]
        %v3751 = vld [vmem:[#allocation3 + $0x168] sm:$0xff]
        %v3752 = vld [vmem:[#allocation3 + $0x170] sm:$0xff]
        %v3753 = vld [vmem:[#allocation3 + $0x178] sm:$0xff]
        %v3754 = vld [vmem:[#allocation3 + $0x180] sm:$0xff]
        %v3755 = vld [vmem:[#allocation3 + $0x188] sm:$0xff]
        %v3756 = vld [vmem:[#allocation3 + $0x190] sm:$0xff]
        %v3757 = vld [vmem:[#allocation3 + $0x198] sm:$0xff]
        %v3758 = vld [vmem:[#allocation3 + $0x1a0] sm:$0xff]
        %v3759 = vld [vmem:[#allocation3 + $0x1a8] sm:$0xff]
        %v3760 = vld [vmem:[#allocation3 + $0x1b0] sm:$0xff]
        %v3761 = vld [vmem:[#allocation3 + $0x1b8] sm:$0xff]
        %v3762 = vld [vmem:[#allocation3 + $0x1c0] sm:$0xff]
        %v3763 = vld [vmem:[#allocation3 + $0x1c8] sm:$0xff]
        %v3764 = vld [vmem:[#allocation3 + $0x1d0] sm:$0xff]
        %v3765 = vld [vmem:[#allocation3 + $0x1d8] sm:$0xff]
        %v3766 = vld [vmem:[#allocation3 + $0x1e0] sm:$0xff]
        %v3767 = vld [vmem:[#allocation3 + $0x1e8] sm:$0xff]
        %v3768 = vld [vmem:[#allocation3 + $0x1f0] sm:$0xff]
        %v3769 = vld [vmem:[#allocation3 + $0x1f8] sm:$0xff]
        %v3770 = vld [vmem:[#allocation3 + $0x200] sm:$0xff]
        %v3771 = vld [vmem:[#allocation3 + $0x208] sm:$0xff]
        %v3772 = vld [vmem:[#allocation3 + $0x210] sm:$0xff]
        %v3773 = vld [vmem:[#allocation3 + $0x218] sm:$0xff]
        %v3774 = vld [vmem:[#allocation3 + $0x220] sm:$0xff]
        %v3775 = vld [vmem:[#allocation3 + $0x228] sm:$0xff]
        %v3776 = vld [vmem:[#allocation3 + $0x230] sm:$0xff]
        %v3777 = vld [vmem:[#allocation3 + $0x238] sm:$0xff]
        %v3778 = vld [vmem:[#allocation3 + $0x240] sm:$0xff]
        %v3779 = vld [vmem:[#allocation3 + $0x248] sm:$0xff]
        %v3780 = vld [vmem:[#allocation3 + $0x250] sm:$0xff]
        %v3781 = vld [vmem:[#allocation3 + $0x258] sm:$0xff]
        %v3782 = vld [vmem:[#allocation3 + $0x260] sm:$0xff]
        %v3783 = vld [vmem:[#allocation3 + $0x268] sm:$0xff]
        %v3784 = vld [vmem:[#allocation3 + $0x270] sm:$0xff]
        %v3785 = vld [vmem:[#allocation3 + $0x278] sm:$0xff]
        %v3786 = vld [vmem:[#allocation3 + $0x280] sm:$0xff]
        %v3787 = vld [vmem:[#allocation3 + $0x288] sm:$0xff]
        %v3788 = vld [vmem:[#allocation3 + $0x290] sm:$0xff]
        %v3789 = vld [vmem:[#allocation3 + $0x298] sm:$0xff]
        %v3790 = vld [vmem:[#allocation3 + $0x2a0] sm:$0xff]
        %v3791 = vld [vmem:[#allocation3 + $0x2a8] sm:$0xff]
        %v3792 = vld [vmem:[#allocation3 + $0x2b0] sm:$0xff]
        %v3793 = vld [vmem:[#allocation3 + $0x2b8] sm:$0xff]
        %v3794 = vld [vmem:[#allocation3 + $0x2c0] sm:$0xff]
        %v3795 = vld [vmem:[#allocation3 + $0x2c8] sm:$0xff]
        %v3796 = vld [vmem:[#allocation3 + $0x2d0] sm:$0xff]
        %v3797 = vld [vmem:[#allocation3 + $0x2d8] sm:$0xff]
        %v3798 = vld [vmem:[#allocation3 + $0x2e0] sm:$0xff]
        %v3799 = vld [vmem:[#allocation3 + $0x2e8] sm:$0xff]
        %v3800 = vld [vmem:[#allocation3 + $0x2f0] sm:$0xff]
        %v3801 = vld [vmem:[#allocation3 + $0x2f8] sm:$0xff]
        %v3802 = vld [vmem:[#allocation3 + $0x300] sm:$0xff]
        %v3803 = vld [vmem:[#allocation3 + $0x308] sm:$0xff]
        %v3804 = vld [vmem:[#allocation3 + $0x310] sm:$0xff]
        %v3805 = vld [vmem:[#allocation3 + $0x318] sm:$0xff]
        %v3806 = vld [vmem:[#allocation3 + $0x320] sm:$0xff]
        %v3807 = vld [vmem:[#allocation3 + $0x328] sm:$0xff]
        %v3808 = vld [vmem:[#allocation3 + $0x330] sm:$0xff]
        %v3809 = vld [vmem:[#allocation3 + $0x338] sm:$0xff]
        %v3810 = vld [vmem:[#allocation3 + $0x340] sm:$0xff]
        %v3811 = vld [vmem:[#allocation3 + $0x348] sm:$0xff]
        %v3812 = vld [vmem:[#allocation3 + $0x350] sm:$0xff]
        %v3813 = vld [vmem:[#allocation3 + $0x358] sm:$0xff]
        %v3814 = vld [vmem:[#allocation3 + $0x360] sm:$0xff]
        %v3815 = vld [vmem:[#allocation3 + $0x368] sm:$0xff]
        %v3816 = vld [vmem:[#allocation3 + $0x370] sm:$0xff]
        %v3817 = vld [vmem:[#allocation3 + $0x378] sm:$0xff]
        %v3818 = vld [vmem:[#allocation3 + $0x380] sm:$0xff]
        %v3819 = vld [vmem:[#allocation3 + $0x388] sm:$0xff]
        %v3820 = vld [vmem:[#allocation3 + $0x390] sm:$0xff]
        %v3821 = vld [vmem:[#allocation3 + $0x398] sm:$0xff]
        %v3822 = vld [vmem:[#allocation3 + $0x3a0] sm:$0xff]
        %v3823 = vld [vmem:[#allocation3 + $0x3a8] sm:$0xff]
        %v3824 = vld [vmem:[#allocation3 + $0x3b0] sm:$0xff]
        %v3825 = vld [vmem:[#allocation3 + $0x3b8] sm:$0xff]
        %v3826 = vld [vmem:[#allocation3 + $0x3c0] sm:$0xff]
        %v3827 = vld [vmem:[#allocation3 + $0x3c8] sm:$0xff]
        %v3828 = vld [vmem:[#allocation3 + $0x3d0] sm:$0xff]
        %v3829 = vld [vmem:[#allocation3 + $0x3d8] sm:$0xff]
        %v3830 = vld [vmem:[#allocation3 + $0x3e0] sm:$0xff]
        %v3831 = vld [vmem:[#allocation3 + $0x3e8] sm:$0xff]
        %v3832 = vld [vmem:[#allocation3 + $0x3f0] sm:$0xff]
        %v3833 = vld [vmem:[#allocation3 + $0x3f8] sm:$0xff]
        %v3834 = vld [vmem:[#allocation3 + $0x400] sm:$0xff]
        %v3835 = vld [vmem:[#allocation3 + $0x408] sm:$0xff]
        %v3836 = vld [vmem:[#allocation3 + $0x410] sm:$0xff]
        %v3837 = vld [vmem:[#allocation3 + $0x418] sm:$0xff]
        %v3838 = vld [vmem:[#allocation3 + $0x420] sm:$0xff]
        %v3839 = vld [vmem:[#allocation3 + $0x428] sm:$0xff]
        %v3840 = vld [vmem:[#allocation3 + $0x430] sm:$0xff]
        %v3841 = vld [vmem:[#allocation3 + $0x438] sm:$0xff]
        %v3842 = vld [vmem:[#allocation3 + $0x440] sm:$0xff]
        %v3843 = vld [vmem:[#allocation3 + $0x448] sm:$0xff]
        %v3844 = vld [vmem:[#allocation3 + $0x450] sm:$0xff]
        %v3845 = vld [vmem:[#allocation3 + $0x458] sm:$0xff]
        %v3846 = vld [vmem:[#allocation3 + $0x460] sm:$0xff]
        %v3847 = vld [vmem:[#allocation3 + $0x468] sm:$0xff]
        %v3848 = vld [vmem:[#allocation3 + $0x470] sm:$0xff]
        %v3849 = vld [vmem:[#allocation3 + $0x478] sm:$0xff]
        %v3850 = vld [vmem:[#allocation18] sm:$0xff]
        %v3851 = vld [vmem:[#allocation18 + $0x8] sm:$0xff]
        %v3852 = vld [vmem:[#allocation18 + $0x10] sm:$0xff]
        %v3853 = vld [vmem:[#allocation18 + $0x18] sm:$0xff]
        %v3854 = vld [vmem:[#allocation18 + $0x20] sm:$0xff]
        %v3855 = vld [vmem:[#allocation18 + $0x28] sm:$0xff]
        %v3856 = vld [vmem:[#allocation18 + $0x30] sm:$0xff]
        %v3857 = vld [vmem:[#allocation18 + $0x38] sm:$0xff]
        %3859 = vset.pattern.permute.xlu0 0
        %3860 = vperm.xlu0 %3859, %v3850
        %v3861 = vpop.permute.xlu0 %3860
        %3864 = vset.pattern.permute.xlu0 0
        %3865 = vperm.xlu0 %3864, %v3851
        %v3866 = vpop.permute.xlu0 %3865
        %3869 = vset.pattern.permute.xlu0 0
        %3870 = vperm.xlu0 %3869, %v3852
        %v3871 = vpop.permute.xlu0 %3870
        %3874 = vset.pattern.permute.xlu0 0
        %3875 = vperm.xlu0 %3874, %v3853
        %v3876 = vpop.permute.xlu0 %3875
        %3879 = vset.pattern.permute.xlu0 0
        %3880 = vperm.xlu0 %3879, %v3854
        %v3881 = vpop.permute.xlu0 %3880
        %3884 = vset.pattern.permute.xlu0 0
        %3885 = vperm.xlu0 %3884, %v3855
        %v3886 = vpop.permute.xlu0 %3885
        %3889 = vset.pattern.permute.xlu0 0
        %3890 = vperm.xlu0 %3889, %v3856
        %v3891 = vpop.permute.xlu0 %3890
        %3894 = vset.pattern.permute.xlu0 0
        %3895 = vperm.xlu0 %3894, %v3857
        %v3896 = vpop.permute.xlu0 %3895
        %v3899 = vsel %vm2221, %v3670, 0
        %v3902 = vsel %vm2221, %v3675, 0
        %v3905 = vsel %vm2221, %v3680, 0
        %v3908 = vsel %vm2221, %v3685, 0
        %v3911 = vsel %vm2221, %v3690, 0
        %v3914 = vsel %vm2221, %v3695, 0
        %v3917 = vsel %vm2221, %v3700, 0
        %v3920 = vsel %vm2221, %v3705, 0
        %3922 = vmatprep.subr.mxu0 %v3707
        %3923 = vmatpush1.msra.mxu0 %v3706
        %3924 = vmatprep.subr.mxu0 %v3709
        %3925 = vmatpush1.msra.mxu0 %v3708
        %3926 = vmatprep.subr.mxu0 %v3711
        %3927 = vmatpush1.msra.mxu0 %v3710
        %3928 = vmatprep.subr.mxu0 %v3713
        %3929 = vmatpush1.msra.mxu0 %v3712
        %3930 = vmatprep.subr.mxu0 %v3715
        %3931 = vmatpush1.msra.mxu0 %v3714
        %3932 = vmatprep.subr.mxu0 %v3717
        %3933 = vmatpush1.msra.mxu0 %v3716
        %3934 = vmatprep.subr.mxu0 %v3719
        %3935 = vmatpush1.msra.mxu0 %v3718
        %3936 = vmatprep.subr.mxu0 %v3721
        %3937 = vmatpush1.msra.mxu0 %v3720
        %3938 = vmatprep.subr.mxu0 %v3723
        %3939 = vmatpush1.msra.mxu0 %v3722
        %3940 = vmatprep.subr.mxu0 %v3725
        %3941 = vmatpush1.msra.mxu0 %v3724
        %3942 = vmatprep.subr.mxu0 %v3727
        %3943 = vmatpush1.msra.mxu0 %v3726
        %3944 = vmatprep.subr.mxu0 %v3729
        %3945 = vmatpush1.msra.mxu0 %v3728
        %3946 = vmatprep.subr.mxu0 %v3731
        %3947 = vmatpush1.msra.mxu0 %v3730
        %3948 = vmatprep.subr.mxu0 %v3733
        %3949 = vmatpush1.msra.mxu0 %v3732
        %3950 = vmatprep.subr.mxu0 %v3735
        %3951 = vmatpush1.msra.mxu0 %v3734
        %3952 = vmatprep.subr.mxu0 %v3737
        %3953 = vmatpush1.msra.mxu0 %v3736
        %3954 = vmatprep.subr.mxu0 %v3739
        %3955 = vmatpush1.msra.mxu0 %v3738
        %3956 = vmatprep.subr.mxu0 %v3741
        %3957 = vmatpush1.msra.mxu0 %v3740
        %3958 = vmatprep.subr.mxu0 %v3743
        %3959 = vmatpush1.msra.mxu0 %v3742
        %3960 = vmatprep.subr.mxu0 %v3745
        %3961 = vmatpush1.msra.mxu0 %v3744
        %3962 = vmatprep.subr.mxu0 %v3747
        %3963 = vmatpush1.msra.mxu0 %v3746
        %3964 = vmatprep.subr.mxu0 %v3749
        %3965 = vmatpush1.msra.mxu0 %v3748
        %3966 = vmatprep.subr.mxu0 %v3751
        %3967 = vmatpush1.msra.mxu0 %v3750
        %3968 = vmatprep.subr.mxu0 %v3753
        %3969 = vmatpush1.msra.mxu0 %v3752
        %3970 = vmatprep.subr.mxu0 %v3755
        %3971 = vmatpush1.msra.mxu0 %v3754
        %3972 = vmatprep.subr.mxu0 %v3757
        %3973 = vmatpush1.msra.mxu0 %v3756
        %3974 = vmatprep.subr.mxu0 %v3759
        %3975 = vmatpush1.msra.mxu0 %v3758
        %3976 = vmatprep.subr.mxu0 %v3761
        %3977 = vmatpush1.msra.mxu0 %v3760
        %3978 = vmatprep.subr.mxu0 %v3763
        %3979 = vmatpush1.msra.mxu0 %v3762
        %3980 = vmatprep.subr.mxu0 %v3765
        %3981 = vmatpush1.msra.mxu0 %v3764
        %3982 = vmatprep.subr.mxu0 %v3767
        %3983 = vmatpush1.msra.mxu0 %v3766
        %3984 = vmatprep.subr.mxu0 %v3769
        %3985 = vmatpush1.msra.mxu0 %v3768
        %3986 = vmatprep.mubr.f32.mxu0 %v3667
        %3987 = vmatmul.mubr.f32.gmra.mrb[0].mxu0 %v3666
        %v3988 = vpop.f32.mrb[0].mxu0
        %v3989 = vadd.f32 %v3861, %v3988
        %v3990 = vpop.f32.mrb[0].mxu0
        %v3991 = vadd.f32 %v3861, %v3990
        %3992 = vmatprep.mubr.f32.mxu0 %v3672
        %3993 = vmatmul.mubr.f32.gmra.mrb[0].mxu0 %v3671
        %v3994 = vpop.f32.mrb[0].mxu0
        %v3995 = vadd.f32 %v3866, %v3994
        %v3996 = vpop.f32.mrb[0].mxu0
        %v3997 = vadd.f32 %v3866, %v3996
        %3998 = vmatprep.mubr.f32.mxu0 %v3677
        %3999 = vmatmul.mubr.f32.gmra.mrb[0].mxu0 %v3676
        %v4000 = vpop.f32.mrb[0].mxu0
        %v4001 = vadd.f32 %v3871, %v4000
        %v4002 = vpop.f32.mrb[0].mxu0
        %v4003 = vadd.f32 %v3871, %v4002
        %4004 = vmatprep.mubr.f32.mxu0 %v3682
        %4005 = vmatmul.mubr.f32.gmra.mrb[0].mxu0 %v3681
        %v4006 = vpop.f32.mrb[0].mxu0
        %v4007 = vadd.f32 %v3876, %v4006
        %v4008 = vpop.f32.mrb[0].mxu0
        %v4009 = vadd.f32 %v3876, %v4008
        %4010 = vmatprep.mubr.f32.mxu0 %v3687
        %4011 = vmatmul.mubr.f32.gmra.mrb[0].mxu0 %v3686
        %v4012 = vpop.f32.mrb[0].mxu0
        %v4013 = vadd.f32 %v3881, %v4012
        %v4014 = vpop.f32.mrb[0].mxu0
        %v4015 = vadd.f32 %v3881, %v4014
        %4016 = vmatprep.mubr.f32.mxu0 %v3692
        %4017 = vmatmul.mubr.f32.gmra.mrb[0].mxu0 %v3691
        %v4018 = vpop.f32.mrb[0].mxu0
        %v4019 = vadd.f32 %v3886, %v4018
        %v4020 = vpop.f32.mrb[0].mxu0
        %v4021 = vadd.f32 %v3886, %v4020
        %4022 = vmatprep.mubr.f32.mxu0 %v3697
        %4023 = vmatmul.mubr.f32.gmra.mrb[0].mxu0 %v3696
        %v4024 = vpop.f32.mrb[0].mxu0
        %v4025 = vadd.f32 %v3891, %v4024
        %v4026 = vpop.f32.mrb[0].mxu0
        %v4027 = vadd.f32 %v3891, %v4026
        %4028 = vmatprep.mubr.f32.mxu0 %v3702
        %4029 = vmatmul.mubr.f32.gmra.mrb[0].mxu0 %v3701
        %v4030 = vpop.f32.mrb[0].mxu0
        %v4031 = vadd.f32 %v3896, %v4030
        %v4032 = vpop.f32.mrb[0].mxu0
        %v4033 = vadd.f32 %v3896, %v4032
        %4034 = vdwg.mxu0
        %4035 = vmatprep.subr.mxu0 %v3771
        %4036 = vmatpush1.msra.mxu0 %v3770
        %4037 = vmatprep.subr.mxu0 %v3773
        %4038 = vmatpush1.msra.mxu0 %v3772
        %4039 = vmatprep.subr.mxu0 %v3775
        %4040 = vmatpush1.msra.mxu0 %v3774
        %4041 = vmatprep.subr.mxu0 %v3777
        %4042 = vmatpush1.msra.mxu0 %v3776
        %4043 = vmatprep.subr.mxu0 %v3779
        %4044 = vmatpush1.msra.mxu0 %v3778
        %4045 = vmatprep.subr.mxu0 %v3781
        %4046 = vmatpush1.msra.mxu0 %v3780
        %4047 = vmatprep.subr.mxu0 %v3783
        %4048 = vmatpush1.msra.mxu0 %v3782
        %4049 = vmatprep.subr.mxu0 %v3785
        %4050 = vmatpush1.msra.mxu0 %v3784
        %4051 = vmatprep.subr.mxu0 %v3787
        %4052 = vmatpush1.msra.mxu0 %v3786
        %4053 = vmatprep.subr.mxu0 %v3789
        %4054 = vmatpush1.msra.mxu0 %v3788
        %4055 = vmatprep.subr.mxu0 %v3791
        %4056 = vmatpush1.msra.mxu0 %v3790
        %4057 = vmatprep.subr.mxu0 %v3793
        %4058 = vmatpush1.msra.mxu0 %v3792
        %4059 = vmatprep.subr.mxu0 %v3795
        %4060 = vmatpush1.msra.mxu0 %v3794
        %4061 = vmatprep.subr.mxu0 %v3797
        %4062 = vmatpush1.msra.mxu0 %v3796
        %4063 = vmatprep.subr.mxu0 %v3799
        %4064 = vmatpush1.msra.mxu0 %v3798
        %4065 = vmatprep.subr.mxu0 %v3801
        %4066 = vmatpush1.msra.mxu0 %v3800
        %4067 = vmatprep.subr.mxu0 %v3803
        %4068 = vmatpush1.msra.mxu0 %v3802
        %4069 = vmatprep.subr.mxu0 %v3805
        %4070 = vmatpush1.msra.mxu0 %v3804
        %4071 = vmatprep.subr.mxu0 %v3807
        %4072 = vmatpush1.msra.mxu0 %v3806
        %4073 = vmatprep.subr.mxu0 %v3809
        %4074 = vmatpush1.msra.mxu0 %v3808
        %4075 = vmatprep.subr.mxu0 %v3811
        %4076 = vmatpush1.msra.mxu0 %v3810
        %4077 = vmatprep.subr.mxu0 %v3813
        %4078 = vmatpush1.msra.mxu0 %v3812
        %4079 = vmatprep.subr.mxu0 %v3815
        %4080 = vmatpush1.msra.mxu0 %v3814
        %4081 = vmatprep.subr.mxu0 %v3817
        %4082 = vmatpush1.msra.mxu0 %v3816
        %4083 = vmatprep.subr.mxu0 %v3819
        %4084 = vmatpush1.msra.mxu0 %v3818
        %4085 = vmatprep.subr.mxu0 %v3821
        %4086 = vmatpush1.msra.mxu0 %v3820
        %4087 = vmatprep.subr.mxu0 %v3823
        %4088 = vmatpush1.msra.mxu0 %v3822
        %4089 = vmatprep.subr.mxu0 %v3825
        %4090 = vmatpush1.msra.mxu0 %v3824
        %4091 = vmatprep.subr.mxu0 %v3827
        %4092 = vmatpush1.msra.mxu0 %v3826
        %4093 = vmatprep.subr.mxu0 %v3829
        %4094 = vmatpush1.msra.mxu0 %v3828
        %4095 = vmatprep.subr.mxu0 %v3831
        %4096 = vmatpush1.msra.mxu0 %v3830
        %4097 = vmatprep.subr.mxu0 %v3833
        %4098 = vmatpush1.msra.mxu0 %v3832
        %4099 = vmatprep.mubr.f32.mxu0 %v3669
        %4100 = vmatmul.mubr.f32.gmra.mrb[0].mxu0 %v3668
        %v4101 = vpop.f32.mrb[0].mxu0
        %v4102 = vadd.f32 %v3989, %v4101
        %v4103 = vpop.f32.mrb[0].mxu0
        %v4104 = vadd.f32 %v3991, %v4103
        %4105 = vmatprep.mubr.f32.mxu0 %v3674
        %4106 = vmatmul.mubr.f32.gmra.mrb[0].mxu0 %v3673
        %v4107 = vpop.f32.mrb[0].mxu0
        %v4108 = vadd.f32 %v3995, %v4107
        %v4109 = vpop.f32.mrb[0].mxu0
        %v4110 = vadd.f32 %v3997, %v4109
        %4111 = vmatprep.mubr.f32.mxu0 %v3679
        %4112 = vmatmul.mubr.f32.gmra.mrb[0].mxu0 %v3678
        %v4113 = vpop.f32.mrb[0].mxu0
        %v4114 = vadd.f32 %v4001, %v4113
        %v4115 = vpop.f32.mrb[0].mxu0
        %v4116 = vadd.f32 %v4003, %v4115
        %4117 = vmatprep.mubr.f32.mxu0 %v3684
        %4118 = vmatmul.mubr.f32.gmra.mrb[0].mxu0 %v3683
        %v4119 = vpop.f32.mrb[0].mxu0
        %v4120 = vadd.f32 %v4007, %v4119
        %v4121 = vpop.f32.mrb[0].mxu0
        %v4122 = vadd.f32 %v4009, %v4121
        %4123 = vmatprep.mubr.f32.mxu0 %v3689
        %4124 = vmatmul.mubr.f32.gmra.mrb[0].mxu0 %v3688
        %v4125 = vpop.f32.mrb[0].mxu0
        %v4126 = vadd.f32 %v4013, %v4125
        %v4127 = vpop.f32.mrb[0].mxu0
        %v4128 = vadd.f32 %v4015, %v4127
        %4129 = vmatprep.mubr.f32.mxu0 %v3694
        %4130 = vmatmul.mubr.f32.gmra.mrb[0].mxu0 %v3693
        %v4131 = vpop.f32.mrb[0].mxu0
        %v4132 = vadd.f32 %v4019, %v4131
        %v4133 = vpop.f32.mrb[0].mxu0
        %v4134 = vadd.f32 %v4021, %v4133
        %4135 = vmatprep.mubr.f32.mxu0 %v3699
        %4136 = vmatmul.mubr.f32.gmra.mrb[0].mxu0 %v3698
        %v4137 = vpop.f32.mrb[0].mxu0
        %v4138 = vadd.f32 %v4025, %v4137
        %v4139 = vpop.f32.mrb[0].mxu0
        %v4140 = vadd.f32 %v4027, %v4139
        %4141 = vmatprep.mubr.f32.mxu0 %v3704
        %4142 = vmatmul.mubr.f32.gmra.mrb[0].mxu0 %v3703
        %v4143 = vpop.f32.mrb[0].mxu0
        %v4144 = vadd.f32 %v4031, %v4143
        %v4145 = vpop.f32.mrb[0].mxu0
        %v4146 = vadd.f32 %v4033, %v4145
        %4147 = vdwg.mxu0
        %4148 = vmatprep.subr.mxu0 %v3835
        %4149 = vmatpush1.msra.mxu0 %v3834
        %4150 = vmatprep.subr.mxu0 %v3837
        %4151 = vmatpush1.msra.mxu0 %v3836
        %4152 = vmatprep.subr.mxu0 %v3839
        %4153 = vmatpush1.msra.mxu0 %v3838
        %4154 = vmatprep.subr.mxu0 %v3841
        %4155 = vmatpush1.msra.mxu0 %v3840
        %4156 = vmatprep.subr.mxu0 %v3843
        %4157 = vmatpush1.msra.mxu0 %v3842
        %4158 = vmatprep.subr.mxu0 %v3845
        %4159 = vmatpush1.msra.mxu0 %v3844
        %4160 = vmatprep.subr.mxu0 %v3847
        %4161 = vmatpush1.msra.mxu0 %v3846
        %4162 = vmatprep.subr.mxu0 %v3849
        %4163 = vmatpush1.msra.mxu0 %v3848
        %4164 = vmatprep.subr.mxu0 0.0
        %4165 = vmatpush1.msra.mxu0 0.0
        %4166 = vmatprep.subr.mxu0 0.0
        %4167 = vmatpush1.msra.mxu0 0.0
        %4168 = vmatprep.subr.mxu0 0.0
        %4169 = vmatpush1.msra.mxu0 0.0
        %4170 = vmatprep.subr.mxu0 0.0
        %4171 = vmatpush1.msra.mxu0 0.0
        %4172 = vmatprep.subr.mxu0 0.0
        %4173 = vmatpush1.msra.mxu0 0.0
        %4174 = vmatprep.subr.mxu0 0.0
        %4175 = vmatpush1.msra.mxu0 0.0
        %4176 = vmatprep.subr.mxu0 0.0
        %4177 = vmatpush1.msra.mxu0 0.0
        %4178 = vmatprep.subr.mxu0 0.0
        %4179 = vmatpush1.msra.mxu0 0.0
        %4180 = vmatprep.subr.mxu0 0.0
        %4181 = vmatpush1.msra.mxu0 0.0
        %4182 = vmatprep.subr.mxu0 0.0
        %4183 = vmatpush1.msra.mxu0 0.0
        %4184 = vmatprep.subr.mxu0 0.0
        %4185 = vmatpush1.msra.mxu0 0.0
        %4186 = vmatprep.subr.mxu0 0.0
        %4187 = vmatpush1.msra.mxu0 0.0
        %4188 = vmatprep.subr.mxu0 0.0
        %4189 = vmatpush1.msra.mxu0 0.0
        %4190 = vmatprep.subr.mxu0 0.0
        %4191 = vmatpush1.msra.mxu0 0.0
        %4192 = vmatprep.subr.mxu0 0.0
        %4193 = vmatpush1.msra.mxu0 0.0
        %4194 = vmatprep.subr.mxu0 0.0
        %4195 = vmatpush1.msra.mxu0 0.0
        %4196 = vmatprep.subr.mxu0 0.0
        %4197 = vmatpush1.msra.mxu0 0.0
        %4198 = vmatprep.subr.mxu0 0.0
        %4199 = vmatpush1.msra.mxu0 0.0
        %4200 = vmatprep.subr.mxu0 0.0
        %4201 = vmatpush1.msra.mxu0 0.0
        %4202 = vmatprep.subr.mxu0 0.0
        %4203 = vmatpush1.msra.mxu0 0.0
        %4204 = vmatprep.subr.mxu0 0.0
        %4205 = vmatpush1.msra.mxu0 0.0
        %4206 = vmatprep.subr.mxu0 0.0
        %4207 = vmatpush1.msra.mxu0 0.0
        %4208 = vmatprep.subr.mxu0 0.0
        %4209 = vmatpush1.msra.mxu0 0.0
        %4210 = vmatprep.subr.mxu0 0.0
        %4211 = vmatpush1.msra.mxu0 0.0
        %4212 = vmatprep.mubr.f32.mxu0 0.0
        %4213 = vmatmul.mubr.f32.gmra.mrb[0].mxu0 %v3899
        %v4214 = vpop.f32.mrb[0].mxu0
        %v4215 = vadd.f32 %v4102, %v4214
        %v4216 = vpop.f32.mrb[0].mxu0
        %v4217 = vadd.f32 %v4104, %v4216
        %4218 = vmatprep.mubr.f32.mxu0 0.0
        %4219 = vmatmul.mubr.f32.gmra.mrb[0].mxu0 %v3902
        %v4220 = vpop.f32.mrb[0].mxu0
        %v4221 = vadd.f32 %v4108, %v4220
        %v4222 = vpop.f32.mrb[0].mxu0
        %v4223 = vadd.f32 %v4110, %v4222
        %4224 = vmatprep.mubr.f32.mxu0 0.0
        %4225 = vmatmul.mubr.f32.gmra.mrb[0].mxu0 %v3905
        %v4226 = vpop.f32.mrb[0].mxu0
        %v4227 = vadd.f32 %v4114, %v4226
        %v4228 = vpop.f32.mrb[0].mxu0
        %v4229 = vadd.f32 %v4116, %v4228
        %4230 = vmatprep.mubr.f32.mxu0 0.0
        %4231 = vmatmul.mubr.f32.gmra.mrb[0].mxu0 %v3908
        %v4232 = vpop.f32.mrb[0].mxu0
        %v4233 = vadd.f32 %v4120, %v4232
        %v4234 = vpop.f32.mrb[0].mxu0
        %v4235 = vadd.f32 %v4122, %v4234
        %4236 = vmatprep.mubr.f32.mxu0 0.0
        %4237 = vmatmul.mubr.f32.gmra.mrb[0].mxu0 %v3911
        %v4238 = vpop.f32.mrb[0].mxu0
        %v4239 = vadd.f32 %v4126, %v4238
        %v4240 = vpop.f32.mrb[0].mxu0
        %v4241 = vadd.f32 %v4128, %v4240
        %4242 = vmatprep.mubr.f32.mxu0 0.0
        %4243 = vmatmul.mubr.f32.gmra.mrb[0].mxu0 %v3914
        %v4244 = vpop.f32.mrb[0].mxu0
        %v4245 = vadd.f32 %v4132, %v4244
        %v4246 = vpop.f32.mrb[0].mxu0
        %v4247 = vadd.f32 %v4134, %v4246
        %4248 = vmatprep.mubr.f32.mxu0 0.0
        %4249 = vmatmul.mubr.f32.gmra.mrb[0].mxu0 %v3917
        %v4250 = vpop.f32.mrb[0].mxu0
        %v4251 = vadd.f32 %v4138, %v4250
        %v4252 = vpop.f32.mrb[0].mxu0
        %v4253 = vadd.f32 %v4140, %v4252
        %4254 = vmatprep.mubr.f32.mxu0 0.0
        %4255 = vmatmul.mubr.f32.gmra.mrb[0].mxu0 %v3920
        %v4256 = vpop.f32.mrb[0].mxu0
        %v4257 = vadd.f32 %v4144, %v4256
        %v4258 = vpop.f32.mrb[0].mxu0
        %v4259 = vadd.f32 %v4146, %v4258
        %4260 = vdwg.mxu0
        %v4261 = vld [vmem:[#allocation21] sm:$0xff]
        %v4262 = vld [vmem:[#allocation21 + $0x8] sm:$0xff]
        %v4263 = vld [vmem:[#allocation21 + $0x10] sm:$0xff]
        %v4264 = vld [vmem:[#allocation21 + $0x18] sm:$0xff]
        %v4265 = vld [vmem:[#allocation21 + $0x20] sm:$0xff]
        %v4266 = vld [vmem:[#allocation21 + $0x28] sm:$0xff]
        %v4267 = vld [vmem:[#allocation21 + $0x30] sm:$0xff]
        %v4268 = vld [vmem:[#allocation21 + $0x38] sm:$0xff]
        %v4269 = vld [vmem:[#allocation22] sm:$0xff]
        %v4270 = vld [vmem:[#allocation22 + $0x8] sm:$0xff]
        %v4271 = vld [vmem:[#allocation22 + $0x10] sm:$0xff]
        %v4272 = vld [vmem:[#allocation22 + $0x18] sm:$0xff]
        %v4273 = vld [vmem:[#allocation22 + $0x20] sm:$0xff]
        %v4274 = vld [vmem:[#allocation22 + $0x28] sm:$0xff]
        %v4275 = vld [vmem:[#allocation22 + $0x30] sm:$0xff]
        %v4276 = vld [vmem:[#allocation22 + $0x38] sm:$0xff]
        %4278 = vset.pattern.permute.xlu0 0
        %4279 = vperm.xlu0 %4278, %v4269
        %v4280 = vpop.permute.xlu0 %4279
        %4283 = vset.pattern.permute.xlu0 0
        %4284 = vperm.xlu0 %4283, %v4270
        %v4285 = vpop.permute.xlu0 %4284
        %4288 = vset.pattern.permute.xlu0 0
        %4289 = vperm.xlu0 %4288, %v4271
        %v4290 = vpop.permute.xlu0 %4289
        %4293 = vset.pattern.permute.xlu0 0
        %4294 = vperm.xlu0 %4293, %v4272
        %v4295 = vpop.permute.xlu0 %4294
        %4298 = vset.pattern.permute.xlu0 0
        %4299 = vperm.xlu0 %4298, %v4273
        %v4300 = vpop.permute.xlu0 %4299
        %4303 = vset.pattern.permute.xlu0 0
        %4304 = vperm.xlu0 %4303, %v4274
        %v4305 = vpop.permute.xlu0 %4304
        %4308 = vset.pattern.permute.xlu0 0
        %4309 = vperm.xlu0 %4308, %v4275
        %v4310 = vpop.permute.xlu0 %4309
        %4313 = vset.pattern.permute.xlu0 0
        %4314 = vperm.xlu0 %4313, %v4276
        %v4315 = vpop.permute.xlu0 %4314
        %v4318 = vsel %vm717, %v4261, 0
        %v4321 = vsel %vm717, %v4262, 0
        %v4324 = vsel %vm717, %v4263, 0
        %v4327 = vsel %vm717, %v4264, 0
        %v4330 = vsel %vm717, %v4265, 0
        %v4333 = vsel %vm717, %v4266, 0
        %v4336 = vsel %vm717, %v4267, 0
        %v4339 = vsel %vm717, %v4268, 0
        %4341 = vmatprep.subr.mxu0 %v618
        %4342 = vmatpush1.msra.mxu0 %v617
        %4343 = vmatprep.subr.mxu0 %v620
        %4344 = vmatpush1.msra.mxu0 %v619
        %4345 = vmatprep.subr.mxu0 %v622
        %4346 = vmatpush1.msra.mxu0 %v621
        %4347 = vmatprep.subr.mxu0 %v624
        %4348 = vmatpush1.msra.mxu0 %v623
        %4349 = vmatprep.subr.mxu0 0.0
        %4350 = vmatpush1.msra.mxu0 0.0
        %4351 = vmatprep.subr.mxu0 0.0
        %4352 = vmatpush1.msra.mxu0 0.0
        %4353 = vmatprep.subr.mxu0 0.0
        %4354 = vmatpush1.msra.mxu0 0.0
        %4355 = vmatprep.subr.mxu0 0.0
        %4356 = vmatpush1.msra.mxu0 0.0
        %4357 = vmatprep.subr.mxu0 0.0
        %4358 = vmatpush1.msra.mxu0 0.0
        %4359 = vmatprep.subr.mxu0 0.0
        %4360 = vmatpush1.msra.mxu0 0.0
        %4361 = vmatprep.subr.mxu0 0.0
        %4362 = vmatpush1.msra.mxu0 0.0
        %4363 = vmatprep.subr.mxu0 0.0
        %4364 = vmatpush1.msra.mxu0 0.0
        %4365 = vmatprep.subr.mxu0 0.0
        %4366 = vmatpush1.msra.mxu0 0.0
        %4367 = vmatprep.subr.mxu0 0.0
        %4368 = vmatpush1.msra.mxu0 0.0
        %4369 = vmatprep.subr.mxu0 0.0
        %4370 = vmatpush1.msra.mxu0 0.0
        %4371 = vmatprep.subr.mxu0 0.0
        %4372 = vmatpush1.msra.mxu0 0.0
        %4373 = vmatprep.subr.mxu0 0.0
        %4374 = vmatpush1.msra.mxu0 0.0
        %4375 = vmatprep.subr.mxu0 0.0
        %4376 = vmatpush1.msra.mxu0 0.0
        %4377 = vmatprep.subr.mxu0 0.0
        %4378 = vmatpush1.msra.mxu0 0.0
        %4379 = vmatprep.subr.mxu0 0.0
        %4380 = vmatpush1.msra.mxu0 0.0
        %4381 = vmatprep.subr.mxu0 0.0
        %4382 = vmatpush1.msra.mxu0 0.0
        %4383 = vmatprep.subr.mxu0 0.0
        %4384 = vmatpush1.msra.mxu0 0.0
        %4385 = vmatprep.subr.mxu0 0.0
        %4386 = vmatpush1.msra.mxu0 0.0
        %4387 = vmatprep.subr.mxu0 0.0
        %4388 = vmatpush1.msra.mxu0 0.0
        %4389 = vmatprep.subr.mxu0 0.0
        %4390 = vmatpush1.msra.mxu0 0.0
        %4391 = vmatprep.subr.mxu0 0.0
        %4392 = vmatpush1.msra.mxu0 0.0
        %4393 = vmatprep.subr.mxu0 0.0
        %4394 = vmatpush1.msra.mxu0 0.0
        %4395 = vmatprep.subr.mxu0 0.0
        %4396 = vmatpush1.msra.mxu0 0.0
        %4397 = vmatprep.subr.mxu0 0.0
        %4398 = vmatpush1.msra.mxu0 0.0
        %4399 = vmatprep.subr.mxu0 0.0
        %4400 = vmatpush1.msra.mxu0 0.0
        %4401 = vmatprep.subr.mxu0 0.0
        %4402 = vmatpush1.msra.mxu0 0.0
        %4403 = vmatprep.subr.mxu0 0.0
        %4404 = vmatpush1.msra.mxu0 0.0
        %4405 = vmatprep.mubr.f32.mxu0 0.0
        %4406 = vmatmul.mubr.f32.gmra.mrb[0].mxu0 %v4318
        %v4407 = vpop.f32.mrb[0].mxu0
        %v4408 = vadd.f32 %v4280, %v4407
        %v4409 = vpop.f32.mrb[0].mxu0
        %v4410 = vadd.f32 %v4280, %v4409
        %4411 = vmatprep.mubr.f32.mxu0 0.0
        %4412 = vmatmul.mubr.f32.gmra.mrb[0].mxu0 %v4321
        %v4413 = vpop.f32.mrb[0].mxu0
        %v4414 = vadd.f32 %v4285, %v4413
        %v4415 = vpop.f32.mrb[0].mxu0
        %v4416 = vadd.f32 %v4285, %v4415
        %4417 = vmatprep.mubr.f32.mxu0 0.0
        %4418 = vmatmul.mubr.f32.gmra.mrb[0].mxu0 %v4324
        %v4419 = vpop.f32.mrb[0].mxu0
        %v4420 = vadd.f32 %v4290, %v4419
        %v4421 = vpop.f32.mrb[0].mxu0
        %v4422 = vadd.f32 %v4290, %v4421
        %4423 = vmatprep.mubr.f32.mxu0 0.0
        %4424 = vmatmul.mubr.f32.gmra.mrb[0].mxu0 %v4327
        %v4425 = vpop.f32.mrb[0].mxu0
        %v4426 = vadd.f32 %v4295, %v4425
        %v4427 = vpop.f32.mrb[0].mxu0
        %v4428 = vadd.f32 %v4295, %v4427
        %4429 = vmatprep.mubr.f32.mxu0 0.0
        %4430 = vmatmul.mubr.f32.gmra.mrb[0].mxu0 %v4330
        %v4431 = vpop.f32.mrb[0].mxu0
        %v4432 = vadd.f32 %v4300, %v4431
        %v4433 = vpop.f32.mrb[0].mxu0
        %v4434 = vadd.f32 %v4300, %v4433
        %4435 = vmatprep.mubr.f32.mxu0 0.0
        %4436 = vmatmul.mubr.f32.gmra.mrb[0].mxu0 %v4333
        %v4437 = vpop.f32.mrb[0].mxu0
        %v4438 = vadd.f32 %v4305, %v4437
        %v4439 = vpop.f32.mrb[0].mxu0
        %v4440 = vadd.f32 %v4305, %v4439
        %4441 = vmatprep.mubr.f32.mxu0 0.0
        %4442 = vmatmul.mubr.f32.gmra.mrb[0].mxu0 %v4336
        %v4443 = vpop.f32.mrb[0].mxu0
        %v4444 = vadd.f32 %v4310, %v4443
        %v4445 = vpop.f32.mrb[0].mxu0
        %v4446 = vadd.f32 %v4310, %v4445
        %4447 = vmatprep.mubr.f32.mxu0 0.0
        %4448 = vmatmul.mubr.f32.gmra.mrb[0].mxu0 %v4339
        %v4449 = vpop.f32.mrb[0].mxu0
        %v4450 = vadd.f32 %v4315, %v4449
        %v4451 = vpop.f32.mrb[0].mxu0
        %v4452 = vadd.f32 %v4315, %v4451
        %4453 = vdwg.mxu0
        %v4454 = vadd.f32 %v4215, %v4408
        %v4455 = vadd.f32 %v4217, %v4410
        %v4456 = vadd.f32 %v4221, %v4414
        %v4457 = vadd.f32 %v4223, %v4416
        %v4458 = vadd.f32 %v4227, %v4420
        %v4459 = vadd.f32 %v4229, %v4422
        %v4460 = vadd.f32 %v4233, %v4426
        %v4461 = vadd.f32 %v4235, %v4428
        %v4462 = vadd.f32 %v4239, %v4432
        %v4463 = vadd.f32 %v4241, %v4434
        %v4464 = vadd.f32 %v4245, %v4438
        %v4465 = vadd.f32 %v4247, %v4440
        %v4466 = vadd.f32 %v4251, %v4444
        %v4467 = vadd.f32 %v4253, %v4446
        %v4468 = vadd.f32 %v4257, %v4450
        %v4469 = vadd.f32 %v4259, %v4452
        %4470 = vst [vmem:[%s616] sm:$0xff] %v4454
        %4471 = vst [vmem:[%s616 + $0x8] sm:$0xff] %v4455
        %4472 = vst [vmem:[%s616 + $0x10] sm:$0xff] %v4456
        %4473 = vst [vmem:[%s616 + $0x18] sm:$0xff] %v4457
        %4474 = vst [vmem:[%s616 + $0x20] sm:$0xff] %v4458
        %4475 = vst [vmem:[%s616 + $0x28] sm:$0xff] %v4459
        %4476 = vst [vmem:[%s616 + $0x30] sm:$0xff] %v4460
        %4477 = vst [vmem:[%s616 + $0x38] sm:$0xff] %v4461
        %4478 = vst [vmem:[%s616 + $0x40] sm:$0xff] %v4462
        %4479 = vst [vmem:[%s616 + $0x48] sm:$0xff] %v4463
        %4480 = vst [vmem:[%s616 + $0x50] sm:$0xff] %v4464
        %4481 = vst [vmem:[%s616 + $0x58] sm:$0xff] %v4465
        %4482 = vst [vmem:[%s616 + $0x60] sm:$0xff] %v4466
        %4483 = vst [vmem:[%s616 + $0x68] sm:$0xff] %v4467
        %4484 = vst [vmem:[%s616 + $0x70] sm:$0xff] %v4468
        %4485 = vst [vmem:[%s616 + $0x78] sm:$0xff] %v4469
        %s4486 = sand.u32 %s307, 1
        %s4487 = scalar_lea.sflag [#allocation6], %s4486
        %s4488 = sand.u32 %s307, 1
        %s4489 = smul.addr %s4488, 128
        %s4490 = scalar_lea.vmem [#allocation24], %s4489
        // Predicated region
        $region117: #{tpu_custom_call.1} parent=67 // pred_check
          %p4491 = pneg %p317
        $region118: #{tpu_custom_call.1} parent=67 // pred_check_branch
          %4493 = sbr.rel (%p4491) target = $region120
        $region119: #{tpu_custom_call.1} parent=67 // pred_region
          %s4495 = ssub.s32 2048, 2048
          %4496 = vsyncadd %s4487, %s4495
          %s4497 = smul.addr %s37, 16
          %s4498 = smul.addr %s4497, 128
          %s4499 = scalar_lea.hbm %s12, %s4498
          %s4500 = sshll.u32 %s4490, 4
          %s4501 = int_to_ptr.vmem [resolvable:$true] %s4500
          %4506 = dma.vmem_to_hbm [thread:$0]  %s4501, 2048, %s4499, %s4487, 256, 256, 16
        $region120: #{tpu_custom_call.1} parent=67 // pred_fallthru
          _
      $region68: #{tpu_custom_call.1} parent=5 // pred_fallthru
        _
      %p4507 = scmp.le.s32.totalorder 2, %s32
      // Predicated region
      $region121: #{tpu_custom_call.1} parent=5 // pred_check
        %p4508 = pneg %p4507
      $region122: #{tpu_custom_call.1} parent=5 // pred_check_branch
        %4510 = sbr.rel (%p4508) target = $region124
      $region123: #{tpu_custom_call.1} parent=5 // pred_region
        %s4511 = ssub.s32 %s32, 2
        // Predicated region
        $region125: #{tpu_custom_call.1} parent=123 // pred_check
          %p4512 = pneg %p323
        $region126: #{tpu_custom_call.1} parent=123 // pred_check_branch
          %4514 = sbr.rel (%p4512) target = $region128
        $region127: #{tpu_custom_call.1} parent=123 // pred_region
          %s4515 = sand.u32 %s308, 1
          %s4516 = scalar_lea.sflag [#allocation6], %s4515
          %s4517 = sand.u32 %s308, 1
          %s4518 = smul.addr %s4517, 128
          %s4519 = scalar_lea.vmem [#allocation24], %s4518
          %4520 = dma.done %s4516, 2048
        $region128: #{tpu_custom_call.1} parent=123 // pred_fallthru
          _
      $region124: #{tpu_custom_call.1} parent=5 // pred_fallthru
        _
    $region6: #{tpu_custom_call.1} parent=1 // loop_footer
      %s36 = sadd.s32 1, %s32
    $region7: #{tpu_custom_call.1} parent=1 // loop_footer_branch
      %31 = sbr.rel target = $region3
    $region8: #{tpu_custom_call.1} parent=1 // loop_exit
      _
    %4521 = vsyncpa [#allocation5], 1
    %s4522 = scalar_lea.sflag [#allocation5], 1
    %4523 = vsyncpa %s4522, 1
    %4524 = vsyncpa [#allocation8], 1
    %s4525 = scalar_lea.sflag [#allocation8], 1
    %4526 = vsyncpa %s4525, 1
    %4527 = vsyncpa [#allocation11], 1
    %4528 = vsyncpa [#allocation14], 1
    %4529 = vsyncpa [#allocation17], 1
    %4530 = vsyncpa [#allocation20], 1
    %4531 = vsyncpa [#allocation23], 1
    %4532 = vsyncpa [#allocation6], 1
    %s4533 = scalar_lea.sflag [#allocation6], 1
    %4534 = vsyncpa %s4533, 1

</llo_original>
